<compile_context>
chip_gen: v7x
topology: tpu7x:2x2x1
jax: 0.10.0
libtpu: 0.0.40
codegen_flags: <defaults>
</compile_context>

<pallas_src>
import functools

import jax
import jax.numpy as jnp
from jax.experimental import pallas as pl
from jax.experimental.pallas import tpu as pltpu

_LANE = 128


# --------------------------------------------------------------------------- #
# Kernel: per node-row-tile graph propagation + fused gate matmul + LSTM math #
# --------------------------------------------------------------------------- #
def _aglstm_step_kernel(supports_ref, xh_ref, e_ref, w_ref, bias_ref, c_ref,
                        h_out_ref, c_out_ref, *, hidden, batch):
    # supports_ref: (K-1, tile_n, N_pad) bf16  T_1..T_{K-1} rows of this tile
    # xh_ref      : (N_pad, B*C_pad)     bf16  [x | h | 0] ALL nodes (grid-invariant)
    # e_ref       : (tile_n, Ed)         f32   node-embedding rows of this tile
    # w_ref       : (K*Ed*C_pad, 4H)     bf16  k-major folded weight pool (grid-invariant)
    # bias_ref    : (tile_n, 4H)         f32   E @ bias_pool rows of this tile
    # c_ref       : (tile_n, B*H)        f32   previous cell state (lane-dense)
    # h_out_ref   : (tile_n, B*H)        bf16  new hidden state
    # c_out_ref   : (tile_n, B*H)        f32   new cell state
    H, B = hidden, batch
    Km1, TN, Np = supports_ref.shape
    K = Km1 + 1
    Cp = xh_ref.shape[1] // B          # lane-padded C_in (multiple of 128)
    Ed = e_ref.shape[1]

    e32 = e_ref[...]                                              # (TN, Ed) f32

    # k = 0 (identity) term: slice this tile's rows from the resident xh.
    row0 = pl.multiple_of(pl.program_id(0) * TN, TN)
    xh_tile = xh_ref[pl.ds(row0, TN), :]                          # (TN, B*Cp) bf16

    # k >= 1 terms: ONE fused MXU matmul over all Chebyshev orders.
    sup = supports_ref[...].reshape(Km1 * TN, Np)
    cheb = jnp.dot(sup, xh_ref[...], preferred_element_type=jnp.float32)
    cheb = cheb.reshape(Km1, TN, B, Cp)          # Cp % 128 == 0 -> layout preserving

    # z2[(n,b), (k,d,i)] = E[n,d] * x_g_k[n,b,i]
    # f32 broadcast-mul, one bf16 cast per k; 128-aligned slabs -> cheap concat.
    def scaled_slab(xg_k):                                        # (TN, B, Cp) f32
        z = xg_k[:, :, None, :] * e32[:, None, :, None]           # (TN, B, Ed, Cp)
        return z.astype(jnp.bfloat16).reshape(TN * B, Ed * Cp)

    slabs = [scaled_slab(xh_tile.astype(jnp.float32).reshape(TN, B, Cp))]
    for k in range(1, K):
        slabs.append(scaled_slab(cheb[k - 1]))
    z2 = jnp.concatenate(slabs, axis=-1)                          # (TN*B, K*Ed*Cp)

    # Deep gate matmul (bf16 operands, f32 accumulation) + per-node bias.
    ifgo = jnp.dot(z2, w_ref[...], preferred_element_type=jnp.float32)
    ifgo = ifgo.reshape(TN, B, 4 * H) + bias_ref[...][:, None, :]

    # LSTM gate math (f32; sigmoid/tanh go to the EUP).
    i = jax.nn.sigmoid(ifgo[..., 0 * H:1 * H])
    f = jax.nn.sigmoid(ifgo[..., 1 * H:2 * H])
    g = jnp.tanh(ifgo[..., 2 * H:3 * H])
    o = jax.nn.sigmoid(ifgo[..., 3 * H:4 * H])

    c_prev = c_ref[...].reshape(TN, B, H)
    new_c = f * c_prev + i * g
    new_h = o * jnp.tanh(new_c)

    h_out_ref[...] = new_h.reshape(TN, B * H).astype(jnp.bfloat16)
    c_out_ref[...] = new_c.reshape(TN, B * H)


# --------------------------------------------------------------------------- #
# VMEM-aware tiling policy                                                    #
# --------------------------------------------------------------------------- #
def _vmem_capacity_bytes():
    try:
        return int(pltpu.get_tpu_info().vmem_capacity_bytes)
    except Exception:                      # conservative fallback (v7x-sized)
        return 64 * 2**20


def _choose_tiling(n_nodes, batch, embed_dim, cheb_k, c_in_pad, hidden,
                   tile_n=None):
    """Pick (tile_n, n_pad, vmem_limit) from the actual per-generation VMEM."""
    cap = _vmem_capacity_bytes()
    budget = int(0.70 * cap)                   # headroom under the scoped limit
    q = 16 if n_nodes >= 32 else 8             # bf16-friendly sublane quantum
    n_q = pl.cdiv(n_nodes, q) * q
    H, B, Ed, K, Cp = hidden, batch, embed_dim, cheb_k, c_in_pad

    # Grid-invariant residents (conservatively counted with 2 pipeline buffers).
    fixed = 2 * (n_q * B * Cp * 2) + 2 * (K * Ed * Cp * 4 * H * 2)
    # Per node-row bytes: streamed blocks (x2 double buffer) + intermediates.
    per_row = (2 * ((K - 1) * n_q * 2 + Ed * 4 + 4 * H * 4 + B * H * 4
                    + B * H * 2 + B * H * 4)
               + (K - 1) * B * Cp * 4                 # cheb (f32)
               + B * K * Ed * Cp * 6                  # Z (bf16 z2 + f32 transient)
               + B * 4 * H * 8)                       # ifgo + gate temps (f32)

    if tile_n is None:
        # <= ~half the nodes per tile so the grid has >= 2 points (v7x megacore)
        half = pl.cdiv(pl.cdiv(n_nodes, 2), q) * q
        fit = max(q, ((budget - fixed) // max(per_row, 1)) // q * q)
        tile_n = max(q, min(half, fit))
    tile_n = max(8, (int(tile_n) // 8) * 8)
    n_pad = pl.cdiv(n_nodes, tile_n) * tile_n
    vmem_limit = int(0.85 * cap)
    return tile_n, n_pad, vmem_limit


# --------------------------------------------------------------------------- #
# Time-invariant precompute (once per sequence, plain JAX)                    #
# --------------------------------------------------------------------------- #
def aglstm_precompute(node_embeddings, mask, w_pool, b_pool, cheb_k, batch_size,
                      tile_n=None):
    """Adjacency, Chebyshev supports T_1.., folded weights, bias, tiling plan."""
    E = node_embeddings.astype(jnp.float32)
    N, Ed = E.shape
    Ed_w, K_w, C_in, out4h = w_pool.shape
    H = out4h // 4
    assert Ed_w == Ed and K_w == cheb_k
    if cheb_k < 2:
        raise NotImplementedError("cheb_k >= 2 expected (AGCRN default)")

    # Lane-align the packed [x|h] feature dim so every in-kernel reshape/concat
    # of Z is layout preserving (padded xh columns and weight rows are zero).
    c_in_pad = pl.cdiv(C_in, _LANE) * _LANE

    # TODO(synk): StaticL0AVWGCN source unavailable; L0 mask applied after the
    # row softmax (rows need not sum to 1).
    A = jax.nn.softmax(jax.nn.relu(E @ E.T), axis=1) * mask.astype(jnp.float32)
    sups = [A]
    prev, cur = jnp.eye(N, dtype=jnp.float32), A
    for _ in range(2, cheb_k):
        prev, cur = cur, 2.0 * (A @ cur) - prev
        sups.append(cur)
    supports = jnp.stack(sups, axis=0)             # (K-1, N, N); T_0 never shipped

    tile_n, n_pad, vmem_limit = _choose_tiling(N, batch_size, Ed, cheb_k,
                                               c_in_pad, H, tile_n)
    pn = n_pad - N
    supports = jnp.pad(supports, ((0, 0), (0, pn), (0, pn)))
    e_pad = jnp.pad(E, ((0, pn), (0, 0)))
    bias = jnp.pad(E @ b_pool.astype(jnp.float32), ((0, pn), (0, 0)))  # (n_pad,4H)

    # k-major folded weight pool: W[(k,d,i), o] = w_pool[d,k,i,o], i zero-padded.
    w_t = jnp.transpose(w_pool.astype(jnp.float32), (1, 0, 2, 3))  # (K,Ed,C_in,4H)
    w_t = jnp.pad(w_t, ((0, 0), (0, 0), (0, c_in_pad - C_in), (0, 0)))
    w_folded = w_t.reshape(cheb_k * Ed * c_in_pad, 4 * H)

    return dict(
        supports=supports.astype(jnp.bfloat16),
        e=e_pad.astype(jnp.float32),
        w_folded=w_folded.astype(jnp.bfloat16),
        bias=bias.astype(jnp.float32),
        cheb_k=cheb_k, hidden=H, batch=batch_size, c_in=C_in,
        c_in_pad=c_in_pad, n_nodes=N, n_pad=n_pad, tile_n=tile_n,
        vmem_limit=vmem_limit,
    )


# --------------------------------------------------------------------------- #
# Node-major per-step call (use this inside a recurrent rollout)              #
# --------------------------------------------------------------------------- #
def aglstm_cell_step_nodemajor(x_nm, h_nm, c_nm, pre):
    """x_nm: (N,B,dim_in); h_nm/c_nm: (N,B,H); pre: aglstm_precompute output.

    Returns (new_h (N,B,H) bf16, new_c (N,B,H) f32) node-major; keep state in
    this layout across a rollout to avoid per-step transposes.
    """
    N, B, dim_in = x_nm.shape
    H, K, Ed = pre["hidden"], pre["cheb_k"], pre["e"].shape[1]
    Cp, n_pad, tile_n = pre["c_in_pad"], pre["n_pad"], pre["tile_n"]
    C_in = dim_in + H
    assert C_in == pre["c_in"] and B == pre["batch"] and N == pre["n_nodes"]

    # [x | h | 0-pad], node-major, lane-dense (n_pad, B*Cp) bf16.
    xh = jnp.concatenate([x_nm.astype(jnp.float32), h_nm.astype(jnp.float32)],
                         axis=-1)
    xh = jnp.pad(xh, ((0, n_pad - N), (0, 0), (0, Cp - C_in))).astype(jnp.bfloat16)
    xh2 = xh.reshape(n_pad, B * Cp)

    c2 = jnp.pad(c_nm.astype(jnp.float32), ((0, n_pad - N), (0, 0), (0, 0)))
    c2 = c2.reshape(n_pad, B * H)

    grid = (n_pad // tile_n,)

    cost = pl.CostEstimate(
        flops=int(2 * (K - 1) * n_pad * n_pad * B * Cp
                  + 2 * n_pad * B * K * Ed * Cp * 4 * H),
        transcendentals=int(5 * n_pad * B * H),
        bytes_accessed=int((K - 1) * n_pad * n_pad * 2 + n_pad * B * Cp * 2
                           + K * Ed * Cp * 4 * H * 2 + n_pad * Ed * 4
                           + n_pad * 4 * H * 4 + n_pad * B * H * 4
                           + n_pad * B * H * 6))

    # TODO(synk): pipeline_mode=pl.Buffered(1) on the two grid-invariant
    # operands (xh, w_folded) would drop their second pipeline buffer; left at
    # the default lowering path (the extra buffer is accounted for in the
    # tiling budget above).
    # TODO(synk): for multi-step rollouts the time loop should move inside the
    # kernel (supports/w/E/bias + h/c kept VMEM-resident, manual DMA for the
    # all-node h recurrence) instead of re-streaming them from HBM every step.
    new_h2, new_c2 = pl.pallas_call(
        functools.partial(_aglstm_step_kernel, hidden=H, batch=B),
        out_shape=(jax.ShapeDtypeStruct((n_pad, B * H), jnp.bfloat16),
                   jax.ShapeDtypeStruct((n_pad, B * H), jnp.float32)),
        grid_spec=pltpu.PrefetchScalarGridSpec(
            num_scalar_prefetch=0,
            grid=grid,
            in_specs=[
                pl.BlockSpec((K - 1, tile_n, n_pad), lambda i: (0, i, 0)),  # supports
                pl.BlockSpec((n_pad, B * Cp), lambda i: (0, 0)),            # xh (resident)
                pl.BlockSpec((tile_n, Ed), lambda i: (i, 0)),               # E rows
                pl.BlockSpec((K * Ed * Cp, 4 * H), lambda i: (0, 0)),       # weights (resident)
                pl.BlockSpec((tile_n, 4 * H), lambda i: (i, 0)),            # bias rows
                pl.BlockSpec((tile_n, B * H), lambda i: (i, 0)),            # c rows
            ],
            out_specs=[
                pl.BlockSpec((tile_n, B * H), lambda i: (i, 0)),            # new_h bf16
                pl.BlockSpec((tile_n, B * H), lambda i: (i, 0)),            # new_c f32
            ],
        ),
        compiler_params=pltpu.CompilerParams(
            dimension_semantics=("parallel",),
            vmem_limit_bytes=pre["vmem_limit"]),
        cost_estimate=cost,
    )(pre["supports"], xh2, pre["e"], pre["w_folded"], pre["bias"], c2)

    new_h = new_h2[:N].reshape(N, B, H)
    new_c = new_c2[:N].reshape(N, B, H)
    return new_h, new_c


# --------------------------------------------------------------------------- #
# Batch-major wrapper matching the PyTorch module interface                   #
# --------------------------------------------------------------------------- #
def aglstm_cell_pallas(x, state, node_embeddings, mask, w_pool, b_pool, cheb_k,
                       tile_n=None):
    """AGLSTMCell.forward.  x: (B,N,dim_in); state=(h,c): (B,N,H) each."""
    h, c = state
    B = x.shape[0]
    pre = aglstm_precompute(node_embeddings, mask, w_pool, b_pool, cheb_k, B,
                            tile_n)
    x_nm = jnp.transpose(x, (1, 0, 2))
    h_nm = jnp.transpose(h, (1, 0, 2))
    c_nm = jnp.transpose(c, (1, 0, 2))
    nh, nc = aglstm_cell_step_nodemajor(x_nm, h_nm, c_nm, pre)
    nh = jnp.transpose(nh.astype(jnp.float32), (1, 0, 2))
    nc = jnp.transpose(nc, (1, 0, 2))
    return nh, nc


# --------------------------------------------------------------------------- #
# Pure-JAX reference mirroring the PyTorch module                             #
# --------------------------------------------------------------------------- #
def aglstm_cell_ref(x, state, E, mask, w_pool, b_pool, cheb_k):
    h, c = state
    N = E.shape[0]
    H = h.shape[-1]
    A = jax.nn.softmax(jax.nn.relu(E @ E.T), axis=1) * mask
    supports = [jnp.eye(N, dtype=jnp.float32), A]
    for _ in range(2, cheb_k):
        supports.append(2.0 * (A @ supports[-1]) - supports[-2])
    supports = jnp.stack(supports[:cheb_k], axis=0)             # (K, N, N)
    xh = jnp.concatenate([x, h], axis=-1)                       # (B, N, C_in)
    x_g = jnp.einsum('knm,bmc->bknc', supports, xh)
    x_g = jnp.transpose(x_g, (0, 2, 1, 3))                      # (B, N, K, C_in)
    weights = jnp.einsum('nd,dkio->nkio', E, w_pool)            # (N, K, C_in, 4H)
    bias = E @ b_pool                                           # (N, 4H)
    ifgo = jnp.einsum('bnki,nkio->bno', x_g, weights) + bias[None]
    i = jax.nn.sigmoid(ifgo[..., :H])
    f = jax.nn.sigmoid(ifgo[..., H:2 * H])
    g = jnp.tanh(ifgo[..., 2 * H:3 * H])
    o = jax.nn.sigmoid(ifgo[..., 3 * H:])
    new_c = f * c + i * g
    new_h = o * jnp.tanh(new_c)
    return new_h, new_c


if __name__ == "__main__":
    # Small shapes consistent with the module's forward.
    B, N, dim_in, H, cheb_k, embed_dim = 2, 32, 2, 32, 2, 8

    key = jax.random.PRNGKey(0)
    k1, k2, k3, k4, k5, k6, k7 = jax.random.split(key, 7)
    x = jax.random.normal(k1, (B, N, dim_in), dtype=jnp.float32)
    h0 = 0.1 * jax.random.normal(k2, (B, N, H), dtype=jnp.float32)
    c0 = 0.1 * jax.random.normal(k3, (B, N, H), dtype=jnp.float32)
    node_embeddings = jax.random.normal(k4, (N, embed_dim), dtype=jnp.float32)
    w_pool = 0.05 * jax.random.normal(
        k5, (embed_dim, cheb_k, dim_in + H, 4 * H), dtype=jnp.float32)
    b_pool = 0.05 * jax.random.normal(k6, (embed_dim, 4 * H), dtype=jnp.float32)
    mask = (jax.random.uniform(k7, (N, N)) > 0.2).astype(jnp.float32)

    new_h, new_c = aglstm_cell_pallas(
        x, (h0, c0), node_embeddings, mask, w_pool, b_pool, cheb_k)
    jax.block_until_ready((new_h, new_c))

    ref_h, ref_c = aglstm_cell_ref(
        x, (h0, c0), node_embeddings, mask, w_pool, b_pool, cheb_k)
    assert new_h.shape == (B, N, H) and new_c.shape == (B, N, H)
    # bf16 matmul operands / bf16 h output (f32 accumulation) -> loose tolerance.
    assert jnp.allclose(new_h, ref_h, rtol=2e-2, atol=2e-2), \
        float(jnp.max(jnp.abs(new_h - ref_h)))
    assert jnp.allclose(new_c, ref_c, rtol=2e-2, atol=2e-2), \
        float(jnp.max(jnp.abs(new_c - ref_c)))

    print("KERNEL_OK")
</pallas_src>

<mosaic_0001>
module attributes {stable_mosaic.version = 11 : i64} {
  func.func @_aglstm_step_kernel(%arg0: i32, %arg1: memref<1x16x32xbf16, #tpu.memory_space<vmem>>, %arg2: memref<32x256xbf16, #tpu.memory_space<vmem>>, %arg3: memref<16x8xf32, #tpu.memory_space<vmem>>, %arg4: memref<2048x128xbf16, #tpu.memory_space<vmem>>, %arg5: memref<16x128xf32, #tpu.memory_space<vmem>>, %arg6: memref<16x64xf32, #tpu.memory_space<vmem>>, %arg7: memref<16x64xbf16, #tpu.memory_space<vmem>>, %arg8: memref<16x64xf32, #tpu.memory_space<vmem>>) attributes {dimension_semantics = [#tpu.dimension_semantics<parallel>], iteration_bounds = array<i64: 2>, scalar_prefetch = 0 : i64, scratch_operands = 0 : i64, tpu.core_type = #tpu.core_type<tc>, window_params = [{transform_indices = @transform_0, window_bounds = array<i64: 1, 16, 32>}, {pipeline_mode = #tpu.pipeline_mode<synchronous>, transform_indices = @transform_1, window_bounds = array<i64: 32, 256>}, {transform_indices = @transform_2, window_bounds = array<i64: 16, 8>}, {pipeline_mode = #tpu.pipeline_mode<synchronous>, transform_indices = @transform_3, window_bounds = array<i64: 2048, 128>}, {transform_indices = @transform_4, window_bounds = array<i64: 16, 128>}, {transform_indices = @transform_5, window_bounds = array<i64: 16, 64>}, {transform_indices = @transform_6, window_bounds = array<i64: 16, 64>}, {transform_indices = @transform_7, window_bounds = array<i64: 16, 64>}]} {
    %c0 = arith.constant 0 : index
    %c0_0 = arith.constant 0 : index
    %0 = vector.load %arg3[%c0, %c0_0] : memref<16x8xf32, #tpu.memory_space<vmem>>, vector<16x8xf32>
    %c16_i32 = arith.constant 16 : i32
    %1 = arith.muli %arg0, %c16_i32 : i32
    %2 = tpu.assume_multiple %1, 16 : i32
    %3 = arith.index_cast %2 : i32 to index
    %c0_1 = arith.constant 0 : index
    %4 = vector.load %arg2[%3, %c0_1] : memref<32x256xbf16, #tpu.memory_space<vmem>>, vector<16x256xbf16>
    %c0_2 = arith.constant 0 : index
    %c0_3 = arith.constant 0 : index
    %c0_4 = arith.constant 0 : index
    %5 = vector.load %arg1[%c0_2, %c0_3, %c0_4] : memref<1x16x32xbf16, #tpu.memory_space<vmem>>, vector<1x16x32xbf16>
    %6 = vector.shape_cast %5 : vector<1x16x32xbf16> to vector<16x32xbf16>
    %c0_5 = arith.constant 0 : index
    %c0_6 = arith.constant 0 : index
    %7 = vector.load %arg2[%c0_5, %c0_6] : memref<32x256xbf16, #tpu.memory_space<vmem>>, vector<32x256xbf16>
    %cst = arith.constant dense<0.000000e+00> : vector<16x256xf32>
    %8 = tpu.matmul %6, %7, %cst {dimension_numbers = #tpu.dot_dimension_numbers<[1], [0], [0], [1], [0, 0, 1, 1], [], []>} : vector<16x32xbf16>, vector<32x256xbf16>, vector<16x256xf32> -> vector<16x256xf32>
    %9 = vector.shape_cast %8 : vector<16x256xf32> to vector<1x16x2x128xf32>
    %10 = arith.extf %4 : vector<16x256xbf16> to vector<16x256xf32>
    %11 = vector.shape_cast %10 : vector<16x256xf32> to vector<16x2x128xf32>
    %12 = vector.shape_cast %11 : vector<16x2x128xf32> to vector<16x2x1x128xf32>
    %13 = vector.shape_cast %0 : vector<16x8xf32> to vector<16x1x8x1xf32>
    %14 = vector.broadcast %12 : vector<16x2x1x128xf32> to vector<16x2x8x128xf32>
    %15 = vector.broadcast %13 : vector<16x1x8x1xf32> to vector<16x2x8x128xf32>
    %16 = arith.mulf %14, %15 : vector<16x2x8x128xf32>
    %17 = arith.truncf %16 : vector<16x2x8x128xf32> to vector<16x2x8x128xbf16>
    %18 = vector.shape_cast %17 : vector<16x2x8x128xbf16> to vector<32x1024xbf16>
    %19 = vector.shape_cast %9 : vector<1x16x2x128xf32> to vector<16x2x128xf32>
    %20 = vector.shape_cast %19 : vector<16x2x128xf32> to vector<16x2x1x128xf32>
    %21 = vector.shape_cast %0 : vector<16x8xf32> to vector<16x1x8x1xf32>
    %22 = vector.broadcast %20 : vector<16x2x1x128xf32> to vector<16x2x8x128xf32>
    %23 = vector.broadcast %21 : vector<16x1x8x1xf32> to vector<16x2x8x128xf32>
    %24 = arith.mulf %22, %23 : vector<16x2x8x128xf32>
    %25 = arith.truncf %24 : vector<16x2x8x128xf32> to vector<16x2x8x128xbf16>
    %26 = vector.shape_cast %25 : vector<16x2x8x128xbf16> to vector<32x1024xbf16>
    %27 = tpu.concatenate %18, %26 in 1 : vector<32x1024xbf16>, vector<32x1024xbf16> -> vector<32x2048xbf16>
    %c0_7 = arith.constant 0 : index
    %c0_8 = arith.constant 0 : index
    %28 = vector.load %arg4[%c0_7, %c0_8] : memref<2048x128xbf16, #tpu.memory_space<vmem>>, vector<2048x128xbf16>
    %cst_9 = arith.constant dense<0.000000e+00> : vector<32x128xf32>
    %29 = tpu.matmul %27, %28, %cst_9 {dimension_numbers = #tpu.dot_dimension_numbers<[1], [0], [0], [1], [0, 0, 1, 1], [], []>} : vector<32x2048xbf16>, vector<2048x128xbf16>, vector<32x128xf32> -> vector<32x128xf32>
    %30 = vector.shape_cast %29 : vector<32x128xf32> to vector<16x2x128xf32>
    %c0_10 = arith.constant 0 : index
    %c0_11 = arith.constant 0 : index
    %31 = vector.load %arg5[%c0_10, %c0_11] : memref<16x128xf32, #tpu.memory_space<vmem>>, vector<16x128xf32>
    %32 = vector.shape_cast %31 : vector<16x128xf32> to vector<16x1x128xf32>
    %33 = vector.broadcast %32 : vector<16x1x128xf32> to vector<16x2x128xf32>
    %34 = arith.addf %30, %33 : vector<16x2x128xf32>
    %35 = vector.extract_strided_slice %34 {offsets = [0, 0, 0], sizes = [16, 2, 32], strides = [1, 1, 1]} : vector<16x2x128xf32> to vector<16x2x32xf32>
    %36 = arith.negf %35 : vector<16x2x32xf32>
    %37 = math.exp %36 : vector<16x2x32xf32>
    %cst_12 = arith.constant 1.000000e+00 : f32
    %38 = vector.broadcast %cst_12 : f32 to vector<16x2x32xf32>
    %39 = arith.addf %38, %37 : vector<16x2x32xf32>
    %40 = arith.divf %38, %39 : vector<16x2x32xf32>
    %41 = vector.extract_strided_slice %34 {offsets = [0, 0, 32], sizes = [16, 2, 32], strides = [1, 1, 1]} : vector<16x2x128xf32> to vector<16x2x32xf32>
    %42 = arith.negf %41 : vector<16x2x32xf32>
    %43 = math.exp %42 : vector<16x2x32xf32>
    %cst_13 = arith.constant 1.000000e+00 : f32
    %44 = vector.broadcast %cst_13 : f32 to vector<16x2x32xf32>
    %45 = arith.addf %44, %43 : vector<16x2x32xf32>
    %46 = arith.divf %44, %45 : vector<16x2x32xf32>
    %47 = vector.extract_strided_slice %34 {offsets = [0, 0, 64], sizes = [16, 2, 32], strides = [1, 1, 1]} : vector<16x2x128xf32> to vector<16x2x32xf32>
    %48 = math.tanh %47 : vector<16x2x32xf32>
    %49 = vector.extract_strided_slice %34 {offsets = [0, 0, 96], sizes = [16, 2, 32], strides = [1, 1, 1]} : vector<16x2x128xf32> to vector<16x2x32xf32>
    %50 = arith.negf %49 : vector<16x2x32xf32>
    %51 = math.exp %50 : vector<16x2x32xf32>
    %cst_14 = arith.constant 1.000000e+00 : f32
    %52 = vector.broadcast %cst_14 : f32 to vector<16x2x32xf32>
    %53 = arith.addf %52, %51 : vector<16x2x32xf32>
    %54 = arith.divf %52, %53 : vector<16x2x32xf32>
    %c0_15 = arith.constant 0 : index
    %c0_16 = arith.constant 0 : index
    %55 = vector.load %arg6[%c0_15, %c0_16] : memref<16x64xf32, #tpu.memory_space<vmem>>, vector<16x64xf32>
    %56 = vector.shape_cast %55 : vector<16x64xf32> to vector<16x2x32xf32>
    %57 = arith.mulf %46, %56 : vector<16x2x32xf32>
    %58 = arith.mulf %40, %48 : vector<16x2x32xf32>
    %59 = arith.addf %57, %58 : vector<16x2x32xf32>
    %60 = math.tanh %59 : vector<16x2x32xf32>
    %61 = arith.mulf %54, %60 : vector<16x2x32xf32>
    %62 = vector.shape_cast %61 : vector<16x2x32xf32> to vector<16x64xf32>
    %63 = arith.truncf %62 : vector<16x64xf32> to vector<16x64xbf16>
    %c0_17 = arith.constant 0 : index
    %c0_18 = arith.constant 0 : index
    %64 = vector.load %arg7[%c0_17, %c0_18] : memref<16x64xbf16, #tpu.memory_space<vmem>>, vector<16x64xbf16>
    tpu.vector_store %arg7[%c0_17, %c0_18], %63 {strides = array<i32>} : memref<16x64xbf16, #tpu.memory_space<vmem>>, vector<16x64xbf16>,
    %65 = vector.shape_cast %59 : vector<16x2x32xf32> to vector<16x64xf32>
    %c0_19 = arith.constant 0 : index
    %c0_20 = arith.constant 0 : index
    %66 = vector.load %arg8[%c0_19, %c0_20] : memref<16x64xf32, #tpu.memory_space<vmem>>, vector<16x64xf32>
    tpu.vector_store %arg8[%c0_19, %c0_20], %65 {strides = array<i32>} : memref<16x64xf32, #tpu.memory_space<vmem>>, vector<16x64xf32>,
    return
  }
  func.func @transform_0(%arg0: i32) -> (i32, i32, i32) {
    %c0_i32 = arith.constant 0 : i32
    %c0_i32_0 = arith.constant 0 : i32
    %c0_i32_1 = arith.constant 0 : i32
    return %c0_i32, %arg0, %c0_i32_0 : i32, i32, i32
  }
  func.func @transform_1(%arg0: i32) -> (i32, i32) {
    %c0_i32 = arith.constant 0 : i32
    %c0_i32_0 = arith.constant 0 : i32
    %c0_i32_1 = arith.constant 0 : i32
    return %c0_i32, %c0_i32_0 : i32, i32
  }
  func.func @transform_2(%arg0: i32) -> (i32, i32) {
    %c0_i32 = arith.constant 0 : i32
    %c0_i32_0 = arith.constant 0 : i32
    return %arg0, %c0_i32 : i32, i32
  }
  func.func @transform_3(%arg0: i32) -> (i32, i32) {
    %c0_i32 = arith.constant 0 : i32
    %c0_i32_0 = arith.constant 0 : i32
    %c0_i32_1 = arith.constant 0 : i32
    return %c0_i32, %c0_i32_0 : i32, i32
  }
  func.func @transform_4(%arg0: i32) -> (i32, i32) {
    %c0_i32 = arith.constant 0 : i32
    %c0_i32_0 = arith.constant 0 : i32
    return %arg0, %c0_i32 : i32, i32
  }
  func.func @transform_5(%arg0: i32) -> (i32, i32) {
    %c0_i32 = arith.constant 0 : i32
    %c0_i32_0 = arith.constant 0 : i32
    return %arg0, %c0_i32 : i32, i32
  }
  func.func @transform_6(%arg0: i32) -> (i32, i32) {
    %c0_i32 = arith.constant 0 : i32
    %c0_i32_0 = arith.constant 0 : i32
    return %arg0, %c0_i32 : i32, i32
  }
  func.func @transform_7(%arg0: i32) -> (i32, i32) {
    %c0_i32 = arith.constant 0 : i32
    %c0_i32_0 = arith.constant 0 : i32
    return %arg0, %c0_i32 : i32, i32
  }
}

</mosaic_0001>

<llo_original>
// kernel: tpu_custom_call.1
$region0: #{tpu_custom_call.1}
  #allocation0 [shape = 'u32[]', space=smem, size = 0x4, offset = 0x4, fixed_abs, tag = 'smem constant byte address 0x4 - core index']
  #allocation1 [shape = 'u32[144,128]{1,0:T(1,128)}', space=vmem, size = 0x12000, scoped, tag = 'internal scratch']
  %s0 = inlined_call_operand.hbm [shape: bf16[1,32,32], index: 0, kind: input, shape index: {}]
  %s1 = inlined_call_operand.vmem [shape: bf16[32,256], index: 1, kind: input, shape index: {}]
  %s2 = inlined_call_operand.vmem [shape: f32[32,8], index: 2, kind: input, shape index: {}]
  %s3 = inlined_call_operand.hbm [shape: bf16[2048,128], index: 3, kind: input, shape index: {}]
  %s4 = inlined_call_operand.hbm [shape: f32[32,128], index: 4, kind: input, shape index: {}]
  %s5 = inlined_call_operand.hbm [shape: f32[32,64], index: 5, kind: input, shape index: {}]
  %s6 = inlined_call_operand.hbm [shape: bf16[32,64], index: 6, kind: output, shape index: {0}]
  %s7 = inlined_call_operand.hbm [shape: f32[32,64], index: 7, kind: output, shape index: {1}]
  %8 = xla_tuple %s6, %s7
  %s9 = sld [smem:[#allocation0]]
  $region81: #{tpu_custom_call.1} parent=0
    _
  %s11 = ssub.s32 1, %s9
  %s12 = scalar_select 0, %s11, %s9
  $region1: #{tpu_custom_call.1} parent=0
    #allocation2 [shape = 'u8[8192]{0}', space=vmem, size = 0x2000, scoped, tag = 'input window, operand 0']
    #allocation3 [shape = 's32[2]{0}', space=sflag, size = 0x8, scoped, tag = 'scoped memory for tpu_custom_call.1']
    #allocation4 [shape = 's32[2]{0}', space=sflag, size = 0x8, scoped, tag = 'scoped memory for tpu_custom_call.1']
    #allocation5 [shape = 'u8[524288]{0}', space=vmem, size = 0x80000, scoped, tag = 'input window, operand 3, single buffered']
    #allocation6 [shape = 's32[1]{0}', space=sflag, size = 0x4, scoped, tag = 'scoped memory for tpu_custom_call.1']
    #allocation7 [shape = 'u8[16384]{0}', space=vmem, size = 0x4000, scoped, tag = 'input window, operand 4']
    #allocation8 [shape = 'u8[16384]{0}', space=vmem, size = 0x4000, scoped, tag = 'input window, operand 5']
    #allocation9 [shape = 'u8[8192]{0}', space=vmem, size = 0x2000, scoped, tag = 'output window, operand 0']
    #allocation10 [shape = 'u8[16384]{0}', space=vmem, size = 0x4000, scoped, tag = 'output window, operand 1']
    #allocation11 [shape = 's32[2]{0}', space=sflag, size = 0x8, scoped, tag = 'scoped memory for tpu_custom_call.1']
    %13 = vsyncpa [#allocation3], 0
    %s14 = scalar_lea.sflag [#allocation3], 1
    %15 = vsyncpa %s14, 0
    %16 = vsyncpa [#allocation6], 0
    %17 = vsyncpa [#allocation4], 0
    %s18 = scalar_lea.sflag [#allocation4], 1
    %19 = vsyncpa %s18, 0
    %20 = vsyncpa [#allocation11], 0
    %s21 = scalar_lea.sflag [#allocation11], 1
    %22 = vsyncpa %s21, 0
    loop: start=0, step=1, limit=4
    $region2: #{tpu_custom_call.1} parent=1 // loop_pre_header
      _
    $region3: #{tpu_custom_call.1} parent=1 // loop_header
      %s24 = sphi 0, %s28
      %p25 = scmp.ge.s32.totalorder %s24, 4
      %s34 = sphi 0, %s36
      %s37 = sphi 0, %s34
      %s38 = sphi 0, %s37
      %s54 = sphi 0, %s38
      %s58 = sphi 0, %s58
      %s60 = sphi 0, %s58
      %s61 = sphi 0, %s60
      %s75 = sphi 0, %s61
      %s81 = sphi 0, %s83
      %s84 = sphi 0, %s81
      %s85 = sphi 0, %s84
      %s101 = sphi 0, %s85
      %s105 = sphi 0, %s105
      %s107 = sphi 0, %s105
      %s108 = sphi 0, %s107
      %s122 = sphi 0, %s108
      %s128 = sphi 0, %s130
      %s131 = sphi 0, %s128
      %s132 = sphi 0, %s131
      %s148 = sphi 0, %s132
      %s154 = sphi 0, %s156
      %s157 = sphi 0, %s154
      %s158 = sphi 0, %s157
      %s174 = sphi 0, %s158
      %s180 = sphi 0, %s182
      %s183 = sphi 0, %s180
      %s184 = sphi 0, %s183
      %s200 = sphi 0, %s184
      %s206 = sphi 0, %s208
      %s209 = sphi 0, %s206
      %s210 = sphi 0, %s209
      %s226 = sphi 0, %s210
    $region4: #{tpu_custom_call.1} parent=1 // loop_header_branch
      %27 = sbr.rel (%p25) target = $region8
    $region5: #{tpu_custom_call.1} parent=1 // loop_body
      %s29 = ssub.s32 %s24, 1
      %s30 = ssub.s32 %s24, 2
      %s31 = sadd.s32 %s24, 1
      %s32 = ssub.s32 %s24, %s31
      %p33 = scmp.eq.s32.totalorder %s32, 0
      %s35 = sadd.s32 %s34, 1
      %s36 = scalar_select %p33, %s34, %s35
      %p39 = pneg %p33
      %p40 = scmp.eq.s32.totalorder %s24, 1
      %p41 = por %p39, %p40
      %p42 = scmp.ne.s32.totalorder %s34, %s37
      %p43 = scmp.eq.s32.totalorder %s24, 0
      %p44 = por %p42, %p43
      %p45 = scmp.ne.s32.totalorder %s34, %s37
      %p46 = scmp.eq.s32.totalorder %s29, 1
      %p47 = por %p45, %p46
      %p48 = scmp.ne.s32.totalorder %s37, %s38
      %p49 = scmp.eq.s32.totalorder %s29, 0
      %p50 = por %p48, %p49
      %p51 = scmp.ne.s32.totalorder %s37, %s38
      %p52 = scmp.eq.s32.totalorder %s30, 1
      %p53 = por %p51, %p52
      %p55 = scmp.ne.s32.totalorder %s38, %s54
      %p56 = scmp.eq.s32.totalorder %s30, 0
      %p57 = por %p55, %p56
      %s59 = sadd.s32 %s58, 1
      %p62 = scmp.eq.s32.totalorder %s24, 1
      %p63 = scmp.ne.s32.totalorder %s58, %s60
      %p64 = scmp.eq.s32.totalorder %s24, 0
      %p65 = por %p63, %p64
      %p66 = scmp.ne.s32.totalorder %s58, %s60
      %p67 = scmp.eq.s32.totalorder %s29, 1
      %p68 = por %p66, %p67
      %p69 = scmp.ne.s32.totalorder %s60, %s61
      %p70 = scmp.eq.s32.totalorder %s29, 0
      %p71 = por %p69, %p70
      %p72 = scmp.ne.s32.totalorder %s60, %s61
      %p73 = scmp.eq.s32.totalorder %s30, 1
      %p74 = por %p72, %p73
      %p76 = scmp.ne.s32.totalorder %s61, %s75
      %p77 = scmp.eq.s32.totalorder %s30, 0
      %p78 = por %p76, %p77
      %s79 = ssub.s32 %s24, %s31
      %p80 = scmp.eq.s32.totalorder %s79, 0
      %s82 = sadd.s32 %s81, 1
      %s83 = scalar_select %p80, %s81, %s82
      %p86 = pneg %p80
      %p87 = scmp.eq.s32.totalorder %s24, 1
      %p88 = por %p86, %p87
      %p89 = scmp.ne.s32.totalorder %s81, %s84
      %p90 = scmp.eq.s32.totalorder %s24, 0
      %p91 = por %p89, %p90
      %p92 = scmp.ne.s32.totalorder %s81, %s84
      %p93 = scmp.eq.s32.totalorder %s29, 1
      %p94 = por %p92, %p93
      %p95 = scmp.ne.s32.totalorder %s84, %s85
      %p96 = scmp.eq.s32.totalorder %s29, 0
      %p97 = por %p95, %p96
      %p98 = scmp.ne.s32.totalorder %s84, %s85
      %p99 = scmp.eq.s32.totalorder %s30, 1
      %p100 = por %p98, %p99
      %p102 = scmp.ne.s32.totalorder %s85, %s101
      %p103 = scmp.eq.s32.totalorder %s30, 0
      %p104 = por %p102, %p103
      %s106 = sadd.s32 %s105, 1
      %p109 = scmp.eq.s32.totalorder %s24, 1
      %p110 = scmp.ne.s32.totalorder %s105, %s107
      %p111 = scmp.eq.s32.totalorder %s24, 0
      %p112 = por %p110, %p111
      %p113 = scmp.ne.s32.totalorder %s105, %s107
      %p114 = scmp.eq.s32.totalorder %s29, 1
      %p115 = por %p113, %p114
      %p116 = scmp.ne.s32.totalorder %s107, %s108
      %p117 = scmp.eq.s32.totalorder %s29, 0
      %p118 = por %p116, %p117
      %p119 = scmp.ne.s32.totalorder %s107, %s108
      %p120 = scmp.eq.s32.totalorder %s30, 1
      %p121 = por %p119, %p120
      %p123 = scmp.ne.s32.totalorder %s108, %s122
      %p124 = scmp.eq.s32.totalorder %s30, 0
      %p125 = por %p123, %p124
      %s126 = ssub.s32 %s24, %s31
      %p127 = scmp.eq.s32.totalorder %s126, 0
      %s129 = sadd.s32 %s128, 1
      %s130 = scalar_select %p127, %s128, %s129
      %p133 = pneg %p127
      %p134 = scmp.eq.s32.totalorder %s24, 1
      %p135 = por %p133, %p134
      %p136 = scmp.ne.s32.totalorder %s128, %s131
      %p137 = scmp.eq.s32.totalorder %s24, 0
      %p138 = por %p136, %p137
      %p139 = scmp.ne.s32.totalorder %s128, %s131
      %p140 = scmp.eq.s32.totalorder %s29, 1
      %p141 = por %p139, %p140
      %p142 = scmp.ne.s32.totalorder %s131, %s132
      %p143 = scmp.eq.s32.totalorder %s29, 0
      %p144 = por %p142, %p143
      %p145 = scmp.ne.s32.totalorder %s131, %s132
      %p146 = scmp.eq.s32.totalorder %s30, 1
      %p147 = por %p145, %p146
      %p149 = scmp.ne.s32.totalorder %s132, %s148
      %p150 = scmp.eq.s32.totalorder %s30, 0
      %p151 = por %p149, %p150
      %s152 = ssub.s32 %s24, %s31
      %p153 = scmp.eq.s32.totalorder %s152, 0
      %s155 = sadd.s32 %s154, 1
      %s156 = scalar_select %p153, %s154, %s155
      %p159 = pneg %p153
      %p160 = scmp.eq.s32.totalorder %s24, 1
      %p161 = por %p159, %p160
      %p162 = scmp.ne.s32.totalorder %s154, %s157
      %p163 = scmp.eq.s32.totalorder %s24, 0
      %p164 = por %p162, %p163
      %p165 = scmp.ne.s32.totalorder %s154, %s157
      %p166 = scmp.eq.s32.totalorder %s29, 1
      %p167 = por %p165, %p166
      %p168 = scmp.ne.s32.totalorder %s157, %s158
      %p169 = scmp.eq.s32.totalorder %s29, 0
      %p170 = por %p168, %p169
      %p171 = scmp.ne.s32.totalorder %s157, %s158
      %p172 = scmp.eq.s32.totalorder %s30, 1
      %p173 = por %p171, %p172
      %p175 = scmp.ne.s32.totalorder %s158, %s174
      %p176 = scmp.eq.s32.totalorder %s30, 0
      %p177 = por %p175, %p176
      %s178 = ssub.s32 %s24, %s31
      %p179 = scmp.eq.s32.totalorder %s178, 0
      %s181 = sadd.s32 %s180, 1
      %s182 = scalar_select %p179, %s180, %s181
      %p185 = pneg %p179
      %p186 = scmp.eq.s32.totalorder %s24, 1
      %p187 = por %p185, %p186
      %p188 = scmp.ne.s32.totalorder %s180, %s183
      %p189 = scmp.eq.s32.totalorder %s24, 0
      %p190 = por %p188, %p189
      %p191 = scmp.ne.s32.totalorder %s180, %s183
      %p192 = scmp.eq.s32.totalorder %s29, 1
      %p193 = por %p191, %p192
      %p194 = scmp.ne.s32.totalorder %s183, %s184
      %p195 = scmp.eq.s32.totalorder %s29, 0
      %p196 = por %p194, %p195
      %p197 = scmp.ne.s32.totalorder %s183, %s184
      %p198 = scmp.eq.s32.totalorder %s30, 1
      %p199 = por %p197, %p198
      %p201 = scmp.ne.s32.totalorder %s184, %s200
      %p202 = scmp.eq.s32.totalorder %s30, 0
      %p203 = por %p201, %p202
      %s204 = ssub.s32 %s24, %s31
      %p205 = scmp.eq.s32.totalorder %s204, 0
      %s207 = sadd.s32 %s206, 1
      %s208 = scalar_select %p205, %s206, %s207
      %p211 = pneg %p205
      %p212 = scmp.eq.s32.totalorder %s24, 1
      %p213 = por %p211, %p212
      %p214 = scmp.ne.s32.totalorder %s206, %s209
      %p215 = scmp.eq.s32.totalorder %s24, 0
      %p216 = por %p214, %p215
      %p217 = scmp.ne.s32.totalorder %s206, %s209
      %p218 = scmp.eq.s32.totalorder %s29, 1
      %p219 = por %p217, %p218
      %p220 = scmp.ne.s32.totalorder %s209, %s210
      %p221 = scmp.eq.s32.totalorder %s29, 0
      %p222 = por %p220, %p221
      %p223 = scmp.ne.s32.totalorder %s209, %s210
      %p224 = scmp.eq.s32.totalorder %s30, 1
      %p225 = por %p223, %p224
      %p227 = scmp.ne.s32.totalorder %s210, %s226
      %p228 = scmp.eq.s32.totalorder %s30, 0
      %p229 = por %p227, %p228
      %p230 = scmp.le.s32.totalorder 1, %s24
      %p231 = scmp.lt.s32.totalorder %s24, 3
      %p232 = pnand %p230, %p231
      %p233 = pneg %p232
      // Predicated region
      $region9: #{tpu_custom_call.1} parent=5 // pred_check
        _
      $region10: #{tpu_custom_call.1} parent=5 // pred_check_branch
        %235 = sbr.rel (%p232) target = $region12
      $region11: #{tpu_custom_call.1} parent=5 // pred_region
        %s236 = ssub.s32 %s24, 1
        // Predicated region
        $region13: #{tpu_custom_call.1} parent=11 // pred_check
          %p237 = pneg %p71
        $region14: #{tpu_custom_call.1} parent=11 // pred_check_branch
          %239 = sbr.rel (%p237) target = $region16
        $region15: #{tpu_custom_call.1} parent=11 // pred_region
          _
        $region16: #{tpu_custom_call.1} parent=11 // pred_fallthru
          _
        // Predicated region
        $region17: #{tpu_custom_call.1} parent=11 // pred_check
          %p240 = pneg %p118
        $region18: #{tpu_custom_call.1} parent=11 // pred_check_branch
          %242 = sbr.rel (%p240) target = $region20
        $region19: #{tpu_custom_call.1} parent=11 // pred_region
          %s244 = ssub.s32 16384, 16384
          %245 = vsyncadd [#allocation6], %s244
          %s246 = sshll.u32 [#allocation5], 4
          %s247 = int_to_ptr.vmem [resolvable:$true] %s246
          %252 = dma.hbm_to_vmem [thread:$0]  %s3, 16384, %s247, [#allocation6], 64, 64, 4
        $region20: #{tpu_custom_call.1} parent=11 // pred_fallthru
          _
      $region12: #{tpu_custom_call.1} parent=5 // pred_fallthru
        _
      %p253 = scmp.lt.s32.totalorder %s24, 2
      // Predicated region
      $region21: #{tpu_custom_call.1} parent=5 // pred_check
        %p254 = pneg %p253
      $region22: #{tpu_custom_call.1} parent=5 // pred_check_branch
        %256 = sbr.rel (%p254) target = $region24
      $region23: #{tpu_custom_call.1} parent=5 // pred_region
        // Predicated region
        $region25: #{tpu_custom_call.1} parent=23 // pred_check
          %p257 = pneg %p44
        $region26: #{tpu_custom_call.1} parent=23 // pred_check_branch
          %259 = sbr.rel (%p257) target = $region28
        $region27: #{tpu_custom_call.1} parent=23 // pred_region
          %s260 = sand.u32 %s24, 1
          %s261 = scalar_lea.sflag [#allocation3], %s260
          %s262 = sand.u32 %s34, 1
          %s263 = smul.addr %s262, 8
          %s264 = scalar_lea.vmem [#allocation2], %s263
          %s265 = smul.u32 2, %s24
          %s267 = ssub.s32 128, 128
          %268 = vsyncadd %s261, %s267
          %s269 = smul.addr %s265, 64
          %s270 = scalar_lea.hbm %s0, %s269
          %s271 = sshll.u32 %s264, 4
          %s272 = int_to_ptr.vmem [resolvable:$true] %s271
          %277 = dma.hbm_to_vmem [thread:$0]  %s270, 128, %s272, %s261, 64, 64, 4
        $region28: #{tpu_custom_call.1} parent=23 // pred_fallthru
          _
        // Predicated region
        $region29: #{tpu_custom_call.1} parent=23 // pred_check
          %p278 = pneg %p91
        $region30: #{tpu_custom_call.1} parent=23 // pred_check_branch
          %280 = sbr.rel (%p278) target = $region32
        $region31: #{tpu_custom_call.1} parent=23 // pred_region
          %s281 = smul.u32 2, %s24
          %p282 = scmp.lt.s32.totalorder %s281, 3
          %s283 = scalar_select %p282, %s281, 3
          %s284 = smul.addr %s283, 8
          %s285 = scalar_lea.vmem %s2, %s284
          %s286 = smul.u32 2, %s24
        $region32: #{tpu_custom_call.1} parent=23 // pred_fallthru
          _
        // Predicated region
        $region33: #{tpu_custom_call.1} parent=23 // pred_check
          %p287 = pneg %p138
        $region34: #{tpu_custom_call.1} parent=23 // pred_check_branch
          %289 = sbr.rel (%p287) target = $region36
        $region35: #{tpu_custom_call.1} parent=23 // pred_region
          %s290 = sand.u32 %s24, 1
          %s291 = scalar_lea.sflag [#allocation3], %s290
          %s292 = sand.u32 %s128, 1
          %s293 = smul.addr %s292, 16
          %s294 = scalar_lea.vmem [#allocation7], %s293
          %s295 = smul.u32 2, %s24
          %s297 = ssub.s32 256, 256
          %298 = vsyncadd %s291, %s297
          %s299 = smul.addr %s295, 128
          %s300 = scalar_lea.hbm %s4, %s299
          %s301 = sshll.u32 %s294, 4
          %s302 = int_to_ptr.vmem [resolvable:$true] %s301
          %307 = dma.hbm_to_vmem [thread:$0]  %s300, 256, %s302, %s291, 128, 128, 8
        $region36: #{tpu_custom_call.1} parent=23 // pred_fallthru
          _
        // Predicated region
        $region37: #{tpu_custom_call.1} parent=23 // pred_check
          %p308 = pneg %p164
        $region38: #{tpu_custom_call.1} parent=23 // pred_check_branch
          %310 = sbr.rel (%p308) target = $region40
        $region39: #{tpu_custom_call.1} parent=23 // pred_region
          %s311 = sand.u32 %s24, 1
          %s312 = scalar_lea.sflag [#allocation3], %s311
          %s313 = sand.u32 %s154, 1
          %s314 = smul.addr %s313, 16
          %s315 = scalar_lea.vmem [#allocation8], %s314
          %s316 = smul.u32 2, %s24
          %s318 = ssub.s32 256, 256
          %319 = vsyncadd %s312, %s318
          %s320 = smul.addr %s316, 128
          %s321 = scalar_lea.hbm %s5, %s320
          %s322 = sshll.u32 %s315, 4
          %s323 = int_to_ptr.vmem [resolvable:$true] %s322
          %328 = dma.hbm_to_vmem [thread:$0]  %s321, 256, %s323, %s312, 128, 128, 8
        $region40: #{tpu_custom_call.1} parent=23 // pred_fallthru
          _
      $region24: #{tpu_custom_call.1} parent=5 // pred_fallthru
        _
      %p329 = scmp.le.s32.totalorder 1, %s24
      %p330 = scmp.lt.s32.totalorder %s24, 3
      %p331 = pnand %p329, %p330
      %p332 = pneg %p331
      // Predicated region
      $region41: #{tpu_custom_call.1} parent=5 // pred_check
        _
      $region42: #{tpu_custom_call.1} parent=5 // pred_check_branch
        %334 = sbr.rel (%p331) target = $region44
      $region43: #{tpu_custom_call.1} parent=5 // pred_region
        %s335 = ssub.s32 %s24, 1
        %s336 = sand.u32 %s29, 1
        %s337 = scalar_lea.sflag [#allocation3], %s336
        %s338 = sand.u32 %s37, 1
        %s339 = smul.addr %s338, 8
        %s340 = scalar_lea.vmem [#allocation2], %s339
        // Predicated region
        $region45: #{tpu_custom_call.1} parent=43 // pred_check
          %p341 = pneg %p50
        $region46: #{tpu_custom_call.1} parent=43 // pred_check_branch
          %343 = sbr.rel (%p341) target = $region48
        $region47: #{tpu_custom_call.1} parent=43 // pred_region
          %344 = dma.done %s337, 128
        $region48: #{tpu_custom_call.1} parent=43 // pred_fallthru
          _
        // Predicated region
        $region49: #{tpu_custom_call.1} parent=43 // pred_check
          %p345 = pneg %p118
        $region50: #{tpu_custom_call.1} parent=43 // pred_check_branch
          %347 = sbr.rel (%p345) target = $region52
        $region51: #{tpu_custom_call.1} parent=43 // pred_region
          %348 = dma.done [#allocation6], 16384
        $region52: #{tpu_custom_call.1} parent=43 // pred_fallthru
          _
        %s349 = sand.u32 %s29, 1
        %s350 = scalar_lea.sflag [#allocation3], %s349
        %s351 = sand.u32 %s131, 1
        %s352 = smul.addr %s351, 16
        %s353 = scalar_lea.vmem [#allocation7], %s352
        // Predicated region
        $region53: #{tpu_custom_call.1} parent=43 // pred_check
          %p354 = pneg %p144
        $region54: #{tpu_custom_call.1} parent=43 // pred_check_branch
          %356 = sbr.rel (%p354) target = $region56
        $region55: #{tpu_custom_call.1} parent=43 // pred_region
          %357 = dma.done %s350, 256
        $region56: #{tpu_custom_call.1} parent=43 // pred_fallthru
          _
        %s358 = sand.u32 %s29, 1
        %s359 = scalar_lea.sflag [#allocation3], %s358
        %s360 = sand.u32 %s157, 1
        %s361 = smul.addr %s360, 16
        %s362 = scalar_lea.vmem [#allocation8], %s361
        // Predicated region
        $region57: #{tpu_custom_call.1} parent=43 // pred_check
          %p363 = pneg %p170
        $region58: #{tpu_custom_call.1} parent=43 // pred_check_branch
          %365 = sbr.rel (%p363) target = $region60
        $region59: #{tpu_custom_call.1} parent=43 // pred_region
          %366 = dma.done %s359, 256
        $region60: #{tpu_custom_call.1} parent=43 // pred_fallthru
          _
        %s367 = sand.u32 %s29, 1
        %s368 = scalar_lea.sflag [#allocation3], %s367
        %s369 = sand.u32 %s37, 1
        %s370 = smul.addr %s369, 8
        %s371 = scalar_lea.vmem [#allocation2], %s370
        %p372 = pneg %p50
        %p373 = pneg %p47
        %p374 = pneg %p71
        %p375 = pneg %p68
        %s376 = smul.u32 2, %s29
        %p377 = scmp.lt.s32.totalorder %s376, 3
        %s378 = scalar_select %p377, %s376, 3
        %s379 = smul.addr %s378, 8
        %s380 = scalar_lea.vmem %s2, %s379
        %p381 = pneg %p97
        %p382 = pneg %p94
        %p383 = pneg %p118
        %p384 = pneg %p115
        %s385 = sand.u32 %s29, 1
        %s386 = scalar_lea.sflag [#allocation3], %s385
        %s387 = sand.u32 %s131, 1
        %s388 = smul.addr %s387, 16
        %s389 = scalar_lea.vmem [#allocation7], %s388
        %p390 = pneg %p144
        %p391 = pneg %p141
        %s392 = sand.u32 %s29, 1
        %s393 = scalar_lea.sflag [#allocation3], %s392
        %s394 = sand.u32 %s157, 1
        %s395 = smul.addr %s394, 16
        %s396 = scalar_lea.vmem [#allocation8], %s395
        %p397 = pneg %p170
        %p398 = pneg %p167
        %p399 = pneg %p196
        %p400 = pneg %p193
        %s401 = sand.u32 %s183, 1
        %s402 = scalar_lea.sflag [#allocation4], %s401
        %s403 = sand.u32 %s183, 1
        %s404 = smul.addr %s403, 8
        %s405 = scalar_lea.vmem [#allocation9], %s404
        %p406 = pneg %p222
        %p407 = pneg %p219
        %s408 = sand.u32 %s209, 1
        %s409 = scalar_lea.sflag [#allocation11], %s408
        %s410 = sand.u32 %s209, 1
        %s411 = smul.addr %s410, 16
        %s412 = scalar_lea.vmem [#allocation10], %s411
        %s413 = smul.u32 2, %s29
        %s414 = smul.u32 2, %s29
        %p415 = scmp.lt.s32.totalorder %s414, 3
        %s416 = scalar_select %p415, %s414, 3
        %s417 = smul.addr %s416, 8
        %s418 = scalar_lea.vmem %s2, %s417
        %s419 = smul.u32 2, %s29
        %s420 = smul.u32 2, %s29
        %s421 = smul.u32 2, %s29
        %s422 = smul.u32 2, %s29
        %s423 = smul.u32 2, %s29
        %v425 = vld [vmem:[%s418] sm:$0xff]
        %v426 = vld [vmem:[%s418 + $0x8] sm:$0xff]
        %s427 = smul.u32 %s29, 16
        %s428 = sshra.s32 %s427, 3
        %s429 = sand.u32 %s427, 7
        %s430 = smul.u32 %s428, 2
        %s431 = smul.addr %s430, 4
        %s432 = scalar_lea.vmem %s1, %s431
        %v433 = vld [vmem:[%s432] sm:$0xff]
        %v434 = vld [vmem:[%s432 + $0x8] sm:$0xff]
        %v435 = vld [vmem:[%s340] sm:$0xf]
        %v436 = vld [vmem:[%s340 + $0x4] sm:$0xf]
        %v437 = vld [vmem:[%s1] sm:$0xff]
        %v438 = vld [vmem:[%s1 + $0x8] sm:$0xff]
        %v439 = vld [vmem:[%s1 + $0x10] sm:$0xff]
        %v440 = vld [vmem:[%s1 + $0x18] sm:$0xff]
        %v443 = vunpack.c.l.b16 %v435
        %v444 = vunpack.c.l.b16 %v436
        %v445 = vpack.c.b16 %v444, %v443
        %v450 = vunpack.c.l.b16 %v437
        %v451 = vunpack.c.h.b16 %v437
        %v452 = vunpack.c.l.b16 %v438
        %v453 = vunpack.c.h.b16 %v438
        %v454 = vunpack.c.l.b16 %v439
        %v455 = vunpack.c.h.b16 %v439
        %v456 = vunpack.c.l.b16 %v440
        %v457 = vunpack.c.h.b16 %v440
        %v458 = vpack.c.b16 %v452, %v450
        %v459 = vpack.c.b16 %v453, %v451
        %v460 = vpack.c.b16 %v456, %v454
        %v461 = vpack.c.b16 %v457, %v455
        %vm466 = vcmask 261120
        %v468 = vsel %vm466, %v445, 0
        %470 = vmatprep.subr.bf16.mxu0 %v459
        %471 = vmatpush1.bf16.msra.mxu0 %v458
        %472 = vmatprep.subr.bf16.mxu0 %v461
        %473 = vmatpush1.bf16.msra.mxu0 %v460
        %474 = vmatprep.subr.bf16.mxu0 0
        %475 = vmatpush1.bf16.msra.mxu0 0
        %476 = vmatprep.subr.bf16.mxu0 0
        %477 = vmatpush1.bf16.msra.mxu0 0
        %478 = vmatprep.subr.bf16.mxu0 0
        %479 = vmatpush1.bf16.msra.mxu0 0
        %480 = vmatprep.subr.bf16.mxu0 0
        %481 = vmatpush1.bf16.msra.mxu0 0
        %482 = vmatprep.subr.bf16.mxu0 0
        %483 = vmatpush1.bf16.msra.mxu0 0
        %484 = vmatprep.subr.bf16.mxu0 0
        %485 = vmatpush1.bf16.msra.mxu0 0
        %486 = vmatprep.subr.bf16.mxu0 0
        %487 = vmatpush1.bf16.msra.mxu0 0
        %488 = vmatprep.subr.bf16.mxu0 0
        %489 = vmatpush1.bf16.msra.mxu0 0
        %490 = vmatprep.subr.bf16.mxu0 0
        %491 = vmatpush1.bf16.msra.mxu0 0
        %492 = vmatprep.subr.bf16.mxu0 0
        %493 = vmatpush1.bf16.msra.mxu0 0
        %494 = vmatprep.subr.bf16.mxu0 0
        %495 = vmatpush1.bf16.msra.mxu0 0
        %496 = vmatprep.subr.bf16.mxu0 0
        %497 = vmatpush1.bf16.msra.mxu0 0
        %498 = vmatprep.subr.bf16.mxu0 0
        %499 = vmatpush1.bf16.msra.mxu0 0
        %500 = vmatprep.subr.bf16.mxu0 0
        %501 = vmatpush1.bf16.msra.mxu0 0
        %502 = vmatprep.mubr.bf16.mxu0 0
        %503 = vmatmul.mubr.bf16.gmra.mrb[0].mxu0 %v468
        %v504 = vpop.f32.mrb[0].mxu0
        %v505 = vadd.f32 0.0, %v504
        %v506 = vpop.f32.mrb[0].mxu0
        %v507 = vadd.f32 0.0, %v506
        %v508 = vpop.f32.mrb[0].mxu0
        %v509 = vadd.f32 0.0, %v508
        %v510 = vpop.f32.mrb[0].mxu0
        %v511 = vadd.f32 0.0, %v510
        %512 = vdwg.mxu0
        %v513 = vunpack.c.l.bf16 %v433
        %v514 = vunpack.c.h.bf16 %v433
        %v515 = vunpack.c.l.bf16 %v434
        %v516 = vunpack.c.h.bf16 %v434
        %vm517 = vcmask 1040384
        %v518 = vsel %vm517, %v513, 0.0
        %v519 = vsel %vm517, %v514, 0.0
        %v520 = vrot.slane %v513, 1
        %v521 = vsel %vm517, %v520, 0.0
        %v522 = vrot.slane %v514, 1
        %v523 = vsel %vm517, %v522, 0.0
        %v524 = vrot.slane %v513, 2
        %v525 = vsel %vm517, %v524, 0.0
        %v526 = vrot.slane %v514, 2
        %v527 = vsel %vm517, %v526, 0.0
        %v528 = vrot.slane %v513, 3
        %v529 = vsel %vm517, %v528, 0.0
        %v530 = vrot.slane %v514, 3
        %v531 = vsel %vm517, %v530, 0.0
        %v532 = vrot.slane %v513, 4
        %v533 = vsel %vm517, %v532, 0.0
        %v534 = vrot.slane %v514, 4
        %v535 = vsel %vm517, %v534, 0.0
        %v536 = vrot.slane %v513, 5
        %v537 = vsel %vm517, %v536, 0.0
        %v538 = vrot.slane %v514, 5
        %v539 = vsel %vm517, %v538, 0.0
        %v540 = vrot.slane %v513, 6
        %v541 = vsel %vm517, %v540, 0.0
        %v542 = vrot.slane %v514, 6
        %v543 = vsel %vm517, %v542, 0.0
        %v544 = vrot.slane %v513, 7
        %v545 = vsel %vm517, %v544, 0.0
        %v546 = vrot.slane %v514, 7
        %v547 = vsel %vm517, %v546, 0.0
        %v548 = vsel %vm517, %v515, 0.0
        %v549 = vsel %vm517, %v516, 0.0
        %v550 = vrot.slane %v515, 1
        %v551 = vsel %vm517, %v550, 0.0
        %v552 = vrot.slane %v516, 1
        %v553 = vsel %vm517, %v552, 0.0
        %v554 = vrot.slane %v515, 2
        %v555 = vsel %vm517, %v554, 0.0
        %v556 = vrot.slane %v516, 2
        %v557 = vsel %vm517, %v556, 0.0
        %v558 = vrot.slane %v515, 3
        %v559 = vsel %vm517, %v558, 0.0
        %v560 = vrot.slane %v516, 3
        %v561 = vsel %vm517, %v560, 0.0
        %v562 = vrot.slane %v515, 4
        %v563 = vsel %vm517, %v562, 0.0
        %v564 = vrot.slane %v516, 4
        %v565 = vsel %vm517, %v564, 0.0
        %v566 = vrot.slane %v515, 5
        %v567 = vsel %vm517, %v566, 0.0
        %v568 = vrot.slane %v516, 5
        %v569 = vsel %vm517, %v568, 0.0
        %v570 = vrot.slane %v515, 6
        %v571 = vsel %vm517, %v570, 0.0
        %v572 = vrot.slane %v516, 6
        %v573 = vsel %vm517, %v572, 0.0
        %v574 = vrot.slane %v515, 7
        %v575 = vsel %vm517, %v574, 0.0
        %v576 = vrot.slane %v516, 7
        %v577 = vsel %vm517, %v576, 0.0
        %v578 = vlaneseq
        %v579 = vshrl.u32 %v578, 7
        %v580 = vsub.s32 0, %v579
        %v581 = vrot.slane %v425, %v580
        %583 = vbcast.lane.b32.xlu0 %v581, 256
        %v584 = vpop.permute.xlu0 %583
        %v585 = vlaneseq
        %v586 = vshrl.u32 %v585, 7
        %v587 = vsub.s32 1, %v586
        %v588 = vrot.slane %v425, %v587
        %590 = vbcast.lane.b32.xlu0 %v588, 256
        %v591 = vpop.permute.xlu0 %590
        %v592 = vlaneseq
        %v593 = vshrl.u32 %v592, 7
        %v594 = vsub.s32 2, %v593
        %v595 = vrot.slane %v425, %v594
        %597 = vbcast.lane.b32.xlu0 %v595, 256
        %v598 = vpop.permute.xlu0 %597
        %v599 = vlaneseq
        %v600 = vshrl.u32 %v599, 7
        %v601 = vsub.s32 3, %v600
        %v602 = vrot.slane %v425, %v601
        %604 = vbcast.lane.b32.xlu0 %v602, 256
        %v605 = vpop.permute.xlu0 %604
        %v606 = vlaneseq
        %v607 = vshrl.u32 %v606, 7
        %v608 = vsub.s32 4, %v607
        %v609 = vrot.slane %v425, %v608
        %611 = vbcast.lane.b32.xlu0 %v609, 256
        %v612 = vpop.permute.xlu0 %611
        %v613 = vlaneseq
        %v614 = vshrl.u32 %v613, 7
        %v615 = vsub.s32 5, %v614
        %v616 = vrot.slane %v425, %v615
        %618 = vbcast.lane.b32.xlu0 %v616, 256
        %v619 = vpop.permute.xlu0 %618
        %v620 = vlaneseq
        %v621 = vshrl.u32 %v620, 7
        %v622 = vsub.s32 6, %v621
        %v623 = vrot.slane %v425, %v622
        %625 = vbcast.lane.b32.xlu0 %v623, 256
        %v626 = vpop.permute.xlu0 %625
        %v627 = vlaneseq
        %v628 = vshrl.u32 %v627, 7
        %v629 = vsub.s32 7, %v628
        %v630 = vrot.slane %v425, %v629
        %632 = vbcast.lane.b32.xlu0 %v630, 256
        %v633 = vpop.permute.xlu0 %632
        %v634 = vlaneseq
        %v635 = vshrl.u32 %v634, 7
        %v636 = vsub.s32 0, %v635
        %v637 = vrot.slane %v426, %v636
        %639 = vbcast.lane.b32.xlu0 %v637, 256
        %v640 = vpop.permute.xlu0 %639
        %v641 = vlaneseq
        %v642 = vshrl.u32 %v641, 7
        %v643 = vsub.s32 1, %v642
        %v644 = vrot.slane %v426, %v643
        %646 = vbcast.lane.b32.xlu0 %v644, 256
        %v647 = vpop.permute.xlu0 %646
        %v648 = vlaneseq
        %v649 = vshrl.u32 %v648, 7
        %v650 = vsub.s32 2, %v649
        %v651 = vrot.slane %v426, %v650
        %653 = vbcast.lane.b32.xlu0 %v651, 256
        %v654 = vpop.permute.xlu0 %653
        %v655 = vlaneseq
        %v656 = vshrl.u32 %v655, 7
        %v657 = vsub.s32 3, %v656
        %v658 = vrot.slane %v426, %v657
        %660 = vbcast.lane.b32.xlu0 %v658, 256
        %v661 = vpop.permute.xlu0 %660
        %v662 = vlaneseq
        %v663 = vshrl.u32 %v662, 7
        %v664 = vsub.s32 4, %v663
        %v665 = vrot.slane %v426, %v664
        %667 = vbcast.lane.b32.xlu0 %v665, 256
        %v668 = vpop.permute.xlu0 %667
        %v669 = vlaneseq
        %v670 = vshrl.u32 %v669, 7
        %v671 = vsub.s32 5, %v670
        %v672 = vrot.slane %v426, %v671
        %674 = vbcast.lane.b32.xlu0 %v672, 256
        %v675 = vpop.permute.xlu0 %674
        %v676 = vlaneseq
        %v677 = vshrl.u32 %v676, 7
        %v678 = vsub.s32 6, %v677
        %v679 = vrot.slane %v426, %v678
        %681 = vbcast.lane.b32.xlu0 %v679, 256
        %v682 = vpop.permute.xlu0 %681
        %v683 = vlaneseq
        %v684 = vshrl.u32 %v683, 7
        %v685 = vsub.s32 7, %v684
        %v686 = vrot.slane %v426, %v685
        %688 = vbcast.lane.b32.xlu0 %v686, 256
        %v689 = vpop.permute.xlu0 %688
        %v690 = vlaneseq
        %v691 = vshrl.u32 %v690, 7
        %v692 = vsub.s32 0, %v691
        %v693 = vrot.slane %v518, %v692
        %v694 = vlaneseq
        %v695 = vshrl.u32 %v694, 7
        %v696 = vsub.s32 0, %v695
        %v697 = vrot.slane %v519, %v696
        %v698 = vlaneseq
        %v699 = vshrl.u32 %v698, 7
        %v700 = vsub.s32 0, %v699
        %v701 = vrot.slane %v521, %v700
        %v702 = vlaneseq
        %v703 = vshrl.u32 %v702, 7
        %v704 = vsub.s32 0, %v703
        %v705 = vrot.slane %v523, %v704
        %v706 = vlaneseq
        %v707 = vshrl.u32 %v706, 7
        %v708 = vsub.s32 0, %v707
        %v709 = vrot.slane %v525, %v708
        %v710 = vlaneseq
        %v711 = vshrl.u32 %v710, 7
        %v712 = vsub.s32 0, %v711
        %v713 = vrot.slane %v527, %v712
        %v714 = vlaneseq
        %v715 = vshrl.u32 %v714, 7
        %v716 = vsub.s32 0, %v715
        %v717 = vrot.slane %v529, %v716
        %v718 = vlaneseq
        %v719 = vshrl.u32 %v718, 7
        %v720 = vsub.s32 0, %v719
        %v721 = vrot.slane %v531, %v720
        %v722 = vlaneseq
        %v723 = vshrl.u32 %v722, 7
        %v724 = vsub.s32 0, %v723
        %v725 = vrot.slane %v533, %v724
        %v726 = vlaneseq
        %v727 = vshrl.u32 %v726, 7
        %v728 = vsub.s32 0, %v727
        %v729 = vrot.slane %v535, %v728
        %v730 = vlaneseq
        %v731 = vshrl.u32 %v730, 7
        %v732 = vsub.s32 0, %v731
        %v733 = vrot.slane %v537, %v732
        %v734 = vlaneseq
        %v735 = vshrl.u32 %v734, 7
        %v736 = vsub.s32 0, %v735
        %v737 = vrot.slane %v539, %v736
        %v738 = vlaneseq
        %v739 = vshrl.u32 %v738, 7
        %v740 = vsub.s32 0, %v739
        %v741 = vrot.slane %v541, %v740
        %v742 = vlaneseq
        %v743 = vshrl.u32 %v742, 7
        %v744 = vsub.s32 0, %v743
        %v745 = vrot.slane %v543, %v744
        %v746 = vlaneseq
        %v747 = vshrl.u32 %v746, 7
        %v748 = vsub.s32 0, %v747
        %v749 = vrot.slane %v545, %v748
        %v750 = vlaneseq
        %v751 = vshrl.u32 %v750, 7
        %v752 = vsub.s32 0, %v751
        %v753 = vrot.slane %v547, %v752
        %v754 = vlaneseq
        %v755 = vshrl.u32 %v754, 7
        %v756 = vsub.s32 0, %v755
        %v757 = vrot.slane %v548, %v756
        %v758 = vlaneseq
        %v759 = vshrl.u32 %v758, 7
        %v760 = vsub.s32 0, %v759
        %v761 = vrot.slane %v549, %v760
        %v762 = vlaneseq
        %v763 = vshrl.u32 %v762, 7
        %v764 = vsub.s32 0, %v763
        %v765 = vrot.slane %v551, %v764
        %v766 = vlaneseq
        %v767 = vshrl.u32 %v766, 7
        %v768 = vsub.s32 0, %v767
        %v769 = vrot.slane %v553, %v768
        %v770 = vlaneseq
        %v771 = vshrl.u32 %v770, 7
        %v772 = vsub.s32 0, %v771
        %v773 = vrot.slane %v555, %v772
        %v774 = vlaneseq
        %v775 = vshrl.u32 %v774, 7
        %v776 = vsub.s32 0, %v775
        %v777 = vrot.slane %v557, %v776
        %v778 = vlaneseq
        %v779 = vshrl.u32 %v778, 7
        %v780 = vsub.s32 0, %v779
        %v781 = vrot.slane %v559, %v780
        %v782 = vlaneseq
        %v783 = vshrl.u32 %v782, 7
        %v784 = vsub.s32 0, %v783
        %v785 = vrot.slane %v561, %v784
        %v786 = vlaneseq
        %v787 = vshrl.u32 %v786, 7
        %v788 = vsub.s32 0, %v787
        %v789 = vrot.slane %v563, %v788
        %v790 = vlaneseq
        %v791 = vshrl.u32 %v790, 7
        %v792 = vsub.s32 0, %v791
        %v793 = vrot.slane %v565, %v792
        %v794 = vlaneseq
        %v795 = vshrl.u32 %v794, 7
        %v796 = vsub.s32 0, %v795
        %v797 = vrot.slane %v567, %v796
        %v798 = vlaneseq
        %v799 = vshrl.u32 %v798, 7
        %v800 = vsub.s32 0, %v799
        %v801 = vrot.slane %v569, %v800
        %v802 = vlaneseq
        %v803 = vshrl.u32 %v802, 7
        %v804 = vsub.s32 0, %v803
        %v805 = vrot.slane %v571, %v804
        %v806 = vlaneseq
        %v807 = vshrl.u32 %v806, 7
        %v808 = vsub.s32 0, %v807
        %v809 = vrot.slane %v573, %v808
        %v810 = vlaneseq
        %v811 = vshrl.u32 %v810, 7
        %v812 = vsub.s32 0, %v811
        %v813 = vrot.slane %v575, %v812
        %v814 = vlaneseq
        %v815 = vshrl.u32 %v814, 7
        %v816 = vsub.s32 0, %v815
        %v817 = vrot.slane %v577, %v816
        %v818 = vmul.f32 %v693, %v584
        %v819 = vmul.f32 %v697, %v584
        %v820 = vmul.f32 %v701, %v591
        %v821 = vmul.f32 %v705, %v591
        %v822 = vmul.f32 %v709, %v598
        %v823 = vmul.f32 %v713, %v598
        %v824 = vmul.f32 %v717, %v605
        %v825 = vmul.f32 %v721, %v605
        %v826 = vmul.f32 %v725, %v612
        %v827 = vmul.f32 %v729, %v612
        %v828 = vmul.f32 %v733, %v619
        %v829 = vmul.f32 %v737, %v619
        %v830 = vmul.f32 %v741, %v626
        %v831 = vmul.f32 %v745, %v626
        %v832 = vmul.f32 %v749, %v633
        %v833 = vmul.f32 %v753, %v633
        %v834 = vmul.f32 %v757, %v640
        %v835 = vmul.f32 %v761, %v640
        %v836 = vmul.f32 %v765, %v647
        %v837 = vmul.f32 %v769, %v647
        %v838 = vmul.f32 %v773, %v654
        %v839 = vmul.f32 %v777, %v654
        %v840 = vmul.f32 %v781, %v661
        %v841 = vmul.f32 %v785, %v661
        %v842 = vmul.f32 %v789, %v668
        %v843 = vmul.f32 %v793, %v668
        %v844 = vmul.f32 %v797, %v675
        %v845 = vmul.f32 %v801, %v675
        %v846 = vmul.f32 %v805, %v682
        %v847 = vmul.f32 %v809, %v682
        %v848 = vmul.f32 %v813, %v689
        %v849 = vmul.f32 %v817, %v689
        %v850 = vpack.c.bf16 %v818, %v818
        %v851 = vpack.c.bf16 %v819, %v819
        %v852 = vpack.c.bf16 %v820, %v820
        %v853 = vpack.c.bf16 %v821, %v821
        %v854 = vpack.c.bf16 %v822, %v822
        %v855 = vpack.c.bf16 %v823, %v823
        %v856 = vpack.c.bf16 %v824, %v824
        %v857 = vpack.c.bf16 %v825, %v825
        %v858 = vpack.c.bf16 %v826, %v826
        %v859 = vpack.c.bf16 %v827, %v827
        %v860 = vpack.c.bf16 %v828, %v828
        %v861 = vpack.c.bf16 %v829, %v829
        %v862 = vpack.c.bf16 %v830, %v830
        %v863 = vpack.c.bf16 %v831, %v831
        %v864 = vpack.c.bf16 %v832, %v832
        %v865 = vpack.c.bf16 %v833, %v833
        %v866 = vpack.c.bf16 %v834, %v834
        %v867 = vpack.c.bf16 %v835, %v835
        %v868 = vpack.c.bf16 %v836, %v836
        %v869 = vpack.c.bf16 %v837, %v837
        %v870 = vpack.c.bf16 %v838, %v838
        %v871 = vpack.c.bf16 %v839, %v839
        %v872 = vpack.c.bf16 %v840, %v840
        %v873 = vpack.c.bf16 %v841, %v841
        %v874 = vpack.c.bf16 %v842, %v842
        %v875 = vpack.c.bf16 %v843, %v843
        %v876 = vpack.c.bf16 %v844, %v844
        %v877 = vpack.c.bf16 %v845, %v845
        %v878 = vpack.c.bf16 %v846, %v846
        %v879 = vpack.c.bf16 %v847, %v847
        %v880 = vpack.c.bf16 %v848, %v848
        %v881 = vpack.c.bf16 %v849, %v849
        %v882 = vcombine.low %v850, %v854
        %v884 = vunpack.c.l.s4 1983009808
        %v885 = vunpack.c.0.s8 %v884
        %v886 = vlaneseq
        %v887 = vshrl.u32 %v886, 7
        %v888 = vsub.s32 %v885, %v887
        %v889 = vrot.slane %v882, %v888
        %v890 = vcombine.low %v852, %v856
        %v892 = vunpack.c.l.s4 1983009808
        %v893 = vunpack.c.0.s8 %v892
        %v894 = vlaneseq
        %v895 = vshrl.u32 %v894, 7
        %v896 = vsub.s32 %v893, %v895
        %v897 = vrot.slane %v890, %v896
        %v898 = vcombine.low %v858, %v862
        %v900 = vunpack.c.l.s4 1983009808
        %v901 = vunpack.c.0.s8 %v900
        %v902 = vlaneseq
        %v903 = vshrl.u32 %v902, 7
        %v904 = vsub.s32 %v901, %v903
        %v905 = vrot.slane %v898, %v904
        %v906 = vcombine.low %v860, %v864
        %v908 = vunpack.c.l.s4 1983009808
        %v909 = vunpack.c.0.s8 %v908
        %v910 = vlaneseq
        %v911 = vshrl.u32 %v910, 7
        %v912 = vsub.s32 %v909, %v911
        %v913 = vrot.slane %v906, %v912
        %v914 = vcombine.low %v889, %v897
        %v915 = vcombine.high %v889, %v897
        %v917 = vunpack.c.l.s4 1934713408
        %v918 = vunpack.c.0.s8 %v917
        %v919 = vlaneseq
        %v920 = vshrl.u32 %v919, 7
        %v921 = vsub.s32 %v918, %v920
        %v922 = vrot.slane %v914, %v921
        %v924 = vunpack.c.l.s4 1934713408
        %v925 = vunpack.c.0.s8 %v924
        %v926 = vlaneseq
        %v927 = vshrl.u32 %v926, 7
        %v928 = vsub.s32 %v925, %v927
        %v929 = vrot.slane %v915, %v928
        %v930 = vcombine.low %v905, %v913
        %v931 = vcombine.high %v905, %v913
        %v933 = vunpack.c.l.s4 1934713408
        %v934 = vunpack.c.0.s8 %v933
        %v935 = vlaneseq
        %v936 = vshrl.u32 %v935, 7
        %v937 = vsub.s32 %v934, %v936
        %v938 = vrot.slane %v930, %v937
        %v940 = vunpack.c.l.s4 1934713408
        %v941 = vunpack.c.0.s8 %v940
        %v942 = vlaneseq
        %v943 = vshrl.u32 %v942, 7
        %v944 = vsub.s32 %v941, %v943
        %v945 = vrot.slane %v931, %v944
        %v946 = vcombine.low %v922, %v938
        %v947 = vcombine.high %v922, %v938
        %v948 = vcombine.low %v929, %v945
        %v949 = vcombine.high %v929, %v945
        %v950 = vcombine.low %v851, %v855
        %v952 = vunpack.c.l.s4 1983009808
        %v953 = vunpack.c.0.s8 %v952
        %v954 = vlaneseq
        %v955 = vshrl.u32 %v954, 7
        %v956 = vsub.s32 %v953, %v955
        %v957 = vrot.slane %v950, %v956
        %v958 = vcombine.low %v853, %v857
        %v960 = vunpack.c.l.s4 1983009808
        %v961 = vunpack.c.0.s8 %v960
        %v962 = vlaneseq
        %v963 = vshrl.u32 %v962, 7
        %v964 = vsub.s32 %v961, %v963
        %v965 = vrot.slane %v958, %v964
        %v966 = vcombine.low %v859, %v863
        %v968 = vunpack.c.l.s4 1983009808
        %v969 = vunpack.c.0.s8 %v968
        %v970 = vlaneseq
        %v971 = vshrl.u32 %v970, 7
        %v972 = vsub.s32 %v969, %v971
        %v973 = vrot.slane %v966, %v972
        %v974 = vcombine.low %v861, %v865
        %v976 = vunpack.c.l.s4 1983009808
        %v977 = vunpack.c.0.s8 %v976
        %v978 = vlaneseq
        %v979 = vshrl.u32 %v978, 7
        %v980 = vsub.s32 %v977, %v979
        %v981 = vrot.slane %v974, %v980
        %v982 = vcombine.low %v957, %v965
        %v983 = vcombine.high %v957, %v965
        %v985 = vunpack.c.l.s4 1934713408
        %v986 = vunpack.c.0.s8 %v985
        %v987 = vlaneseq
        %v988 = vshrl.u32 %v987, 7
        %v989 = vsub.s32 %v986, %v988
        %v990 = vrot.slane %v982, %v989
        %v992 = vunpack.c.l.s4 1934713408
        %v993 = vunpack.c.0.s8 %v992
        %v994 = vlaneseq
        %v995 = vshrl.u32 %v994, 7
        %v996 = vsub.s32 %v993, %v995
        %v997 = vrot.slane %v983, %v996
        %v998 = vcombine.low %v973, %v981
        %v999 = vcombine.high %v973, %v981
        %v1001 = vunpack.c.l.s4 1934713408
        %v1002 = vunpack.c.0.s8 %v1001
        %v1003 = vlaneseq
        %v1004 = vshrl.u32 %v1003, 7
        %v1005 = vsub.s32 %v1002, %v1004
        %v1006 = vrot.slane %v998, %v1005
        %v1008 = vunpack.c.l.s4 1934713408
        %v1009 = vunpack.c.0.s8 %v1008
        %v1010 = vlaneseq
        %v1011 = vshrl.u32 %v1010, 7
        %v1012 = vsub.s32 %v1009, %v1011
        %v1013 = vrot.slane %v999, %v1012
        %v1014 = vcombine.low %v990, %v1006
        %v1015 = vcombine.high %v990, %v1006
        %v1016 = vcombine.low %v997, %v1013
        %v1017 = vcombine.high %v997, %v1013
        %v1018 = vcombine.low %v866, %v870
        %v1020 = vunpack.c.l.s4 1983009808
        %v1021 = vunpack.c.0.s8 %v1020
        %v1022 = vlaneseq
        %v1023 = vshrl.u32 %v1022, 7
        %v1024 = vsub.s32 %v1021, %v1023
        %v1025 = vrot.slane %v1018, %v1024
        %v1026 = vcombine.low %v868, %v872
        %v1028 = vunpack.c.l.s4 1983009808
        %v1029 = vunpack.c.0.s8 %v1028
        %v1030 = vlaneseq
        %v1031 = vshrl.u32 %v1030, 7
        %v1032 = vsub.s32 %v1029, %v1031
        %v1033 = vrot.slane %v1026, %v1032
        %v1034 = vcombine.low %v874, %v878
        %v1036 = vunpack.c.l.s4 1983009808
        %v1037 = vunpack.c.0.s8 %v1036
        %v1038 = vlaneseq
        %v1039 = vshrl.u32 %v1038, 7
        %v1040 = vsub.s32 %v1037, %v1039
        %v1041 = vrot.slane %v1034, %v1040
        %v1042 = vcombine.low %v876, %v880
        %v1044 = vunpack.c.l.s4 1983009808
        %v1045 = vunpack.c.0.s8 %v1044
        %v1046 = vlaneseq
        %v1047 = vshrl.u32 %v1046, 7
        %v1048 = vsub.s32 %v1045, %v1047
        %v1049 = vrot.slane %v1042, %v1048
        %v1050 = vcombine.low %v1025, %v1033
        %v1051 = vcombine.high %v1025, %v1033
        %v1053 = vunpack.c.l.s4 1934713408
        %v1054 = vunpack.c.0.s8 %v1053
        %v1055 = vlaneseq
        %v1056 = vshrl.u32 %v1055, 7
        %v1057 = vsub.s32 %v1054, %v1056
        %v1058 = vrot.slane %v1050, %v1057
        %v1060 = vunpack.c.l.s4 1934713408
        %v1061 = vunpack.c.0.s8 %v1060
        %v1062 = vlaneseq
        %v1063 = vshrl.u32 %v1062, 7
        %v1064 = vsub.s32 %v1061, %v1063
        %v1065 = vrot.slane %v1051, %v1064
        %v1066 = vcombine.low %v1041, %v1049
        %v1067 = vcombine.high %v1041, %v1049
        %v1069 = vunpack.c.l.s4 1934713408
        %v1070 = vunpack.c.0.s8 %v1069
        %v1071 = vlaneseq
        %v1072 = vshrl.u32 %v1071, 7
        %v1073 = vsub.s32 %v1070, %v1072
        %v1074 = vrot.slane %v1066, %v1073
        %v1076 = vunpack.c.l.s4 1934713408
        %v1077 = vunpack.c.0.s8 %v1076
        %v1078 = vlaneseq
        %v1079 = vshrl.u32 %v1078, 7
        %v1080 = vsub.s32 %v1077, %v1079
        %v1081 = vrot.slane %v1067, %v1080
        %v1082 = vcombine.low %v1058, %v1074
        %v1083 = vcombine.high %v1058, %v1074
        %v1084 = vcombine.low %v1065, %v1081
        %v1085 = vcombine.high %v1065, %v1081
        %v1086 = vcombine.low %v867, %v871
        %v1088 = vunpack.c.l.s4 1983009808
        %v1089 = vunpack.c.0.s8 %v1088
        %v1090 = vlaneseq
        %v1091 = vshrl.u32 %v1090, 7
        %v1092 = vsub.s32 %v1089, %v1091
        %v1093 = vrot.slane %v1086, %v1092
        %v1094 = vcombine.low %v869, %v873
        %v1096 = vunpack.c.l.s4 1983009808
        %v1097 = vunpack.c.0.s8 %v1096
        %v1098 = vlaneseq
        %v1099 = vshrl.u32 %v1098, 7
        %v1100 = vsub.s32 %v1097, %v1099
        %v1101 = vrot.slane %v1094, %v1100
        %v1102 = vcombine.low %v875, %v879
        %v1104 = vunpack.c.l.s4 1983009808
        %v1105 = vunpack.c.0.s8 %v1104
        %v1106 = vlaneseq
        %v1107 = vshrl.u32 %v1106, 7
        %v1108 = vsub.s32 %v1105, %v1107
        %v1109 = vrot.slane %v1102, %v1108
        %v1110 = vcombine.low %v877, %v881
        %v1112 = vunpack.c.l.s4 1983009808
        %v1113 = vunpack.c.0.s8 %v1112
        %v1114 = vlaneseq
        %v1115 = vshrl.u32 %v1114, 7
        %v1116 = vsub.s32 %v1113, %v1115
        %v1117 = vrot.slane %v1110, %v1116
        %v1118 = vcombine.low %v1093, %v1101
        %v1119 = vcombine.high %v1093, %v1101
        %v1121 = vunpack.c.l.s4 1934713408
        %v1122 = vunpack.c.0.s8 %v1121
        %v1123 = vlaneseq
        %v1124 = vshrl.u32 %v1123, 7
        %v1125 = vsub.s32 %v1122, %v1124
        %v1126 = vrot.slane %v1118, %v1125
        %v1128 = vunpack.c.l.s4 1934713408
        %v1129 = vunpack.c.0.s8 %v1128
        %v1130 = vlaneseq
        %v1131 = vshrl.u32 %v1130, 7
        %v1132 = vsub.s32 %v1129, %v1131
        %v1133 = vrot.slane %v1119, %v1132
        %v1134 = vcombine.low %v1109, %v1117
        %v1135 = vcombine.high %v1109, %v1117
        %v1137 = vunpack.c.l.s4 1934713408
        %v1138 = vunpack.c.0.s8 %v1137
        %v1139 = vlaneseq
        %v1140 = vshrl.u32 %v1139, 7
        %v1141 = vsub.s32 %v1138, %v1140
        %v1142 = vrot.slane %v1134, %v1141
        %v1144 = vunpack.c.l.s4 1934713408
        %v1145 = vunpack.c.0.s8 %v1144
        %v1146 = vlaneseq
        %v1147 = vshrl.u32 %v1146, 7
        %v1148 = vsub.s32 %v1145, %v1147
        %v1149 = vrot.slane %v1135, %v1148
        %v1150 = vcombine.low %v1126, %v1142
        %v1151 = vcombine.high %v1126, %v1142
        %v1152 = vcombine.low %v1133, %v1149
        %v1153 = vcombine.high %v1133, %v1149
        %v1156 = vpack.i.b16 %v1014, %v946
        %v1158 = vshrl.u32 %v946, 16
        %v1159 = vshrl.u32 %v1014, 16
        %v1160 = vpack.i.b16 %v1159, %v1158
        %v1164 = vpack.i.b16 %v1015, %v947
        %v1166 = vshrl.u32 %v947, 16
        %v1167 = vshrl.u32 %v1015, 16
        %v1168 = vpack.i.b16 %v1167, %v1166
        %v1172 = vpack.i.b16 %v1016, %v948
        %v1174 = vshrl.u32 %v948, 16
        %v1175 = vshrl.u32 %v1016, 16
        %v1176 = vpack.i.b16 %v1175, %v1174
        %v1180 = vpack.i.b16 %v1017, %v949
        %v1182 = vshrl.u32 %v949, 16
        %v1183 = vshrl.u32 %v1017, 16
        %v1184 = vpack.i.b16 %v1183, %v1182
        %v1188 = vpack.i.b16 %v1150, %v1082
        %v1190 = vshrl.u32 %v1082, 16
        %v1191 = vshrl.u32 %v1150, 16
        %v1192 = vpack.i.b16 %v1191, %v1190
        %v1196 = vpack.i.b16 %v1151, %v1083
        %v1198 = vshrl.u32 %v1083, 16
        %v1199 = vshrl.u32 %v1151, 16
        %v1200 = vpack.i.b16 %v1199, %v1198
        %v1204 = vpack.i.b16 %v1152, %v1084
        %v1206 = vshrl.u32 %v1084, 16
        %v1207 = vshrl.u32 %v1152, 16
        %v1208 = vpack.i.b16 %v1207, %v1206
        %v1212 = vpack.i.b16 %v1153, %v1085
        %v1214 = vshrl.u32 %v1085, 16
        %v1215 = vshrl.u32 %v1153, 16
        %v1216 = vpack.i.b16 %v1215, %v1214
        %v1218 = vsel %vm517, %v505, 0.0
        %v1219 = vsel %vm517, %v507, 0.0
        %v1220 = vrot.slane %v505, 1
        %v1221 = vsel %vm517, %v1220, 0.0
        %v1222 = vrot.slane %v507, 1
        %v1223 = vsel %vm517, %v1222, 0.0
        %v1224 = vrot.slane %v505, 2
        %v1225 = vsel %vm517, %v1224, 0.0
        %v1226 = vrot.slane %v507, 2
        %v1227 = vsel %vm517, %v1226, 0.0
        %v1228 = vrot.slane %v505, 3
        %v1229 = vsel %vm517, %v1228, 0.0
        %v1230 = vrot.slane %v507, 3
        %v1231 = vsel %vm517, %v1230, 0.0
        %v1232 = vrot.slane %v505, 4
        %v1233 = vsel %vm517, %v1232, 0.0
        %v1234 = vrot.slane %v507, 4
        %v1235 = vsel %vm517, %v1234, 0.0
        %v1236 = vrot.slane %v505, 5
        %v1237 = vsel %vm517, %v1236, 0.0
        %v1238 = vrot.slane %v507, 5
        %v1239 = vsel %vm517, %v1238, 0.0
        %v1240 = vrot.slane %v505, 6
        %v1241 = vsel %vm517, %v1240, 0.0
        %v1242 = vrot.slane %v507, 6
        %v1243 = vsel %vm517, %v1242, 0.0
        %v1244 = vrot.slane %v505, 7
        %v1245 = vsel %vm517, %v1244, 0.0
        %v1246 = vrot.slane %v507, 7
        %v1247 = vsel %vm517, %v1246, 0.0
        %v1248 = vsel %vm517, %v509, 0.0
        %v1249 = vsel %vm517, %v511, 0.0
        %v1250 = vrot.slane %v509, 1
        %v1251 = vsel %vm517, %v1250, 0.0
        %v1252 = vrot.slane %v511, 1
        %v1253 = vsel %vm517, %v1252, 0.0
        %v1254 = vrot.slane %v509, 2
        %v1255 = vsel %vm517, %v1254, 0.0
        %v1256 = vrot.slane %v511, 2
        %v1257 = vsel %vm517, %v1256, 0.0
        %v1258 = vrot.slane %v509, 3
        %v1259 = vsel %vm517, %v1258, 0.0
        %v1260 = vrot.slane %v511, 3
        %v1261 = vsel %vm517, %v1260, 0.0
        %v1262 = vrot.slane %v509, 4
        %v1263 = vsel %vm517, %v1262, 0.0
        %v1264 = vrot.slane %v511, 4
        %v1265 = vsel %vm517, %v1264, 0.0
        %v1266 = vrot.slane %v509, 5
        %v1267 = vsel %vm517, %v1266, 0.0
        %v1268 = vrot.slane %v511, 5
        %v1269 = vsel %vm517, %v1268, 0.0
        %v1270 = vrot.slane %v509, 6
        %v1271 = vsel %vm517, %v1270, 0.0
        %v1272 = vrot.slane %v511, 6
        %v1273 = vsel %vm517, %v1272, 0.0
        %v1274 = vrot.slane %v509, 7
        %v1275 = vsel %vm517, %v1274, 0.0
        %v1276 = vrot.slane %v511, 7
        %v1277 = vsel %vm517, %v1276, 0.0
        %v1278 = vlaneseq
        %v1279 = vshrl.u32 %v1278, 7
        %v1280 = vsub.s32 0, %v1279
        %v1281 = vrot.slane %v1218, %v1280
        %v1282 = vlaneseq
        %v1283 = vshrl.u32 %v1282, 7
        %v1284 = vsub.s32 0, %v1283
        %v1285 = vrot.slane %v1219, %v1284
        %v1286 = vlaneseq
        %v1287 = vshrl.u32 %v1286, 7
        %v1288 = vsub.s32 0, %v1287
        %v1289 = vrot.slane %v1221, %v1288
        %v1290 = vlaneseq
        %v1291 = vshrl.u32 %v1290, 7
        %v1292 = vsub.s32 0, %v1291
        %v1293 = vrot.slane %v1223, %v1292
        %v1294 = vlaneseq
        %v1295 = vshrl.u32 %v1294, 7
        %v1296 = vsub.s32 0, %v1295
        %v1297 = vrot.slane %v1225, %v1296
        %v1298 = vlaneseq
        %v1299 = vshrl.u32 %v1298, 7
        %v1300 = vsub.s32 0, %v1299
        %v1301 = vrot.slane %v1227, %v1300
        %v1302 = vlaneseq
        %v1303 = vshrl.u32 %v1302, 7
        %v1304 = vsub.s32 0, %v1303
        %v1305 = vrot.slane %v1229, %v1304
        %v1306 = vlaneseq
        %v1307 = vshrl.u32 %v1306, 7
        %v1308 = vsub.s32 0, %v1307
        %v1309 = vrot.slane %v1231, %v1308
        %v1310 = vlaneseq
        %v1311 = vshrl.u32 %v1310, 7
        %v1312 = vsub.s32 0, %v1311
        %v1313 = vrot.slane %v1233, %v1312
        %v1314 = vlaneseq
        %v1315 = vshrl.u32 %v1314, 7
        %v1316 = vsub.s32 0, %v1315
        %v1317 = vrot.slane %v1235, %v1316
        %v1318 = vlaneseq
        %v1319 = vshrl.u32 %v1318, 7
        %v1320 = vsub.s32 0, %v1319
        %v1321 = vrot.slane %v1237, %v1320
        %v1322 = vlaneseq
        %v1323 = vshrl.u32 %v1322, 7
        %v1324 = vsub.s32 0, %v1323
        %v1325 = vrot.slane %v1239, %v1324
        %v1326 = vlaneseq
        %v1327 = vshrl.u32 %v1326, 7
        %v1328 = vsub.s32 0, %v1327
        %v1329 = vrot.slane %v1241, %v1328
        %v1330 = vlaneseq
        %v1331 = vshrl.u32 %v1330, 7
        %v1332 = vsub.s32 0, %v1331
        %v1333 = vrot.slane %v1243, %v1332
        %v1334 = vlaneseq
        %v1335 = vshrl.u32 %v1334, 7
        %v1336 = vsub.s32 0, %v1335
        %v1337 = vrot.slane %v1245, %v1336
        %v1338 = vlaneseq
        %v1339 = vshrl.u32 %v1338, 7
        %v1340 = vsub.s32 0, %v1339
        %v1341 = vrot.slane %v1247, %v1340
        %v1342 = vlaneseq
        %v1343 = vshrl.u32 %v1342, 7
        %v1344 = vsub.s32 0, %v1343
        %v1345 = vrot.slane %v1248, %v1344
        %v1346 = vlaneseq
        %v1347 = vshrl.u32 %v1346, 7
        %v1348 = vsub.s32 0, %v1347
        %v1349 = vrot.slane %v1249, %v1348
        %v1350 = vlaneseq
        %v1351 = vshrl.u32 %v1350, 7
        %v1352 = vsub.s32 0, %v1351
        %v1353 = vrot.slane %v1251, %v1352
        %v1354 = vlaneseq
        %v1355 = vshrl.u32 %v1354, 7
        %v1356 = vsub.s32 0, %v1355
        %v1357 = vrot.slane %v1253, %v1356
        %v1358 = vlaneseq
        %v1359 = vshrl.u32 %v1358, 7
        %v1360 = vsub.s32 0, %v1359
        %v1361 = vrot.slane %v1255, %v1360
        %v1362 = vlaneseq
        %v1363 = vshrl.u32 %v1362, 7
        %v1364 = vsub.s32 0, %v1363
        %v1365 = vrot.slane %v1257, %v1364
        %v1366 = vlaneseq
        %v1367 = vshrl.u32 %v1366, 7
        %v1368 = vsub.s32 0, %v1367
        %v1369 = vrot.slane %v1259, %v1368
        %v1370 = vlaneseq
        %v1371 = vshrl.u32 %v1370, 7
        %v1372 = vsub.s32 0, %v1371
        %v1373 = vrot.slane %v1261, %v1372
        %v1374 = vlaneseq
        %v1375 = vshrl.u32 %v1374, 7
        %v1376 = vsub.s32 0, %v1375
        %v1377 = vrot.slane %v1263, %v1376
        %v1378 = vlaneseq
        %v1379 = vshrl.u32 %v1378, 7
        %v1380 = vsub.s32 0, %v1379
        %v1381 = vrot.slane %v1265, %v1380
        %v1382 = vlaneseq
        %v1383 = vshrl.u32 %v1382, 7
        %v1384 = vsub.s32 0, %v1383
        %v1385 = vrot.slane %v1267, %v1384
        %v1386 = vlaneseq
        %v1387 = vshrl.u32 %v1386, 7
        %v1388 = vsub.s32 0, %v1387
        %v1389 = vrot.slane %v1269, %v1388
        %v1390 = vlaneseq
        %v1391 = vshrl.u32 %v1390, 7
        %v1392 = vsub.s32 0, %v1391
        %v1393 = vrot.slane %v1271, %v1392
        %v1394 = vlaneseq
        %v1395 = vshrl.u32 %v1394, 7
        %v1396 = vsub.s32 0, %v1395
        %v1397 = vrot.slane %v1273, %v1396
        %v1398 = vlaneseq
        %v1399 = vshrl.u32 %v1398, 7
        %v1400 = vsub.s32 0, %v1399
        %v1401 = vrot.slane %v1275, %v1400
        %v1402 = vlaneseq
        %v1403 = vshrl.u32 %v1402, 7
        %v1404 = vsub.s32 0, %v1403
        %v1405 = vrot.slane %v1277, %v1404
        %v1406 = vmul.f32 %v1281, %v584
        %v1407 = vmul.f32 %v1285, %v584
        %v1408 = vmul.f32 %v1289, %v591
        %v1409 = vmul.f32 %v1293, %v591
        %v1410 = vmul.f32 %v1297, %v598
        %v1411 = vmul.f32 %v1301, %v598
        %v1412 = vmul.f32 %v1305, %v605
        %v1413 = vmul.f32 %v1309, %v605
        %v1414 = vmul.f32 %v1313, %v612
        %v1415 = vmul.f32 %v1317, %v612
        %v1416 = vmul.f32 %v1321, %v619
        %v1417 = vmul.f32 %v1325, %v619
        %v1418 = vmul.f32 %v1329, %v626
        %v1419 = vmul.f32 %v1333, %v626
        %v1420 = vmul.f32 %v1337, %v633
        %v1421 = vmul.f32 %v1341, %v633
        %v1422 = vmul.f32 %v1345, %v640
        %v1423 = vmul.f32 %v1349, %v640
        %v1424 = vmul.f32 %v1353, %v647
        %v1425 = vmul.f32 %v1357, %v647
        %v1426 = vmul.f32 %v1361, %v654
        %v1427 = vmul.f32 %v1365, %v654
        %v1428 = vmul.f32 %v1369, %v661
        %v1429 = vmul.f32 %v1373, %v661
        %v1430 = vmul.f32 %v1377, %v668
        %v1431 = vmul.f32 %v1381, %v668
        %v1432 = vmul.f32 %v1385, %v675
        %v1433 = vmul.f32 %v1389, %v675
        %v1434 = vmul.f32 %v1393, %v682
        %v1435 = vmul.f32 %v1397, %v682
        %v1436 = vmul.f32 %v1401, %v689
        %v1437 = vmul.f32 %v1405, %v689
        %v1438 = vpack.c.bf16 %v1406, %v1406
        %v1439 = vpack.c.bf16 %v1407, %v1407
        %v1440 = vpack.c.bf16 %v1408, %v1408
        %v1441 = vpack.c.bf16 %v1409, %v1409
        %v1442 = vpack.c.bf16 %v1410, %v1410
        %v1443 = vpack.c.bf16 %v1411, %v1411
        %v1444 = vpack.c.bf16 %v1412, %v1412
        %v1445 = vpack.c.bf16 %v1413, %v1413
        %v1446 = vpack.c.bf16 %v1414, %v1414
        %v1447 = vpack.c.bf16 %v1415, %v1415
        %v1448 = vpack.c.bf16 %v1416, %v1416
        %v1449 = vpack.c.bf16 %v1417, %v1417
        %v1450 = vpack.c.bf16 %v1418, %v1418
        %v1451 = vpack.c.bf16 %v1419, %v1419
        %v1452 = vpack.c.bf16 %v1420, %v1420
        %v1453 = vpack.c.bf16 %v1421, %v1421
        %v1454 = vpack.c.bf16 %v1422, %v1422
        %v1455 = vpack.c.bf16 %v1423, %v1423
        %v1456 = vpack.c.bf16 %v1424, %v1424
        %v1457 = vpack.c.bf16 %v1425, %v1425
        %v1458 = vpack.c.bf16 %v1426, %v1426
        %v1459 = vpack.c.bf16 %v1427, %v1427
        %v1460 = vpack.c.bf16 %v1428, %v1428
        %v1461 = vpack.c.bf16 %v1429, %v1429
        %v1462 = vpack.c.bf16 %v1430, %v1430
        %v1463 = vpack.c.bf16 %v1431, %v1431
        %v1464 = vpack.c.bf16 %v1432, %v1432
        %v1465 = vpack.c.bf16 %v1433, %v1433
        %v1466 = vpack.c.bf16 %v1434, %v1434
        %v1467 = vpack.c.bf16 %v1435, %v1435
        %v1468 = vpack.c.bf16 %v1436, %v1436
        %v1469 = vpack.c.bf16 %v1437, %v1437
        %v1470 = vcombine.low %v1438, %v1442
        %v1472 = vunpack.c.l.s4 1983009808
        %v1473 = vunpack.c.0.s8 %v1472
        %v1474 = vlaneseq
        %v1475 = vshrl.u32 %v1474, 7
        %v1476 = vsub.s32 %v1473, %v1475
        %v1477 = vrot.slane %v1470, %v1476
        %v1478 = vcombine.low %v1440, %v1444
        %v1480 = vunpack.c.l.s4 1983009808
        %v1481 = vunpack.c.0.s8 %v1480
        %v1482 = vlaneseq
        %v1483 = vshrl.u32 %v1482, 7
        %v1484 = vsub.s32 %v1481, %v1483
        %v1485 = vrot.slane %v1478, %v1484
        %v1486 = vcombine.low %v1446, %v1450
        %v1488 = vunpack.c.l.s4 1983009808
        %v1489 = vunpack.c.0.s8 %v1488
        %v1490 = vlaneseq
        %v1491 = vshrl.u32 %v1490, 7
        %v1492 = vsub.s32 %v1489, %v1491
        %v1493 = vrot.slane %v1486, %v1492
        %v1494 = vcombine.low %v1448, %v1452
        %v1496 = vunpack.c.l.s4 1983009808
        %v1497 = vunpack.c.0.s8 %v1496
        %v1498 = vlaneseq
        %v1499 = vshrl.u32 %v1498, 7
        %v1500 = vsub.s32 %v1497, %v1499
        %v1501 = vrot.slane %v1494, %v1500
        %v1502 = vcombine.low %v1477, %v1485
        %v1503 = vcombine.high %v1477, %v1485
        %v1505 = vunpack.c.l.s4 1934713408
        %v1506 = vunpack.c.0.s8 %v1505
        %v1507 = vlaneseq
        %v1508 = vshrl.u32 %v1507, 7
        %v1509 = vsub.s32 %v1506, %v1508
        %v1510 = vrot.slane %v1502, %v1509
        %v1512 = vunpack.c.l.s4 1934713408
        %v1513 = vunpack.c.0.s8 %v1512
        %v1514 = vlaneseq
        %v1515 = vshrl.u32 %v1514, 7
        %v1516 = vsub.s32 %v1513, %v1515
        %v1517 = vrot.slane %v1503, %v1516
        %v1518 = vcombine.low %v1493, %v1501
        %v1519 = vcombine.high %v1493, %v1501
        %v1521 = vunpack.c.l.s4 1934713408
        %v1522 = vunpack.c.0.s8 %v1521
        %v1523 = vlaneseq
        %v1524 = vshrl.u32 %v1523, 7
        %v1525 = vsub.s32 %v1522, %v1524
        %v1526 = vrot.slane %v1518, %v1525
        %v1528 = vunpack.c.l.s4 1934713408
        %v1529 = vunpack.c.0.s8 %v1528
        %v1530 = vlaneseq
        %v1531 = vshrl.u32 %v1530, 7
        %v1532 = vsub.s32 %v1529, %v1531
        %v1533 = vrot.slane %v1519, %v1532
        %v1534 = vcombine.low %v1510, %v1526
        %v1535 = vcombine.high %v1510, %v1526
        %v1536 = vcombine.low %v1517, %v1533
        %v1537 = vcombine.high %v1517, %v1533
        %v1538 = vcombine.low %v1439, %v1443
        %v1540 = vunpack.c.l.s4 1983009808
        %v1541 = vunpack.c.0.s8 %v1540
        %v1542 = vlaneseq
        %v1543 = vshrl.u32 %v1542, 7
        %v1544 = vsub.s32 %v1541, %v1543
        %v1545 = vrot.slane %v1538, %v1544
        %v1546 = vcombine.low %v1441, %v1445
        %v1548 = vunpack.c.l.s4 1983009808
        %v1549 = vunpack.c.0.s8 %v1548
        %v1550 = vlaneseq
        %v1551 = vshrl.u32 %v1550, 7
        %v1552 = vsub.s32 %v1549, %v1551
        %v1553 = vrot.slane %v1546, %v1552
        %v1554 = vcombine.low %v1447, %v1451
        %v1556 = vunpack.c.l.s4 1983009808
        %v1557 = vunpack.c.0.s8 %v1556
        %v1558 = vlaneseq
        %v1559 = vshrl.u32 %v1558, 7
        %v1560 = vsub.s32 %v1557, %v1559
        %v1561 = vrot.slane %v1554, %v1560
        %v1562 = vcombine.low %v1449, %v1453
        %v1564 = vunpack.c.l.s4 1983009808
        %v1565 = vunpack.c.0.s8 %v1564
        %v1566 = vlaneseq
        %v1567 = vshrl.u32 %v1566, 7
        %v1568 = vsub.s32 %v1565, %v1567
        %v1569 = vrot.slane %v1562, %v1568
        %v1570 = vcombine.low %v1545, %v1553
        %v1571 = vcombine.high %v1545, %v1553
        %v1573 = vunpack.c.l.s4 1934713408
        %v1574 = vunpack.c.0.s8 %v1573
        %v1575 = vlaneseq
        %v1576 = vshrl.u32 %v1575, 7
        %v1577 = vsub.s32 %v1574, %v1576
        %v1578 = vrot.slane %v1570, %v1577
        %v1580 = vunpack.c.l.s4 1934713408
        %v1581 = vunpack.c.0.s8 %v1580
        %v1582 = vlaneseq
        %v1583 = vshrl.u32 %v1582, 7
        %v1584 = vsub.s32 %v1581, %v1583
        %v1585 = vrot.slane %v1571, %v1584
        %v1586 = vcombine.low %v1561, %v1569
        %v1587 = vcombine.high %v1561, %v1569
        %v1589 = vunpack.c.l.s4 1934713408
        %v1590 = vunpack.c.0.s8 %v1589
        %v1591 = vlaneseq
        %v1592 = vshrl.u32 %v1591, 7
        %v1593 = vsub.s32 %v1590, %v1592
        %v1594 = vrot.slane %v1586, %v1593
        %v1596 = vunpack.c.l.s4 1934713408
        %v1597 = vunpack.c.0.s8 %v1596
        %v1598 = vlaneseq
        %v1599 = vshrl.u32 %v1598, 7
        %v1600 = vsub.s32 %v1597, %v1599
        %v1601 = vrot.slane %v1587, %v1600
        %v1602 = vcombine.low %v1578, %v1594
        %v1603 = vcombine.high %v1578, %v1594
        %v1604 = vcombine.low %v1585, %v1601
        %v1605 = vcombine.high %v1585, %v1601
        %v1606 = vcombine.low %v1454, %v1458
        %v1608 = vunpack.c.l.s4 1983009808
        %v1609 = vunpack.c.0.s8 %v1608
        %v1610 = vlaneseq
        %v1611 = vshrl.u32 %v1610, 7
        %v1612 = vsub.s32 %v1609, %v1611
        %v1613 = vrot.slane %v1606, %v1612
        %v1614 = vcombine.low %v1456, %v1460
        %v1616 = vunpack.c.l.s4 1983009808
        %v1617 = vunpack.c.0.s8 %v1616
        %v1618 = vlaneseq
        %v1619 = vshrl.u32 %v1618, 7
        %v1620 = vsub.s32 %v1617, %v1619
        %v1621 = vrot.slane %v1614, %v1620
        %v1622 = vcombine.low %v1462, %v1466
        %v1624 = vunpack.c.l.s4 1983009808
        %v1625 = vunpack.c.0.s8 %v1624
        %v1626 = vlaneseq
        %v1627 = vshrl.u32 %v1626, 7
        %v1628 = vsub.s32 %v1625, %v1627
        %v1629 = vrot.slane %v1622, %v1628
        %v1630 = vcombine.low %v1464, %v1468
        %v1632 = vunpack.c.l.s4 1983009808
        %v1633 = vunpack.c.0.s8 %v1632
        %v1634 = vlaneseq
        %v1635 = vshrl.u32 %v1634, 7
        %v1636 = vsub.s32 %v1633, %v1635
        %v1637 = vrot.slane %v1630, %v1636
        %v1638 = vcombine.low %v1613, %v1621
        %v1639 = vcombine.high %v1613, %v1621
        %v1641 = vunpack.c.l.s4 1934713408
        %v1642 = vunpack.c.0.s8 %v1641
        %v1643 = vlaneseq
        %v1644 = vshrl.u32 %v1643, 7
        %v1645 = vsub.s32 %v1642, %v1644
        %v1646 = vrot.slane %v1638, %v1645
        %v1648 = vunpack.c.l.s4 1934713408
        %v1649 = vunpack.c.0.s8 %v1648
        %v1650 = vlaneseq
        %v1651 = vshrl.u32 %v1650, 7
        %v1652 = vsub.s32 %v1649, %v1651
        %v1653 = vrot.slane %v1639, %v1652
        %v1654 = vcombine.low %v1629, %v1637
        %v1655 = vcombine.high %v1629, %v1637
        %v1657 = vunpack.c.l.s4 1934713408
        %v1658 = vunpack.c.0.s8 %v1657
        %v1659 = vlaneseq
        %v1660 = vshrl.u32 %v1659, 7
        %v1661 = vsub.s32 %v1658, %v1660
        %v1662 = vrot.slane %v1654, %v1661
        %v1664 = vunpack.c.l.s4 1934713408
        %v1665 = vunpack.c.0.s8 %v1664
        %v1666 = vlaneseq
        %v1667 = vshrl.u32 %v1666, 7
        %v1668 = vsub.s32 %v1665, %v1667
        %v1669 = vrot.slane %v1655, %v1668
        %v1670 = vcombine.low %v1646, %v1662
        %v1671 = vcombine.high %v1646, %v1662
        %v1672 = vcombine.low %v1653, %v1669
        %v1673 = vcombine.high %v1653, %v1669
        %v1674 = vcombine.low %v1455, %v1459
        %v1676 = vunpack.c.l.s4 1983009808
        %v1677 = vunpack.c.0.s8 %v1676
        %v1678 = vlaneseq
        %v1679 = vshrl.u32 %v1678, 7
        %v1680 = vsub.s32 %v1677, %v1679
        %v1681 = vrot.slane %v1674, %v1680
        %v1682 = vcombine.low %v1457, %v1461
        %v1684 = vunpack.c.l.s4 1983009808
        %v1685 = vunpack.c.0.s8 %v1684
        %v1686 = vlaneseq
        %v1687 = vshrl.u32 %v1686, 7
        %v1688 = vsub.s32 %v1685, %v1687
        %v1689 = vrot.slane %v1682, %v1688
        %v1690 = vcombine.low %v1463, %v1467
        %v1692 = vunpack.c.l.s4 1983009808
        %v1693 = vunpack.c.0.s8 %v1692
        %v1694 = vlaneseq
        %v1695 = vshrl.u32 %v1694, 7
        %v1696 = vsub.s32 %v1693, %v1695
        %v1697 = vrot.slane %v1690, %v1696
        %v1698 = vcombine.low %v1465, %v1469
        %v1700 = vunpack.c.l.s4 1983009808
        %v1701 = vunpack.c.0.s8 %v1700
        %v1702 = vlaneseq
        %v1703 = vshrl.u32 %v1702, 7
        %v1704 = vsub.s32 %v1701, %v1703
        %v1705 = vrot.slane %v1698, %v1704
        %v1706 = vcombine.low %v1681, %v1689
        %v1707 = vcombine.high %v1681, %v1689
        %v1709 = vunpack.c.l.s4 1934713408
        %v1710 = vunpack.c.0.s8 %v1709
        %v1711 = vlaneseq
        %v1712 = vshrl.u32 %v1711, 7
        %v1713 = vsub.s32 %v1710, %v1712
        %v1714 = vrot.slane %v1706, %v1713
        %v1716 = vunpack.c.l.s4 1934713408
        %v1717 = vunpack.c.0.s8 %v1716
        %v1718 = vlaneseq
        %v1719 = vshrl.u32 %v1718, 7
        %v1720 = vsub.s32 %v1717, %v1719
        %v1721 = vrot.slane %v1707, %v1720
        %v1722 = vcombine.low %v1697, %v1705
        %v1723 = vcombine.high %v1697, %v1705
        %v1725 = vunpack.c.l.s4 1934713408
        %v1726 = vunpack.c.0.s8 %v1725
        %v1727 = vlaneseq
        %v1728 = vshrl.u32 %v1727, 7
        %v1729 = vsub.s32 %v1726, %v1728
        %v1730 = vrot.slane %v1722, %v1729
        %v1732 = vunpack.c.l.s4 1934713408
        %v1733 = vunpack.c.0.s8 %v1732
        %v1734 = vlaneseq
        %v1735 = vshrl.u32 %v1734, 7
        %v1736 = vsub.s32 %v1733, %v1735
        %v1737 = vrot.slane %v1723, %v1736
        %v1738 = vcombine.low %v1714, %v1730
        %v1739 = vcombine.high %v1714, %v1730
        %v1740 = vcombine.low %v1721, %v1737
        %v1741 = vcombine.high %v1721, %v1737
        %v1744 = vpack.i.b16 %v1602, %v1534
        %v1746 = vshrl.u32 %v1534, 16
        %v1747 = vshrl.u32 %v1602, 16
        %v1748 = vpack.i.b16 %v1747, %v1746
        %v1752 = vpack.i.b16 %v1603, %v1535
        %v1754 = vshrl.u32 %v1535, 16
        %v1755 = vshrl.u32 %v1603, 16
        %v1756 = vpack.i.b16 %v1755, %v1754
        %v1760 = vpack.i.b16 %v1604, %v1536
        %v1762 = vshrl.u32 %v1536, 16
        %v1763 = vshrl.u32 %v1604, 16
        %v1764 = vpack.i.b16 %v1763, %v1762
        %v1768 = vpack.i.b16 %v1605, %v1537
        %v1770 = vshrl.u32 %v1537, 16
        %v1771 = vshrl.u32 %v1605, 16
        %v1772 = vpack.i.b16 %v1771, %v1770
        %v1776 = vpack.i.b16 %v1738, %v1670
        %v1778 = vshrl.u32 %v1670, 16
        %v1779 = vshrl.u32 %v1738, 16
        %v1780 = vpack.i.b16 %v1779, %v1778
        %v1784 = vpack.i.b16 %v1739, %v1671
        %v1786 = vshrl.u32 %v1671, 16
        %v1787 = vshrl.u32 %v1739, 16
        %v1788 = vpack.i.b16 %v1787, %v1786
        %v1792 = vpack.i.b16 %v1740, %v1672
        %v1794 = vshrl.u32 %v1672, 16
        %v1795 = vshrl.u32 %v1740, 16
        %v1796 = vpack.i.b16 %v1795, %v1794
        %v1800 = vpack.i.b16 %v1741, %v1673
        %v1802 = vshrl.u32 %v1673, 16
        %v1803 = vshrl.u32 %v1741, 16
        %v1804 = vpack.i.b16 %v1803, %v1802
        %v1806 = vld [vmem:[#allocation5] sm:$0xf]
        %v1807 = vld [vmem:[#allocation5 + $0x4] sm:$0xf]
        %v1808 = vld [vmem:[#allocation5 + $0x8] sm:$0xf]
        %v1809 = vld [vmem:[#allocation5 + $0xc] sm:$0xf]
        %v1810 = vld [vmem:[#allocation5 + $0x10] sm:$0xf]
        %v1811 = vld [vmem:[#allocation5 + $0x14] sm:$0xf]
        %v1812 = vld [vmem:[#allocation5 + $0x18] sm:$0xf]
        %v1813 = vld [vmem:[#allocation5 + $0x1c] sm:$0xf]
        %v1814 = vld [vmem:[#allocation5 + $0x20] sm:$0xf]
        %v1815 = vld [vmem:[#allocation5 + $0x24] sm:$0xf]
        %v1816 = vld [vmem:[#allocation5 + $0x28] sm:$0xf]
        %v1817 = vld [vmem:[#allocation5 + $0x2c] sm:$0xf]
        %v1818 = vld [vmem:[#allocation5 + $0x30] sm:$0xf]
        %v1819 = vld [vmem:[#allocation5 + $0x34] sm:$0xf]
        %v1820 = vld [vmem:[#allocation5 + $0x38] sm:$0xf]
        %v1821 = vld [vmem:[#allocation5 + $0x3c] sm:$0xf]
        %v1822 = vld [vmem:[#allocation5 + $0x40] sm:$0xf]
        %v1823 = vld [vmem:[#allocation5 + $0x44] sm:$0xf]
        %v1824 = vld [vmem:[#allocation5 + $0x48] sm:$0xf]
        %v1825 = vld [vmem:[#allocation5 + $0x4c] sm:$0xf]
        %v1826 = vld [vmem:[#allocation5 + $0x50] sm:$0xf]
        %v1827 = vld [vmem:[#allocation5 + $0x54] sm:$0xf]
        %v1828 = vld [vmem:[#allocation5 + $0x58] sm:$0xf]
        %v1829 = vld [vmem:[#allocation5 + $0x5c] sm:$0xf]
        %v1830 = vld [vmem:[#allocation5 + $0x60] sm:$0xf]
        %v1831 = vld [vmem:[#allocation5 + $0x64] sm:$0xf]
        %v1832 = vld [vmem:[#allocation5 + $0x68] sm:$0xf]
        %v1833 = vld [vmem:[#allocation5 + $0x6c] sm:$0xf]
        %v1834 = vld [vmem:[#allocation5 + $0x70] sm:$0xf]
        %v1835 = vld [vmem:[#allocation5 + $0x74] sm:$0xf]
        %v1836 = vld [vmem:[#allocation5 + $0x78] sm:$0xf]
        %v1837 = vld [vmem:[#allocation5 + $0x7c] sm:$0xf]
        %v1838 = vld [vmem:[#allocation5 + $0x80] sm:$0xf]
        %v1839 = vld [vmem:[#allocation5 + $0x84] sm:$0xf]
        %v1840 = vld [vmem:[#allocation5 + $0x88] sm:$0xf]
        %v1841 = vld [vmem:[#allocation5 + $0x8c] sm:$0xf]
        %v1842 = vld [vmem:[#allocation5 + $0x90] sm:$0xf]
        %v1843 = vld [vmem:[#allocation5 + $0x94] sm:$0xf]
        %v1844 = vld [vmem:[#allocation5 + $0x98] sm:$0xf]
        %v1845 = vld [vmem:[#allocation5 + $0x9c] sm:$0xf]
        %v1846 = vld [vmem:[#allocation5 + $0xa0] sm:$0xf]
        %v1847 = vld [vmem:[#allocation5 + $0xa4] sm:$0xf]
        %v1848 = vld [vmem:[#allocation5 + $0xa8] sm:$0xf]
        %v1849 = vld [vmem:[#allocation5 + $0xac] sm:$0xf]
        %v1850 = vld [vmem:[#allocation5 + $0xb0] sm:$0xf]
        %v1851 = vld [vmem:[#allocation5 + $0xb4] sm:$0xf]
        %v1852 = vld [vmem:[#allocation5 + $0xb8] sm:$0xf]
        %v1853 = vld [vmem:[#allocation5 + $0xbc] sm:$0xf]
        %v1854 = vld [vmem:[#allocation5 + $0xc0] sm:$0xf]
        %v1855 = vld [vmem:[#allocation5 + $0xc4] sm:$0xf]
        %v1856 = vld [vmem:[#allocation5 + $0xc8] sm:$0xf]
        %v1857 = vld [vmem:[#allocation5 + $0xcc] sm:$0xf]
        %v1858 = vld [vmem:[#allocation5 + $0xd0] sm:$0xf]
        %v1859 = vld [vmem:[#allocation5 + $0xd4] sm:$0xf]
        %v1860 = vld [vmem:[#allocation5 + $0xd8] sm:$0xf]
        %v1861 = vld [vmem:[#allocation5 + $0xdc] sm:$0xf]
        %v1862 = vld [vmem:[#allocation5 + $0xe0] sm:$0xf]
        %v1863 = vld [vmem:[#allocation5 + $0xe4] sm:$0xf]
        %v1864 = vld [vmem:[#allocation5 + $0xe8] sm:$0xf]
        %v1865 = vld [vmem:[#allocation5 + $0xec] sm:$0xf]
        %v1866 = vld [vmem:[#allocation5 + $0xf0] sm:$0xf]
        %v1867 = vld [vmem:[#allocation5 + $0xf4] sm:$0xf]
        %v1868 = vld [vmem:[#allocation5 + $0xf8] sm:$0xf]
        %v1869 = vld [vmem:[#allocation5 + $0xfc] sm:$0xf]
        %v1870 = vld [vmem:[#allocation5 + $0x100] sm:$0xf]
        %v1871 = vld [vmem:[#allocation5 + $0x104] sm:$0xf]
        %v1872 = vld [vmem:[#allocation5 + $0x108] sm:$0xf]
        %v1873 = vld [vmem:[#allocation5 + $0x10c] sm:$0xf]
        %v1874 = vld [vmem:[#allocation5 + $0x110] sm:$0xf]
        %v1875 = vld [vmem:[#allocation5 + $0x114] sm:$0xf]
        %v1876 = vld [vmem:[#allocation5 + $0x118] sm:$0xf]
        %v1877 = vld [vmem:[#allocation5 + $0x11c] sm:$0xf]
        %v1878 = vld [vmem:[#allocation5 + $0x120] sm:$0xf]
        %v1879 = vld [vmem:[#allocation5 + $0x124] sm:$0xf]
        %v1880 = vld [vmem:[#allocation5 + $0x128] sm:$0xf]
        %v1881 = vld [vmem:[#allocation5 + $0x12c] sm:$0xf]
        %v1882 = vld [vmem:[#allocation5 + $0x130] sm:$0xf]
        %v1883 = vld [vmem:[#allocation5 + $0x134] sm:$0xf]
        %v1884 = vld [vmem:[#allocation5 + $0x138] sm:$0xf]
        %v1885 = vld [vmem:[#allocation5 + $0x13c] sm:$0xf]
        %v1886 = vld [vmem:[#allocation5 + $0x140] sm:$0xf]
        %v1887 = vld [vmem:[#allocation5 + $0x144] sm:$0xf]
        %v1888 = vld [vmem:[#allocation5 + $0x148] sm:$0xf]
        %v1889 = vld [vmem:[#allocation5 + $0x14c] sm:$0xf]
        %v1890 = vld [vmem:[#allocation5 + $0x150] sm:$0xf]
        %v1891 = vld [vmem:[#allocation5 + $0x154] sm:$0xf]
        %v1892 = vld [vmem:[#allocation5 + $0x158] sm:$0xf]
        %v1893 = vld [vmem:[#allocation5 + $0x15c] sm:$0xf]
        %v1894 = vld [vmem:[#allocation5 + $0x160] sm:$0xf]
        %v1895 = vld [vmem:[#allocation5 + $0x164] sm:$0xf]
        %v1896 = vld [vmem:[#allocation5 + $0x168] sm:$0xf]
        %v1897 = vld [vmem:[#allocation5 + $0x16c] sm:$0xf]
        %v1898 = vld [vmem:[#allocation5 + $0x170] sm:$0xf]
        %v1899 = vld [vmem:[#allocation5 + $0x174] sm:$0xf]
        %v1900 = vld [vmem:[#allocation5 + $0x178] sm:$0xf]
        %v1901 = vld [vmem:[#allocation5 + $0x17c] sm:$0xf]
        %v1902 = vld [vmem:[#allocation5 + $0x180] sm:$0xf]
        %v1903 = vld [vmem:[#allocation5 + $0x184] sm:$0xf]
        %v1904 = vld [vmem:[#allocation5 + $0x188] sm:$0xf]
        %v1905 = vld [vmem:[#allocation5 + $0x18c] sm:$0xf]
        %v1906 = vld [vmem:[#allocation5 + $0x190] sm:$0xf]
        %v1907 = vld [vmem:[#allocation5 + $0x194] sm:$0xf]
        %v1908 = vld [vmem:[#allocation5 + $0x198] sm:$0xf]
        %v1909 = vld [vmem:[#allocation5 + $0x19c] sm:$0xf]
        %v1910 = vld [vmem:[#allocation5 + $0x1a0] sm:$0xf]
        %v1911 = vld [vmem:[#allocation5 + $0x1a4] sm:$0xf]
        %v1912 = vld [vmem:[#allocation5 + $0x1a8] sm:$0xf]
        %v1913 = vld [vmem:[#allocation5 + $0x1ac] sm:$0xf]
        %v1914 = vld [vmem:[#allocation5 + $0x1b0] sm:$0xf]
        %v1915 = vld [vmem:[#allocation5 + $0x1b4] sm:$0xf]
        %v1916 = vld [vmem:[#allocation5 + $0x1b8] sm:$0xf]
        %v1917 = vld [vmem:[#allocation5 + $0x1bc] sm:$0xf]
        %v1918 = vld [vmem:[#allocation5 + $0x1c0] sm:$0xf]
        %v1919 = vld [vmem:[#allocation5 + $0x1c4] sm:$0xf]
        %v1920 = vld [vmem:[#allocation5 + $0x1c8] sm:$0xf]
        %v1921 = vld [vmem:[#allocation5 + $0x1cc] sm:$0xf]
        %v1922 = vld [vmem:[#allocation5 + $0x1d0] sm:$0xf]
        %v1923 = vld [vmem:[#allocation5 + $0x1d4] sm:$0xf]
        %v1924 = vld [vmem:[#allocation5 + $0x1d8] sm:$0xf]
        %v1925 = vld [vmem:[#allocation5 + $0x1dc] sm:$0xf]
        %v1926 = vld [vmem:[#allocation5 + $0x1e0] sm:$0xf]
        %v1927 = vld [vmem:[#allocation5 + $0x1e4] sm:$0xf]
        %v1928 = vld [vmem:[#allocation5 + $0x1e8] sm:$0xf]
        %v1929 = vld [vmem:[#allocation5 + $0x1ec] sm:$0xf]
        %v1930 = vld [vmem:[#allocation5 + $0x1f0] sm:$0xf]
        %v1931 = vld [vmem:[#allocation5 + $0x1f4] sm:$0xf]
        %v1932 = vld [vmem:[#allocation5 + $0x1f8] sm:$0xf]
        %v1933 = vld [vmem:[#allocation5 + $0x1fc] sm:$0xf]
        %v1934 = vld [vmem:[#allocation5 + $0x200] sm:$0xf]
        %v1935 = vld [vmem:[#allocation5 + $0x204] sm:$0xf]
        %v1936 = vld [vmem:[#allocation5 + $0x208] sm:$0xf]
        %v1937 = vld [vmem:[#allocation5 + $0x20c] sm:$0xf]
        %v1938 = vld [vmem:[#allocation5 + $0x210] sm:$0xf]
        %v1939 = vld [vmem:[#allocation5 + $0x214] sm:$0xf]
        %v1940 = vld [vmem:[#allocation5 + $0x218] sm:$0xf]
        %v1941 = vld [vmem:[#allocation5 + $0x21c] sm:$0xf]
        %v1942 = vld [vmem:[#allocation5 + $0x220] sm:$0xf]
        %v1943 = vld [vmem:[#allocation5 + $0x224] sm:$0xf]
        %v1944 = vld [vmem:[#allocation5 + $0x228] sm:$0xf]
        %v1945 = vld [vmem:[#allocation5 + $0x22c] sm:$0xf]
        %v1946 = vld [vmem:[#allocation5 + $0x230] sm:$0xf]
        %v1947 = vld [vmem:[#allocation5 + $0x234] sm:$0xf]
        %v1948 = vld [vmem:[#allocation5 + $0x238] sm:$0xf]
        %v1949 = vld [vmem:[#allocation5 + $0x23c] sm:$0xf]
        %v1950 = vld [vmem:[#allocation5 + $0x240] sm:$0xf]
        %v1951 = vld [vmem:[#allocation5 + $0x244] sm:$0xf]
        %v1952 = vld [vmem:[#allocation5 + $0x248] sm:$0xf]
        %v1953 = vld [vmem:[#allocation5 + $0x24c] sm:$0xf]
        %v1954 = vld [vmem:[#allocation5 + $0x250] sm:$0xf]
        %v1955 = vld [vmem:[#allocation5 + $0x254] sm:$0xf]
        %v1956 = vld [vmem:[#allocation5 + $0x258] sm:$0xf]
        %v1957 = vld [vmem:[#allocation5 + $0x25c] sm:$0xf]
        %v1958 = vld [vmem:[#allocation5 + $0x260] sm:$0xf]
        %v1959 = vld [vmem:[#allocation5 + $0x264] sm:$0xf]
        %v1960 = vld [vmem:[#allocation5 + $0x268] sm:$0xf]
        %v1961 = vld [vmem:[#allocation5 + $0x26c] sm:$0xf]
        %v1962 = vld [vmem:[#allocation5 + $0x270] sm:$0xf]
        %v1963 = vld [vmem:[#allocation5 + $0x274] sm:$0xf]
        %v1964 = vld [vmem:[#allocation5 + $0x278] sm:$0xf]
        %v1965 = vld [vmem:[#allocation5 + $0x27c] sm:$0xf]
        %v1966 = vld [vmem:[#allocation5 + $0x280] sm:$0xf]
        %v1967 = vld [vmem:[#allocation5 + $0x284] sm:$0xf]
        %v1968 = vld [vmem:[#allocation5 + $0x288] sm:$0xf]
        %v1969 = vld [vmem:[#allocation5 + $0x28c] sm:$0xf]
        %v1970 = vld [vmem:[#allocation5 + $0x290] sm:$0xf]
        %v1971 = vld [vmem:[#allocation5 + $0x294] sm:$0xf]
        %v1972 = vld [vmem:[#allocation5 + $0x298] sm:$0xf]
        %v1973 = vld [vmem:[#allocation5 + $0x29c] sm:$0xf]
        %v1974 = vld [vmem:[#allocation5 + $0x2a0] sm:$0xf]
        %v1975 = vld [vmem:[#allocation5 + $0x2a4] sm:$0xf]
        %v1976 = vld [vmem:[#allocation5 + $0x2a8] sm:$0xf]
        %v1977 = vld [vmem:[#allocation5 + $0x2ac] sm:$0xf]
        %v1978 = vld [vmem:[#allocation5 + $0x2b0] sm:$0xf]
        %v1979 = vld [vmem:[#allocation5 + $0x2b4] sm:$0xf]
        %v1980 = vld [vmem:[#allocation5 + $0x2b8] sm:$0xf]
        %v1981 = vld [vmem:[#allocation5 + $0x2bc] sm:$0xf]
        %v1982 = vld [vmem:[#allocation5 + $0x2c0] sm:$0xf]
        %v1983 = vld [vmem:[#allocation5 + $0x2c4] sm:$0xf]
        %v1984 = vld [vmem:[#allocation5 + $0x2c8] sm:$0xf]
        %v1985 = vld [vmem:[#allocation5 + $0x2cc] sm:$0xf]
        %v1986 = vld [vmem:[#allocation5 + $0x2d0] sm:$0xf]
        %v1987 = vld [vmem:[#allocation5 + $0x2d4] sm:$0xf]
        %v1988 = vld [vmem:[#allocation5 + $0x2d8] sm:$0xf]
        %v1989 = vld [vmem:[#allocation5 + $0x2dc] sm:$0xf]
        %v1990 = vld [vmem:[#allocation5 + $0x2e0] sm:$0xf]
        %v1991 = vld [vmem:[#allocation5 + $0x2e4] sm:$0xf]
        %v1992 = vld [vmem:[#allocation5 + $0x2e8] sm:$0xf]
        %v1993 = vld [vmem:[#allocation5 + $0x2ec] sm:$0xf]
        %v1994 = vld [vmem:[#allocation5 + $0x2f0] sm:$0xf]
        %v1995 = vld [vmem:[#allocation5 + $0x2f4] sm:$0xf]
        %v1996 = vld [vmem:[#allocation5 + $0x2f8] sm:$0xf]
        %v1997 = vld [vmem:[#allocation5 + $0x2fc] sm:$0xf]
        %v1998 = vld [vmem:[#allocation5 + $0x300] sm:$0xf]
        %v1999 = vld [vmem:[#allocation5 + $0x304] sm:$0xf]
        %v2000 = vld [vmem:[#allocation5 + $0x308] sm:$0xf]
        %v2001 = vld [vmem:[#allocation5 + $0x30c] sm:$0xf]
        %v2002 = vld [vmem:[#allocation5 + $0x310] sm:$0xf]
        %v2003 = vld [vmem:[#allocation5 + $0x314] sm:$0xf]
        %v2004 = vld [vmem:[#allocation5 + $0x318] sm:$0xf]
        %v2005 = vld [vmem:[#allocation5 + $0x31c] sm:$0xf]
        %v2006 = vld [vmem:[#allocation5 + $0x320] sm:$0xf]
        %v2007 = vld [vmem:[#allocation5 + $0x324] sm:$0xf]
        %v2008 = vld [vmem:[#allocation5 + $0x328] sm:$0xf]
        %v2009 = vld [vmem:[#allocation5 + $0x32c] sm:$0xf]
        %v2010 = vld [vmem:[#allocation5 + $0x330] sm:$0xf]
        %v2011 = vld [vmem:[#allocation5 + $0x334] sm:$0xf]
        %v2012 = vld [vmem:[#allocation5 + $0x338] sm:$0xf]
        %v2013 = vld [vmem:[#allocation5 + $0x33c] sm:$0xf]
        %v2014 = vld [vmem:[#allocation5 + $0x340] sm:$0xf]
        %v2015 = vld [vmem:[#allocation5 + $0x344] sm:$0xf]
        %v2016 = vld [vmem:[#allocation5 + $0x348] sm:$0xf]
        %v2017 = vld [vmem:[#allocation5 + $0x34c] sm:$0xf]
        %v2018 = vld [vmem:[#allocation5 + $0x350] sm:$0xf]
        %v2019 = vld [vmem:[#allocation5 + $0x354] sm:$0xf]
        %v2020 = vld [vmem:[#allocation5 + $0x358] sm:$0xf]
        %v2021 = vld [vmem:[#allocation5 + $0x35c] sm:$0xf]
        %v2022 = vld [vmem:[#allocation5 + $0x360] sm:$0xf]
        %v2023 = vld [vmem:[#allocation5 + $0x364] sm:$0xf]
        %v2024 = vld [vmem:[#allocation5 + $0x368] sm:$0xf]
        %v2025 = vld [vmem:[#allocation5 + $0x36c] sm:$0xf]
        %v2026 = vld [vmem:[#allocation5 + $0x370] sm:$0xf]
        %v2027 = vld [vmem:[#allocation5 + $0x374] sm:$0xf]
        %v2028 = vld [vmem:[#allocation5 + $0x378] sm:$0xf]
        %v2029 = vld [vmem:[#allocation5 + $0x37c] sm:$0xf]
        %v2030 = vld [vmem:[#allocation5 + $0x380] sm:$0xf]
        %v2031 = vld [vmem:[#allocation5 + $0x384] sm:$0xf]
        %v2032 = vld [vmem:[#allocation5 + $0x388] sm:$0xf]
        %v2033 = vld [vmem:[#allocation5 + $0x38c] sm:$0xf]
        %v2034 = vld [vmem:[#allocation5 + $0x390] sm:$0xf]
        %v2035 = vld [vmem:[#allocation5 + $0x394] sm:$0xf]
        %v2036 = vld [vmem:[#allocation5 + $0x398] sm:$0xf]
        %v2037 = vld [vmem:[#allocation5 + $0x39c] sm:$0xf]
        %v2038 = vld [vmem:[#allocation5 + $0x3a0] sm:$0xf]
        %v2039 = vld [vmem:[#allocation5 + $0x3a4] sm:$0xf]
        %v2040 = vld [vmem:[#allocation5 + $0x3a8] sm:$0xf]
        %v2041 = vld [vmem:[#allocation5 + $0x3ac] sm:$0xf]
        %v2042 = vld [vmem:[#allocation5 + $0x3b0] sm:$0xf]
        %v2043 = vld [vmem:[#allocation5 + $0x3b4] sm:$0xf]
        %v2044 = vld [vmem:[#allocation5 + $0x3b8] sm:$0xf]
        %v2045 = vld [vmem:[#allocation5 + $0x3bc] sm:$0xf]
        %v2046 = vld [vmem:[#allocation5 + $0x3c0] sm:$0xf]
        %v2047 = vld [vmem:[#allocation5 + $0x3c4] sm:$0xf]
        %v2048 = vld [vmem:[#allocation5 + $0x3c8] sm:$0xf]
        %v2049 = vld [vmem:[#allocation5 + $0x3cc] sm:$0xf]
        %v2050 = vld [vmem:[#allocation5 + $0x3d0] sm:$0xf]
        %v2051 = vld [vmem:[#allocation5 + $0x3d4] sm:$0xf]
        %v2052 = vld [vmem:[#allocation5 + $0x3d8] sm:$0xf]
        %v2053 = vld [vmem:[#allocation5 + $0x3dc] sm:$0xf]
        %v2054 = vld [vmem:[#allocation5 + $0x3e0] sm:$0xf]
        %v2055 = vld [vmem:[#allocation5 + $0x3e4] sm:$0xf]
        %v2056 = vld [vmem:[#allocation5 + $0x3e8] sm:$0xf]
        %v2057 = vld [vmem:[#allocation5 + $0x3ec] sm:$0xf]
        %v2058 = vld [vmem:[#allocation5 + $0x3f0] sm:$0xf]
        %v2059 = vld [vmem:[#allocation5 + $0x3f4] sm:$0xf]
        %v2060 = vld [vmem:[#allocation5 + $0x3f8] sm:$0xf]
        %v2061 = vld [vmem:[#allocation5 + $0x3fc] sm:$0xf]
        %v2318 = vunpack.c.l.b16 %v1806
        %v2319 = vunpack.c.l.b16 %v1807
        %v2320 = vunpack.c.l.b16 %v1808
        %v2321 = vunpack.c.l.b16 %v1809
        %v2322 = vunpack.c.l.b16 %v1810
        %v2323 = vunpack.c.l.b16 %v1811
        %v2324 = vunpack.c.l.b16 %v1812
        %v2325 = vunpack.c.l.b16 %v1813
        %v2326 = vunpack.c.l.b16 %v1814
        %v2327 = vunpack.c.l.b16 %v1815
        %v2328 = vunpack.c.l.b16 %v1816
        %v2329 = vunpack.c.l.b16 %v1817
        %v2330 = vunpack.c.l.b16 %v1818
        %v2331 = vunpack.c.l.b16 %v1819
        %v2332 = vunpack.c.l.b16 %v1820
        %v2333 = vunpack.c.l.b16 %v1821
        %v2334 = vunpack.c.l.b16 %v1822
        %v2335 = vunpack.c.l.b16 %v1823
        %v2336 = vunpack.c.l.b16 %v1824
        %v2337 = vunpack.c.l.b16 %v1825
        %v2338 = vunpack.c.l.b16 %v1826
        %v2339 = vunpack.c.l.b16 %v1827
        %v2340 = vunpack.c.l.b16 %v1828
        %v2341 = vunpack.c.l.b16 %v1829
        %v2342 = vunpack.c.l.b16 %v1830
        %v2343 = vunpack.c.l.b16 %v1831
        %v2344 = vunpack.c.l.b16 %v1832
        %v2345 = vunpack.c.l.b16 %v1833
        %v2346 = vunpack.c.l.b16 %v1834
        %v2347 = vunpack.c.l.b16 %v1835
        %v2348 = vunpack.c.l.b16 %v1836
        %v2349 = vunpack.c.l.b16 %v1837
        %v2350 = vunpack.c.l.b16 %v1838
        %v2351 = vunpack.c.l.b16 %v1839
        %v2352 = vunpack.c.l.b16 %v1840
        %v2353 = vunpack.c.l.b16 %v1841
        %v2354 = vunpack.c.l.b16 %v1842
        %v2355 = vunpack.c.l.b16 %v1843
        %v2356 = vunpack.c.l.b16 %v1844
        %v2357 = vunpack.c.l.b16 %v1845
        %v2358 = vunpack.c.l.b16 %v1846
        %v2359 = vunpack.c.l.b16 %v1847
        %v2360 = vunpack.c.l.b16 %v1848
        %v2361 = vunpack.c.l.b16 %v1849
        %v2362 = vunpack.c.l.b16 %v1850
        %v2363 = vunpack.c.l.b16 %v1851
        %v2364 = vunpack.c.l.b16 %v1852
        %v2365 = vunpack.c.l.b16 %v1853
        %v2366 = vunpack.c.l.b16 %v1854
        %v2367 = vunpack.c.l.b16 %v1855
        %v2368 = vunpack.c.l.b16 %v1856
        %v2369 = vunpack.c.l.b16 %v1857
        %v2370 = vunpack.c.l.b16 %v1858
        %v2371 = vunpack.c.l.b16 %v1859
        %v2372 = vunpack.c.l.b16 %v1860
        %v2373 = vunpack.c.l.b16 %v1861
        %v2374 = vunpack.c.l.b16 %v1862
        %v2375 = vunpack.c.l.b16 %v1863
        %v2376 = vunpack.c.l.b16 %v1864
        %v2377 = vunpack.c.l.b16 %v1865
        %v2378 = vunpack.c.l.b16 %v1866
        %v2379 = vunpack.c.l.b16 %v1867
        %v2380 = vunpack.c.l.b16 %v1868
        %v2381 = vunpack.c.l.b16 %v1869
        %v2382 = vunpack.c.l.b16 %v1870
        %v2383 = vunpack.c.l.b16 %v1871
        %v2384 = vunpack.c.l.b16 %v1872
        %v2385 = vunpack.c.l.b16 %v1873
        %v2386 = vunpack.c.l.b16 %v1874
        %v2387 = vunpack.c.l.b16 %v1875
        %v2388 = vunpack.c.l.b16 %v1876
        %v2389 = vunpack.c.l.b16 %v1877
        %v2390 = vunpack.c.l.b16 %v1878
        %v2391 = vunpack.c.l.b16 %v1879
        %v2392 = vunpack.c.l.b16 %v1880
        %v2393 = vunpack.c.l.b16 %v1881
        %v2394 = vunpack.c.l.b16 %v1882
        %v2395 = vunpack.c.l.b16 %v1883
        %v2396 = vunpack.c.l.b16 %v1884
        %v2397 = vunpack.c.l.b16 %v1885
        %v2398 = vunpack.c.l.b16 %v1886
        %v2399 = vunpack.c.l.b16 %v1887
        %v2400 = vunpack.c.l.b16 %v1888
        %v2401 = vunpack.c.l.b16 %v1889
        %v2402 = vunpack.c.l.b16 %v1890
        %v2403 = vunpack.c.l.b16 %v1891
        %v2404 = vunpack.c.l.b16 %v1892
        %v2405 = vunpack.c.l.b16 %v1893
        %v2406 = vunpack.c.l.b16 %v1894
        %v2407 = vunpack.c.l.b16 %v1895
        %v2408 = vunpack.c.l.b16 %v1896
        %v2409 = vunpack.c.l.b16 %v1897
        %v2410 = vunpack.c.l.b16 %v1898
        %v2411 = vunpack.c.l.b16 %v1899
        %v2412 = vunpack.c.l.b16 %v1900
        %v2413 = vunpack.c.l.b16 %v1901
        %v2414 = vunpack.c.l.b16 %v1902
        %v2415 = vunpack.c.l.b16 %v1903
        %v2416 = vunpack.c.l.b16 %v1904
        %v2417 = vunpack.c.l.b16 %v1905
        %v2418 = vunpack.c.l.b16 %v1906
        %v2419 = vunpack.c.l.b16 %v1907
        %v2420 = vunpack.c.l.b16 %v1908
        %v2421 = vunpack.c.l.b16 %v1909
        %v2422 = vunpack.c.l.b16 %v1910
        %v2423 = vunpack.c.l.b16 %v1911
        %v2424 = vunpack.c.l.b16 %v1912
        %v2425 = vunpack.c.l.b16 %v1913
        %v2426 = vunpack.c.l.b16 %v1914
        %v2427 = vunpack.c.l.b16 %v1915
        %v2428 = vunpack.c.l.b16 %v1916
        %v2429 = vunpack.c.l.b16 %v1917
        %v2430 = vunpack.c.l.b16 %v1918
        %v2431 = vunpack.c.l.b16 %v1919
        %v2432 = vunpack.c.l.b16 %v1920
        %v2433 = vunpack.c.l.b16 %v1921
        %v2434 = vunpack.c.l.b16 %v1922
        %v2435 = vunpack.c.l.b16 %v1923
        %v2436 = vunpack.c.l.b16 %v1924
        %v2437 = vunpack.c.l.b16 %v1925
        %v2438 = vunpack.c.l.b16 %v1926
        %v2439 = vunpack.c.l.b16 %v1927
        %v2440 = vunpack.c.l.b16 %v1928
        %v2441 = vunpack.c.l.b16 %v1929
        %v2442 = vunpack.c.l.b16 %v1930
        %v2443 = vunpack.c.l.b16 %v1931
        %v2444 = vunpack.c.l.b16 %v1932
        %v2445 = vunpack.c.l.b16 %v1933
        %v2446 = vunpack.c.l.b16 %v1934
        %v2447 = vunpack.c.l.b16 %v1935
        %v2448 = vunpack.c.l.b16 %v1936
        %v2449 = vunpack.c.l.b16 %v1937
        %v2450 = vunpack.c.l.b16 %v1938
        %v2451 = vunpack.c.l.b16 %v1939
        %v2452 = vunpack.c.l.b16 %v1940
        %v2453 = vunpack.c.l.b16 %v1941
        %v2454 = vunpack.c.l.b16 %v1942
        %v2455 = vunpack.c.l.b16 %v1943
        %v2456 = vunpack.c.l.b16 %v1944
        %v2457 = vunpack.c.l.b16 %v1945
        %v2458 = vunpack.c.l.b16 %v1946
        %v2459 = vunpack.c.l.b16 %v1947
        %v2460 = vunpack.c.l.b16 %v1948
        %v2461 = vunpack.c.l.b16 %v1949
        %v2462 = vunpack.c.l.b16 %v1950
        %v2463 = vunpack.c.l.b16 %v1951
        %v2464 = vunpack.c.l.b16 %v1952
        %v2465 = vunpack.c.l.b16 %v1953
        %v2466 = vunpack.c.l.b16 %v1954
        %v2467 = vunpack.c.l.b16 %v1955
        %v2468 = vunpack.c.l.b16 %v1956
        %v2469 = vunpack.c.l.b16 %v1957
        %v2470 = vunpack.c.l.b16 %v1958
        %v2471 = vunpack.c.l.b16 %v1959
        %v2472 = vunpack.c.l.b16 %v1960
        %v2473 = vunpack.c.l.b16 %v1961
        %v2474 = vunpack.c.l.b16 %v1962
        %v2475 = vunpack.c.l.b16 %v1963
        %v2476 = vunpack.c.l.b16 %v1964
        %v2477 = vunpack.c.l.b16 %v1965
        %v2478 = vunpack.c.l.b16 %v1966
        %v2479 = vunpack.c.l.b16 %v1967
        %v2480 = vunpack.c.l.b16 %v1968
        %v2481 = vunpack.c.l.b16 %v1969
        %v2482 = vunpack.c.l.b16 %v1970
        %v2483 = vunpack.c.l.b16 %v1971
        %v2484 = vunpack.c.l.b16 %v1972
        %v2485 = vunpack.c.l.b16 %v1973
        %v2486 = vunpack.c.l.b16 %v1974
        %v2487 = vunpack.c.l.b16 %v1975
        %v2488 = vunpack.c.l.b16 %v1976
        %v2489 = vunpack.c.l.b16 %v1977
        %v2490 = vunpack.c.l.b16 %v1978
        %v2491 = vunpack.c.l.b16 %v1979
        %v2492 = vunpack.c.l.b16 %v1980
        %v2493 = vunpack.c.l.b16 %v1981
        %v2494 = vunpack.c.l.b16 %v1982
        %v2495 = vunpack.c.l.b16 %v1983
        %v2496 = vunpack.c.l.b16 %v1984
        %v2497 = vunpack.c.l.b16 %v1985
        %v2498 = vunpack.c.l.b16 %v1986
        %v2499 = vunpack.c.l.b16 %v1987
        %v2500 = vunpack.c.l.b16 %v1988
        %v2501 = vunpack.c.l.b16 %v1989
        %v2502 = vunpack.c.l.b16 %v1990
        %v2503 = vunpack.c.l.b16 %v1991
        %v2504 = vunpack.c.l.b16 %v1992
        %v2505 = vunpack.c.l.b16 %v1993
        %v2506 = vunpack.c.l.b16 %v1994
        %v2507 = vunpack.c.l.b16 %v1995
        %v2508 = vunpack.c.l.b16 %v1996
        %v2509 = vunpack.c.l.b16 %v1997
        %v2510 = vunpack.c.l.b16 %v1998
        %v2511 = vunpack.c.l.b16 %v1999
        %v2512 = vunpack.c.l.b16 %v2000
        %v2513 = vunpack.c.l.b16 %v2001
        %v2514 = vunpack.c.l.b16 %v2002
        %v2515 = vunpack.c.l.b16 %v2003
        %v2516 = vunpack.c.l.b16 %v2004
        %v2517 = vunpack.c.l.b16 %v2005
        %v2518 = vunpack.c.l.b16 %v2006
        %v2519 = vunpack.c.l.b16 %v2007
        %v2520 = vunpack.c.l.b16 %v2008
        %v2521 = vunpack.c.l.b16 %v2009
        %v2522 = vunpack.c.l.b16 %v2010
        %v2523 = vunpack.c.l.b16 %v2011
        %v2524 = vunpack.c.l.b16 %v2012
        %v2525 = vunpack.c.l.b16 %v2013
        %v2526 = vunpack.c.l.b16 %v2014
        %v2527 = vunpack.c.l.b16 %v2015
        %v2528 = vunpack.c.l.b16 %v2016
        %v2529 = vunpack.c.l.b16 %v2017
        %v2530 = vunpack.c.l.b16 %v2018
        %v2531 = vunpack.c.l.b16 %v2019
        %v2532 = vunpack.c.l.b16 %v2020
        %v2533 = vunpack.c.l.b16 %v2021
        %v2534 = vunpack.c.l.b16 %v2022
        %v2535 = vunpack.c.l.b16 %v2023
        %v2536 = vunpack.c.l.b16 %v2024
        %v2537 = vunpack.c.l.b16 %v2025
        %v2538 = vunpack.c.l.b16 %v2026
        %v2539 = vunpack.c.l.b16 %v2027
        %v2540 = vunpack.c.l.b16 %v2028
        %v2541 = vunpack.c.l.b16 %v2029
        %v2542 = vunpack.c.l.b16 %v2030
        %v2543 = vunpack.c.l.b16 %v2031
        %v2544 = vunpack.c.l.b16 %v2032
        %v2545 = vunpack.c.l.b16 %v2033
        %v2546 = vunpack.c.l.b16 %v2034
        %v2547 = vunpack.c.l.b16 %v2035
        %v2548 = vunpack.c.l.b16 %v2036
        %v2549 = vunpack.c.l.b16 %v2037
        %v2550 = vunpack.c.l.b16 %v2038
        %v2551 = vunpack.c.l.b16 %v2039
        %v2552 = vunpack.c.l.b16 %v2040
        %v2553 = vunpack.c.l.b16 %v2041
        %v2554 = vunpack.c.l.b16 %v2042
        %v2555 = vunpack.c.l.b16 %v2043
        %v2556 = vunpack.c.l.b16 %v2044
        %v2557 = vunpack.c.l.b16 %v2045
        %v2558 = vunpack.c.l.b16 %v2046
        %v2559 = vunpack.c.l.b16 %v2047
        %v2560 = vunpack.c.l.b16 %v2048
        %v2561 = vunpack.c.l.b16 %v2049
        %v2562 = vunpack.c.l.b16 %v2050
        %v2563 = vunpack.c.l.b16 %v2051
        %v2564 = vunpack.c.l.b16 %v2052
        %v2565 = vunpack.c.l.b16 %v2053
        %v2566 = vunpack.c.l.b16 %v2054
        %v2567 = vunpack.c.l.b16 %v2055
        %v2568 = vunpack.c.l.b16 %v2056
        %v2569 = vunpack.c.l.b16 %v2057
        %v2570 = vunpack.c.l.b16 %v2058
        %v2571 = vunpack.c.l.b16 %v2059
        %v2572 = vunpack.c.l.b16 %v2060
        %v2573 = vunpack.c.l.b16 %v2061
        %v2574 = vpack.c.b16 %v2319, %v2318
        %v2575 = vpack.c.b16 %v2321, %v2320
        %v2576 = vpack.c.b16 %v2323, %v2322
        %v2577 = vpack.c.b16 %v2325, %v2324
        %v2578 = vpack.c.b16 %v2327, %v2326
        %v2579 = vpack.c.b16 %v2329, %v2328
        %v2580 = vpack.c.b16 %v2331, %v2330
        %v2581 = vpack.c.b16 %v2333, %v2332
        %v2582 = vpack.c.b16 %v2335, %v2334
        %v2583 = vpack.c.b16 %v2337, %v2336
        %v2584 = vpack.c.b16 %v2339, %v2338
        %v2585 = vpack.c.b16 %v2341, %v2340
        %v2586 = vpack.c.b16 %v2343, %v2342
        %v2587 = vpack.c.b16 %v2345, %v2344
        %v2588 = vpack.c.b16 %v2347, %v2346
        %v2589 = vpack.c.b16 %v2349, %v2348
        %v2590 = vpack.c.b16 %v2351, %v2350
        %v2591 = vpack.c.b16 %v2353, %v2352
        %v2592 = vpack.c.b16 %v2355, %v2354
        %v2593 = vpack.c.b16 %v2357, %v2356
        %v2594 = vpack.c.b16 %v2359, %v2358
        %v2595 = vpack.c.b16 %v2361, %v2360
        %v2596 = vpack.c.b16 %v2363, %v2362
        %v2597 = vpack.c.b16 %v2365, %v2364
        %v2598 = vpack.c.b16 %v2367, %v2366
        %v2599 = vpack.c.b16 %v2369, %v2368
        %v2600 = vpack.c.b16 %v2371, %v2370
        %v2601 = vpack.c.b16 %v2373, %v2372
        %v2602 = vpack.c.b16 %v2375, %v2374
        %v2603 = vpack.c.b16 %v2377, %v2376
        %v2604 = vpack.c.b16 %v2379, %v2378
        %v2605 = vpack.c.b16 %v2381, %v2380
        %v2606 = vpack.c.b16 %v2383, %v2382
        %v2607 = vpack.c.b16 %v2385, %v2384
        %v2608 = vpack.c.b16 %v2387, %v2386
        %v2609 = vpack.c.b16 %v2389, %v2388
        %v2610 = vpack.c.b16 %v2391, %v2390
        %v2611 = vpack.c.b16 %v2393, %v2392
        %v2612 = vpack.c.b16 %v2395, %v2394
        %v2613 = vpack.c.b16 %v2397, %v2396
        %v2614 = vpack.c.b16 %v2399, %v2398
        %v2615 = vpack.c.b16 %v2401, %v2400
        %v2616 = vpack.c.b16 %v2403, %v2402
        %v2617 = vpack.c.b16 %v2405, %v2404
        %v2618 = vpack.c.b16 %v2407, %v2406
        %v2619 = vpack.c.b16 %v2409, %v2408
        %v2620 = vpack.c.b16 %v2411, %v2410
        %v2621 = vpack.c.b16 %v2413, %v2412
        %v2622 = vpack.c.b16 %v2415, %v2414
        %v2623 = vpack.c.b16 %v2417, %v2416
        %v2624 = vpack.c.b16 %v2419, %v2418
        %v2625 = vpack.c.b16 %v2421, %v2420
        %v2626 = vpack.c.b16 %v2423, %v2422
        %v2627 = vpack.c.b16 %v2425, %v2424
        %v2628 = vpack.c.b16 %v2427, %v2426
        %v2629 = vpack.c.b16 %v2429, %v2428
        %v2630 = vpack.c.b16 %v2431, %v2430
        %v2631 = vpack.c.b16 %v2433, %v2432
        %v2632 = vpack.c.b16 %v2435, %v2434
        %v2633 = vpack.c.b16 %v2437, %v2436
        %v2634 = vpack.c.b16 %v2439, %v2438
        %v2635 = vpack.c.b16 %v2441, %v2440
        %v2636 = vpack.c.b16 %v2443, %v2442
        %v2637 = vpack.c.b16 %v2445, %v2444
        %v2638 = vpack.c.b16 %v2447, %v2446
        %v2639 = vpack.c.b16 %v2449, %v2448
        %v2640 = vpack.c.b16 %v2451, %v2450
        %v2641 = vpack.c.b16 %v2453, %v2452
        %v2642 = vpack.c.b16 %v2455, %v2454
        %v2643 = vpack.c.b16 %v2457, %v2456
        %v2644 = vpack.c.b16 %v2459, %v2458
        %v2645 = vpack.c.b16 %v2461, %v2460
        %v2646 = vpack.c.b16 %v2463, %v2462
        %v2647 = vpack.c.b16 %v2465, %v2464
        %v2648 = vpack.c.b16 %v2467, %v2466
        %v2649 = vpack.c.b16 %v2469, %v2468
        %v2650 = vpack.c.b16 %v2471, %v2470
        %v2651 = vpack.c.b16 %v2473, %v2472
        %v2652 = vpack.c.b16 %v2475, %v2474
        %v2653 = vpack.c.b16 %v2477, %v2476
        %v2654 = vpack.c.b16 %v2479, %v2478
        %v2655 = vpack.c.b16 %v2481, %v2480
        %v2656 = vpack.c.b16 %v2483, %v2482
        %v2657 = vpack.c.b16 %v2485, %v2484
        %v2658 = vpack.c.b16 %v2487, %v2486
        %v2659 = vpack.c.b16 %v2489, %v2488
        %v2660 = vpack.c.b16 %v2491, %v2490
        %v2661 = vpack.c.b16 %v2493, %v2492
        %v2662 = vpack.c.b16 %v2495, %v2494
        %v2663 = vpack.c.b16 %v2497, %v2496
        %v2664 = vpack.c.b16 %v2499, %v2498
        %v2665 = vpack.c.b16 %v2501, %v2500
        %v2666 = vpack.c.b16 %v2503, %v2502
        %v2667 = vpack.c.b16 %v2505, %v2504
        %v2668 = vpack.c.b16 %v2507, %v2506
        %v2669 = vpack.c.b16 %v2509, %v2508
        %v2670 = vpack.c.b16 %v2511, %v2510
        %v2671 = vpack.c.b16 %v2513, %v2512
        %v2672 = vpack.c.b16 %v2515, %v2514
        %v2673 = vpack.c.b16 %v2517, %v2516
        %v2674 = vpack.c.b16 %v2519, %v2518
        %v2675 = vpack.c.b16 %v2521, %v2520
        %v2676 = vpack.c.b16 %v2523, %v2522
        %v2677 = vpack.c.b16 %v2525, %v2524
        %v2678 = vpack.c.b16 %v2527, %v2526
        %v2679 = vpack.c.b16 %v2529, %v2528
        %v2680 = vpack.c.b16 %v2531, %v2530
        %v2681 = vpack.c.b16 %v2533, %v2532
        %v2682 = vpack.c.b16 %v2535, %v2534
        %v2683 = vpack.c.b16 %v2537, %v2536
        %v2684 = vpack.c.b16 %v2539, %v2538
        %v2685 = vpack.c.b16 %v2541, %v2540
        %v2686 = vpack.c.b16 %v2543, %v2542
        %v2687 = vpack.c.b16 %v2545, %v2544
        %v2688 = vpack.c.b16 %v2547, %v2546
        %v2689 = vpack.c.b16 %v2549, %v2548
        %v2690 = vpack.c.b16 %v2551, %v2550
        %v2691 = vpack.c.b16 %v2553, %v2552
        %v2692 = vpack.c.b16 %v2555, %v2554
        %v2693 = vpack.c.b16 %v2557, %v2556
        %v2694 = vpack.c.b16 %v2559, %v2558
        %v2695 = vpack.c.b16 %v2561, %v2560
        %v2696 = vpack.c.b16 %v2563, %v2562
        %v2697 = vpack.c.b16 %v2565, %v2564
        %v2698 = vpack.c.b16 %v2567, %v2566
        %v2699 = vpack.c.b16 %v2569, %v2568
        %v2700 = vpack.c.b16 %v2571, %v2570
        %v2701 = vpack.c.b16 %v2573, %v2572
        %2830 = vmatprep.subr.bf16.mxu0 0
        %2831 = vmatpush1.bf16.msra.mxu0 %v2574
        %2832 = vmatprep.subr.bf16.mxu0 0
        %2833 = vmatpush1.bf16.msra.mxu0 %v2575
        %2834 = vmatprep.subr.bf16.mxu0 0
        %2835 = vmatpush1.bf16.msra.mxu0 %v2576
        %2836 = vmatprep.subr.bf16.mxu0 0
        %2837 = vmatpush1.bf16.msra.mxu0 %v2577
        %2838 = vmatprep.subr.bf16.mxu0 0
        %2839 = vmatpush1.bf16.msra.mxu0 %v2578
        %2840 = vmatprep.subr.bf16.mxu0 0
        %2841 = vmatpush1.bf16.msra.mxu0 %v2579
        %2842 = vmatprep.subr.bf16.mxu0 0
        %2843 = vmatpush1.bf16.msra.mxu0 %v2580
        %2844 = vmatprep.subr.bf16.mxu0 0
        %2845 = vmatpush1.bf16.msra.mxu0 %v2581
        %2846 = vmatprep.subr.bf16.mxu0 0
        %2847 = vmatpush1.bf16.msra.mxu0 %v2582
        %2848 = vmatprep.subr.bf16.mxu0 0
        %2849 = vmatpush1.bf16.msra.mxu0 %v2583
        %2850 = vmatprep.subr.bf16.mxu0 0
        %2851 = vmatpush1.bf16.msra.mxu0 %v2584
        %2852 = vmatprep.subr.bf16.mxu0 0
        %2853 = vmatpush1.bf16.msra.mxu0 %v2585
        %2854 = vmatprep.subr.bf16.mxu0 0
        %2855 = vmatpush1.bf16.msra.mxu0 %v2586
        %2856 = vmatprep.subr.bf16.mxu0 0
        %2857 = vmatpush1.bf16.msra.mxu0 %v2587
        %2858 = vmatprep.subr.bf16.mxu0 0
        %2859 = vmatpush1.bf16.msra.mxu0 %v2588
        %2860 = vmatprep.subr.bf16.mxu0 0
        %2861 = vmatpush1.bf16.msra.mxu0 %v2589
        %2862 = vmatprep.mubr.bf16.mxu0 %v1160
        %2863 = vmatmul.mubr.bf16.gmra.mrb[0].mxu0 %v1156
        %v2864 = vpop.f32.mrb[0].mxu0
        %v2865 = vadd.f32 0.0, %v2864
        %v2866 = vpop.f32.mrb[0].mxu0
        %v2867 = vpop.f32.mrb[0].mxu0
        %v2868 = vadd.f32 0.0, %v2867
        %v2869 = vpop.f32.mrb[0].mxu0
        %2870 = vmatprep.mubr.bf16.mxu0 %v1192
        %2871 = vmatmul.mubr.bf16.gmra.mrb[0].mxu0 %v1188
        %v2872 = vpop.f32.mrb[0].mxu0
        %v2873 = vadd.f32 0.0, %v2872
        %v2874 = vpop.f32.mrb[0].mxu0
        %v2875 = vpop.f32.mrb[0].mxu0
        %v2876 = vadd.f32 0.0, %v2875
        %v2877 = vpop.f32.mrb[0].mxu0
        %2878 = vdwg.mxu0
        %2879 = vmatprep.subr.bf16.mxu0 0
        %2880 = vmatpush1.bf16.msra.mxu0 %v2590
        %2881 = vmatprep.subr.bf16.mxu0 0
        %2882 = vmatpush1.bf16.msra.mxu0 %v2591
        %2883 = vmatprep.subr.bf16.mxu0 0
        %2884 = vmatpush1.bf16.msra.mxu0 %v2592
        %2885 = vmatprep.subr.bf16.mxu0 0
        %2886 = vmatpush1.bf16.msra.mxu0 %v2593
        %2887 = vmatprep.subr.bf16.mxu0 0
        %2888 = vmatpush1.bf16.msra.mxu0 %v2594
        %2889 = vmatprep.subr.bf16.mxu0 0
        %2890 = vmatpush1.bf16.msra.mxu0 %v2595
        %2891 = vmatprep.subr.bf16.mxu0 0
        %2892 = vmatpush1.bf16.msra.mxu0 %v2596
        %2893 = vmatprep.subr.bf16.mxu0 0
        %2894 = vmatpush1.bf16.msra.mxu0 %v2597
        %2895 = vmatprep.subr.bf16.mxu0 0
        %2896 = vmatpush1.bf16.msra.mxu0 %v2598
        %2897 = vmatprep.subr.bf16.mxu0 0
        %2898 = vmatpush1.bf16.msra.mxu0 %v2599
        %2899 = vmatprep.subr.bf16.mxu0 0
        %2900 = vmatpush1.bf16.msra.mxu0 %v2600
        %2901 = vmatprep.subr.bf16.mxu0 0
        %2902 = vmatpush1.bf16.msra.mxu0 %v2601
        %2903 = vmatprep.subr.bf16.mxu0 0
        %2904 = vmatpush1.bf16.msra.mxu0 %v2602
        %2905 = vmatprep.subr.bf16.mxu0 0
        %2906 = vmatpush1.bf16.msra.mxu0 %v2603
        %2907 = vmatprep.subr.bf16.mxu0 0
        %2908 = vmatpush1.bf16.msra.mxu0 %v2604
        %2909 = vmatprep.subr.bf16.mxu0 0
        %2910 = vmatpush1.bf16.msra.mxu0 %v2605
        %2911 = vmatprep.mubr.bf16.mxu0 %v1168
        %2912 = vmatmul.mubr.bf16.gmra.mrb[0].mxu0 %v1164
        %v2913 = vpop.f32.mrb[0].mxu0
        %v2914 = vadd.f32 %v2865, %v2913
        %v2915 = vpop.f32.mrb[0].mxu0
        %v2916 = vpop.f32.mrb[0].mxu0
        %v2917 = vadd.f32 %v2868, %v2916
        %v2918 = vpop.f32.mrb[0].mxu0
        %2919 = vmatprep.mubr.bf16.mxu0 %v1200
        %2920 = vmatmul.mubr.bf16.gmra.mrb[0].mxu0 %v1196
        %v2921 = vpop.f32.mrb[0].mxu0
        %v2922 = vadd.f32 %v2873, %v2921
        %v2923 = vpop.f32.mrb[0].mxu0
        %v2924 = vpop.f32.mrb[0].mxu0
        %v2925 = vadd.f32 %v2876, %v2924
        %v2926 = vpop.f32.mrb[0].mxu0
        %2927 = vdwg.mxu0
        %2928 = vmatprep.subr.bf16.mxu0 0
        %2929 = vmatpush1.bf16.msra.mxu0 %v2606
        %2930 = vmatprep.subr.bf16.mxu0 0
        %2931 = vmatpush1.bf16.msra.mxu0 %v2607
        %2932 = vmatprep.subr.bf16.mxu0 0
        %2933 = vmatpush1.bf16.msra.mxu0 %v2608
        %2934 = vmatprep.subr.bf16.mxu0 0
        %2935 = vmatpush1.bf16.msra.mxu0 %v2609
        %2936 = vmatprep.subr.bf16.mxu0 0
        %2937 = vmatpush1.bf16.msra.mxu0 %v2610
        %2938 = vmatprep.subr.bf16.mxu0 0
        %2939 = vmatpush1.bf16.msra.mxu0 %v2611
        %2940 = vmatprep.subr.bf16.mxu0 0
        %2941 = vmatpush1.bf16.msra.mxu0 %v2612
        %2942 = vmatprep.subr.bf16.mxu0 0
        %2943 = vmatpush1.bf16.msra.mxu0 %v2613
        %2944 = vmatprep.subr.bf16.mxu0 0
        %2945 = vmatpush1.bf16.msra.mxu0 %v2614
        %2946 = vmatprep.subr.bf16.mxu0 0
        %2947 = vmatpush1.bf16.msra.mxu0 %v2615
        %2948 = vmatprep.subr.bf16.mxu0 0
        %2949 = vmatpush1.bf16.msra.mxu0 %v2616
        %2950 = vmatprep.subr.bf16.mxu0 0
        %2951 = vmatpush1.bf16.msra.mxu0 %v2617
        %2952 = vmatprep.subr.bf16.mxu0 0
        %2953 = vmatpush1.bf16.msra.mxu0 %v2618
        %2954 = vmatprep.subr.bf16.mxu0 0
        %2955 = vmatpush1.bf16.msra.mxu0 %v2619
        %2956 = vmatprep.subr.bf16.mxu0 0
        %2957 = vmatpush1.bf16.msra.mxu0 %v2620
        %2958 = vmatprep.subr.bf16.mxu0 0
        %2959 = vmatpush1.bf16.msra.mxu0 %v2621
        %2960 = vmatprep.mubr.bf16.mxu0 %v1176
        %2961 = vmatmul.mubr.bf16.gmra.mrb[0].mxu0 %v1172
        %v2962 = vpop.f32.mrb[0].mxu0
        %v2963 = vadd.f32 %v2914, %v2962
        %v2964 = vpop.f32.mrb[0].mxu0
        %v2965 = vpop.f32.mrb[0].mxu0
        %v2966 = vadd.f32 %v2917, %v2965
        %v2967 = vpop.f32.mrb[0].mxu0
        %2968 = vmatprep.mubr.bf16.mxu0 %v1208
        %2969 = vmatmul.mubr.bf16.gmra.mrb[0].mxu0 %v1204
        %v2970 = vpop.f32.mrb[0].mxu0
        %v2971 = vadd.f32 %v2922, %v2970
        %v2972 = vpop.f32.mrb[0].mxu0
        %v2973 = vpop.f32.mrb[0].mxu0
        %v2974 = vadd.f32 %v2925, %v2973
        %v2975 = vpop.f32.mrb[0].mxu0
        %2976 = vdwg.mxu0
        %2977 = vmatprep.subr.bf16.mxu0 0
        %2978 = vmatpush1.bf16.msra.mxu0 %v2622
        %2979 = vmatprep.subr.bf16.mxu0 0
        %2980 = vmatpush1.bf16.msra.mxu0 %v2623
        %2981 = vmatprep.subr.bf16.mxu0 0
        %2982 = vmatpush1.bf16.msra.mxu0 %v2624
        %2983 = vmatprep.subr.bf16.mxu0 0
        %2984 = vmatpush1.bf16.msra.mxu0 %v2625
        %2985 = vmatprep.subr.bf16.mxu0 0
        %2986 = vmatpush1.bf16.msra.mxu0 %v2626
        %2987 = vmatprep.subr.bf16.mxu0 0
        %2988 = vmatpush1.bf16.msra.mxu0 %v2627
        %2989 = vmatprep.subr.bf16.mxu0 0
        %2990 = vmatpush1.bf16.msra.mxu0 %v2628
        %2991 = vmatprep.subr.bf16.mxu0 0
        %2992 = vmatpush1.bf16.msra.mxu0 %v2629
        %2993 = vmatprep.subr.bf16.mxu0 0
        %2994 = vmatpush1.bf16.msra.mxu0 %v2630
        %2995 = vmatprep.subr.bf16.mxu0 0
        %2996 = vmatpush1.bf16.msra.mxu0 %v2631
        %2997 = vmatprep.subr.bf16.mxu0 0
        %2998 = vmatpush1.bf16.msra.mxu0 %v2632
        %2999 = vmatprep.subr.bf16.mxu0 0
        %3000 = vmatpush1.bf16.msra.mxu0 %v2633
        %3001 = vmatprep.subr.bf16.mxu0 0
        %3002 = vmatpush1.bf16.msra.mxu0 %v2634
        %3003 = vmatprep.subr.bf16.mxu0 0
        %3004 = vmatpush1.bf16.msra.mxu0 %v2635
        %3005 = vmatprep.subr.bf16.mxu0 0
        %3006 = vmatpush1.bf16.msra.mxu0 %v2636
        %3007 = vmatprep.subr.bf16.mxu0 0
        %3008 = vmatpush1.bf16.msra.mxu0 %v2637
        %3009 = vmatprep.mubr.bf16.mxu0 %v1184
        %3010 = vmatmul.mubr.bf16.gmra.mrb[0].mxu0 %v1180
        %v3011 = vpop.f32.mrb[0].mxu0
        %v3012 = vadd.f32 %v2963, %v3011
        %v3013 = vpop.f32.mrb[0].mxu0
        %v3014 = vpop.f32.mrb[0].mxu0
        %v3015 = vadd.f32 %v2966, %v3014
        %v3016 = vpop.f32.mrb[0].mxu0
        %3017 = vmatprep.mubr.bf16.mxu0 %v1216
        %3018 = vmatmul.mubr.bf16.gmra.mrb[0].mxu0 %v1212
        %v3019 = vpop.f32.mrb[0].mxu0
        %v3020 = vadd.f32 %v2971, %v3019
        %v3021 = vpop.f32.mrb[0].mxu0
        %v3022 = vpop.f32.mrb[0].mxu0
        %v3023 = vadd.f32 %v2974, %v3022
        %v3024 = vpop.f32.mrb[0].mxu0
        %3025 = vdwg.mxu0
        %3026 = vmatprep.subr.bf16.mxu0 0
        %3027 = vmatpush1.bf16.msra.mxu0 %v2638
        %3028 = vmatprep.subr.bf16.mxu0 0
        %3029 = vmatpush1.bf16.msra.mxu0 %v2639
        %3030 = vmatprep.subr.bf16.mxu0 0
        %3031 = vmatpush1.bf16.msra.mxu0 %v2640
        %3032 = vmatprep.subr.bf16.mxu0 0
        %3033 = vmatpush1.bf16.msra.mxu0 %v2641
        %3034 = vmatprep.subr.bf16.mxu0 0
        %3035 = vmatpush1.bf16.msra.mxu0 %v2642
        %3036 = vmatprep.subr.bf16.mxu0 0
        %3037 = vmatpush1.bf16.msra.mxu0 %v2643
        %3038 = vmatprep.subr.bf16.mxu0 0
        %3039 = vmatpush1.bf16.msra.mxu0 %v2644
        %3040 = vmatprep.subr.bf16.mxu0 0
        %3041 = vmatpush1.bf16.msra.mxu0 %v2645
        %3042 = vmatprep.subr.bf16.mxu0 0
        %3043 = vmatpush1.bf16.msra.mxu0 %v2646
        %3044 = vmatprep.subr.bf16.mxu0 0
        %3045 = vmatpush1.bf16.msra.mxu0 %v2647
        %3046 = vmatprep.subr.bf16.mxu0 0
        %3047 = vmatpush1.bf16.msra.mxu0 %v2648
        %3048 = vmatprep.subr.bf16.mxu0 0
        %3049 = vmatpush1.bf16.msra.mxu0 %v2649
        %3050 = vmatprep.subr.bf16.mxu0 0
        %3051 = vmatpush1.bf16.msra.mxu0 %v2650
        %3052 = vmatprep.subr.bf16.mxu0 0
        %3053 = vmatpush1.bf16.msra.mxu0 %v2651
        %3054 = vmatprep.subr.bf16.mxu0 0
        %3055 = vmatpush1.bf16.msra.mxu0 %v2652
        %3056 = vmatprep.subr.bf16.mxu0 0
        %3057 = vmatpush1.bf16.msra.mxu0 %v2653
        %3058 = vmatprep.mubr.bf16.mxu0 %v1748
        %3059 = vmatmul.mubr.bf16.gmra.mrb[0].mxu0 %v1744
        %v3060 = vpop.f32.mrb[0].mxu0
        %v3061 = vadd.f32 %v3012, %v3060
        %v3062 = vpop.f32.mrb[0].mxu0
        %v3063 = vpop.f32.mrb[0].mxu0
        %v3064 = vadd.f32 %v3015, %v3063
        %v3065 = vpop.f32.mrb[0].mxu0
        %3066 = vmatprep.mubr.bf16.mxu0 %v1780
        %3067 = vmatmul.mubr.bf16.gmra.mrb[0].mxu0 %v1776
        %v3068 = vpop.f32.mrb[0].mxu0
        %v3069 = vadd.f32 %v3020, %v3068
        %v3070 = vpop.f32.mrb[0].mxu0
        %v3071 = vpop.f32.mrb[0].mxu0
        %v3072 = vadd.f32 %v3023, %v3071
        %v3073 = vpop.f32.mrb[0].mxu0
        %3074 = vdwg.mxu0
        %3075 = vmatprep.subr.bf16.mxu0 0
        %3076 = vmatpush1.bf16.msra.mxu0 %v2654
        %3077 = vmatprep.subr.bf16.mxu0 0
        %3078 = vmatpush1.bf16.msra.mxu0 %v2655
        %3079 = vmatprep.subr.bf16.mxu0 0
        %3080 = vmatpush1.bf16.msra.mxu0 %v2656
        %3081 = vmatprep.subr.bf16.mxu0 0
        %3082 = vmatpush1.bf16.msra.mxu0 %v2657
        %3083 = vmatprep.subr.bf16.mxu0 0
        %3084 = vmatpush1.bf16.msra.mxu0 %v2658
        %3085 = vmatprep.subr.bf16.mxu0 0
        %3086 = vmatpush1.bf16.msra.mxu0 %v2659
        %3087 = vmatprep.subr.bf16.mxu0 0
        %3088 = vmatpush1.bf16.msra.mxu0 %v2660
        %3089 = vmatprep.subr.bf16.mxu0 0
        %3090 = vmatpush1.bf16.msra.mxu0 %v2661
        %3091 = vmatprep.subr.bf16.mxu0 0
        %3092 = vmatpush1.bf16.msra.mxu0 %v2662
        %3093 = vmatprep.subr.bf16.mxu0 0
        %3094 = vmatpush1.bf16.msra.mxu0 %v2663
        %3095 = vmatprep.subr.bf16.mxu0 0
        %3096 = vmatpush1.bf16.msra.mxu0 %v2664
        %3097 = vmatprep.subr.bf16.mxu0 0
        %3098 = vmatpush1.bf16.msra.mxu0 %v2665
        %3099 = vmatprep.subr.bf16.mxu0 0
        %3100 = vmatpush1.bf16.msra.mxu0 %v2666
        %3101 = vmatprep.subr.bf16.mxu0 0
        %3102 = vmatpush1.bf16.msra.mxu0 %v2667
        %3103 = vmatprep.subr.bf16.mxu0 0
        %3104 = vmatpush1.bf16.msra.mxu0 %v2668
        %3105 = vmatprep.subr.bf16.mxu0 0
        %3106 = vmatpush1.bf16.msra.mxu0 %v2669
        %3107 = vmatprep.mubr.bf16.mxu0 %v1756
        %3108 = vmatmul.mubr.bf16.gmra.mrb[0].mxu0 %v1752
        %v3109 = vpop.f32.mrb[0].mxu0
        %v3110 = vadd.f32 %v3061, %v3109
        %v3111 = vpop.f32.mrb[0].mxu0
        %v3112 = vpop.f32.mrb[0].mxu0
        %v3113 = vadd.f32 %v3064, %v3112
        %v3114 = vpop.f32.mrb[0].mxu0
        %3115 = vmatprep.mubr.bf16.mxu0 %v1788
        %3116 = vmatmul.mubr.bf16.gmra.mrb[0].mxu0 %v1784
        %v3117 = vpop.f32.mrb[0].mxu0
        %v3118 = vadd.f32 %v3069, %v3117
        %v3119 = vpop.f32.mrb[0].mxu0
        %v3120 = vpop.f32.mrb[0].mxu0
        %v3121 = vadd.f32 %v3072, %v3120
        %v3122 = vpop.f32.mrb[0].mxu0
        %3123 = vdwg.mxu0
        %3124 = vmatprep.subr.bf16.mxu0 0
        %3125 = vmatpush1.bf16.msra.mxu0 %v2670
        %3126 = vmatprep.subr.bf16.mxu0 0
        %3127 = vmatpush1.bf16.msra.mxu0 %v2671
        %3128 = vmatprep.subr.bf16.mxu0 0
        %3129 = vmatpush1.bf16.msra.mxu0 %v2672
        %3130 = vmatprep.subr.bf16.mxu0 0
        %3131 = vmatpush1.bf16.msra.mxu0 %v2673
        %3132 = vmatprep.subr.bf16.mxu0 0
        %3133 = vmatpush1.bf16.msra.mxu0 %v2674
        %3134 = vmatprep.subr.bf16.mxu0 0
        %3135 = vmatpush1.bf16.msra.mxu0 %v2675
        %3136 = vmatprep.subr.bf16.mxu0 0
        %3137 = vmatpush1.bf16.msra.mxu0 %v2676
        %3138 = vmatprep.subr.bf16.mxu0 0
        %3139 = vmatpush1.bf16.msra.mxu0 %v2677
        %3140 = vmatprep.subr.bf16.mxu0 0
        %3141 = vmatpush1.bf16.msra.mxu0 %v2678
        %3142 = vmatprep.subr.bf16.mxu0 0
        %3143 = vmatpush1.bf16.msra.mxu0 %v2679
        %3144 = vmatprep.subr.bf16.mxu0 0
        %3145 = vmatpush1.bf16.msra.mxu0 %v2680
        %3146 = vmatprep.subr.bf16.mxu0 0
        %3147 = vmatpush1.bf16.msra.mxu0 %v2681
        %3148 = vmatprep.subr.bf16.mxu0 0
        %3149 = vmatpush1.bf16.msra.mxu0 %v2682
        %3150 = vmatprep.subr.bf16.mxu0 0
        %3151 = vmatpush1.bf16.msra.mxu0 %v2683
        %3152 = vmatprep.subr.bf16.mxu0 0
        %3153 = vmatpush1.bf16.msra.mxu0 %v2684
        %3154 = vmatprep.subr.bf16.mxu0 0
        %3155 = vmatpush1.bf16.msra.mxu0 %v2685
        %3156 = vmatprep.mubr.bf16.mxu0 %v1764
        %3157 = vmatmul.mubr.bf16.gmra.mrb[0].mxu0 %v1760
        %v3158 = vpop.f32.mrb[0].mxu0
        %v3159 = vadd.f32 %v3110, %v3158
        %v3160 = vpop.f32.mrb[0].mxu0
        %v3161 = vpop.f32.mrb[0].mxu0
        %v3162 = vadd.f32 %v3113, %v3161
        %v3163 = vpop.f32.mrb[0].mxu0
        %3164 = vmatprep.mubr.bf16.mxu0 %v1796
        %3165 = vmatmul.mubr.bf16.gmra.mrb[0].mxu0 %v1792
        %v3166 = vpop.f32.mrb[0].mxu0
        %v3167 = vadd.f32 %v3118, %v3166
        %v3168 = vpop.f32.mrb[0].mxu0
        %v3169 = vpop.f32.mrb[0].mxu0
        %v3170 = vadd.f32 %v3121, %v3169
        %v3171 = vpop.f32.mrb[0].mxu0
        %3172 = vdwg.mxu0
        %3173 = vmatprep.subr.bf16.mxu0 0
        %3174 = vmatpush1.bf16.msra.mxu0 %v2686
        %3175 = vmatprep.subr.bf16.mxu0 0
        %3176 = vmatpush1.bf16.msra.mxu0 %v2687
        %3177 = vmatprep.subr.bf16.mxu0 0
        %3178 = vmatpush1.bf16.msra.mxu0 %v2688
        %3179 = vmatprep.subr.bf16.mxu0 0
        %3180 = vmatpush1.bf16.msra.mxu0 %v2689
        %3181 = vmatprep.subr.bf16.mxu0 0
        %3182 = vmatpush1.bf16.msra.mxu0 %v2690
        %3183 = vmatprep.subr.bf16.mxu0 0
        %3184 = vmatpush1.bf16.msra.mxu0 %v2691
        %3185 = vmatprep.subr.bf16.mxu0 0
        %3186 = vmatpush1.bf16.msra.mxu0 %v2692
        %3187 = vmatprep.subr.bf16.mxu0 0
        %3188 = vmatpush1.bf16.msra.mxu0 %v2693
        %3189 = vmatprep.subr.bf16.mxu0 0
        %3190 = vmatpush1.bf16.msra.mxu0 %v2694
        %3191 = vmatprep.subr.bf16.mxu0 0
        %3192 = vmatpush1.bf16.msra.mxu0 %v2695
        %3193 = vmatprep.subr.bf16.mxu0 0
        %3194 = vmatpush1.bf16.msra.mxu0 %v2696
        %3195 = vmatprep.subr.bf16.mxu0 0
        %3196 = vmatpush1.bf16.msra.mxu0 %v2697
        %3197 = vmatprep.subr.bf16.mxu0 0
        %3198 = vmatpush1.bf16.msra.mxu0 %v2698
        %3199 = vmatprep.subr.bf16.mxu0 0
        %3200 = vmatpush1.bf16.msra.mxu0 %v2699
        %3201 = vmatprep.subr.bf16.mxu0 0
        %3202 = vmatpush1.bf16.msra.mxu0 %v2700
        %3203 = vmatprep.subr.bf16.mxu0 0
        %3204 = vmatpush1.bf16.msra.mxu0 %v2701
        %3205 = vmatprep.mubr.bf16.mxu0 %v1772
        %3206 = vmatmul.mubr.bf16.gmra.mrb[0].mxu0 %v1768
        %v3207 = vpop.f32.mrb[0].mxu0
        %v3208 = vadd.f32 %v3159, %v3207
        %v3209 = vpop.f32.mrb[0].mxu0
        %v3210 = vpop.f32.mrb[0].mxu0
        %v3211 = vadd.f32 %v3162, %v3210
        %v3212 = vpop.f32.mrb[0].mxu0
        %3213 = vmatprep.mubr.bf16.mxu0 %v1804
        %3214 = vmatmul.mubr.bf16.gmra.mrb[0].mxu0 %v1800
        %v3215 = vpop.f32.mrb[0].mxu0
        %v3216 = vadd.f32 %v3167, %v3215
        %v3217 = vpop.f32.mrb[0].mxu0
        %v3218 = vpop.f32.mrb[0].mxu0
        %v3219 = vadd.f32 %v3170, %v3218
        %v3220 = vpop.f32.mrb[0].mxu0
        %3221 = vdwg.mxu0
        %v3226 = vcombine.high %v3208, %v3208
        %v3228 = vunpack.c.l.s4 1983009808
        %v3229 = vunpack.c.0.s8 %v3228
        %v3230 = vlaneseq
        %v3231 = vshrl.u32 %v3230, 7
        %v3232 = vsub.s32 %v3229, %v3231
        %v3233 = vrot.slane %v3208, %v3232
        %v3235 = vunpack.c.l.s4 1983009808
        %v3236 = vunpack.c.0.s8 %v3235
        %v3237 = vlaneseq
        %v3238 = vshrl.u32 %v3237, 7
        %v3239 = vsub.s32 %v3236, %v3238
        %v3240 = vrot.slane %v3226, %v3239
        %v3241 = vcombine.high %v3233, %v3233
        %v3242 = vcombine.high %v3240, %v3240
        %v3243 = vcombine.high %v3211, %v3211
        %v3245 = vunpack.c.l.s4 1983009808
        %v3246 = vunpack.c.0.s8 %v3245
        %v3247 = vlaneseq
        %v3248 = vshrl.u32 %v3247, 7
        %v3249 = vsub.s32 %v3246, %v3248
        %v3250 = vrot.slane %v3211, %v3249
        %v3252 = vunpack.c.l.s4 1983009808
        %v3253 = vunpack.c.0.s8 %v3252
        %v3254 = vlaneseq
        %v3255 = vshrl.u32 %v3254, 7
        %v3256 = vsub.s32 %v3253, %v3255
        %v3257 = vrot.slane %v3243, %v3256
        %v3258 = vcombine.high %v3250, %v3250
        %v3259 = vcombine.high %v3257, %v3257
        %v3260 = vcombine.high %v3216, %v3216
        %v3262 = vunpack.c.l.s4 1983009808
        %v3263 = vunpack.c.0.s8 %v3262
        %v3264 = vlaneseq
        %v3265 = vshrl.u32 %v3264, 7
        %v3266 = vsub.s32 %v3263, %v3265
        %v3267 = vrot.slane %v3216, %v3266
        %v3269 = vunpack.c.l.s4 1983009808
        %v3270 = vunpack.c.0.s8 %v3269
        %v3271 = vlaneseq
        %v3272 = vshrl.u32 %v3271, 7
        %v3273 = vsub.s32 %v3270, %v3272
        %v3274 = vrot.slane %v3260, %v3273
        %v3275 = vcombine.high %v3267, %v3267
        %v3276 = vcombine.high %v3274, %v3274
        %v3277 = vcombine.high %v3219, %v3219
        %v3279 = vunpack.c.l.s4 1983009808
        %v3280 = vunpack.c.0.s8 %v3279
        %v3281 = vlaneseq
        %v3282 = vshrl.u32 %v3281, 7
        %v3283 = vsub.s32 %v3280, %v3282
        %v3284 = vrot.slane %v3219, %v3283
        %v3286 = vunpack.c.l.s4 1983009808
        %v3287 = vunpack.c.0.s8 %v3286
        %v3288 = vlaneseq
        %v3289 = vshrl.u32 %v3288, 7
        %v3290 = vsub.s32 %v3287, %v3289
        %v3291 = vrot.slane %v3277, %v3290
        %v3292 = vcombine.high %v3284, %v3284
        %v3293 = vcombine.high %v3291, %v3291
        %v3310 = vld [vmem:[%s353] sm:$0xff]
        %v3311 = vld [vmem:[%s353 + $0x8] sm:$0xff]
        %v3314 = vcombine.high %v3310, %v3310
        %v3316 = vunpack.c.l.s4 1966171168
        %v3317 = vunpack.c.0.s8 %v3316
        %v3318 = vlaneseq
        %v3319 = vshrl.u32 %v3318, 7
        %v3320 = vsub.s32 %v3317, %v3319
        %v3321 = vrot.slane %v3310, %v3320
        %v3323 = vunpack.c.l.s4 1966171168
        %v3324 = vunpack.c.0.s8 %v3323
        %v3325 = vlaneseq
        %v3326 = vshrl.u32 %v3325, 7
        %v3327 = vsub.s32 %v3324, %v3326
        %v3328 = vrot.slane %v3314, %v3327
        %v3329 = vcombine.high %v3321, %v3321
        %v3330 = vcombine.high %v3328, %v3328
        %v3332 = vunpack.c.l.s4 1966171168
        %v3333 = vunpack.c.0.s8 %v3332
        %v3334 = vlaneseq
        %v3335 = vshrl.u32 %v3334, 7
        %v3336 = vsub.s32 %v3333, %v3335
        %v3337 = vrot.slane %v3321, %v3336
        %v3339 = vunpack.c.l.s4 1966171168
        %v3340 = vunpack.c.0.s8 %v3339
        %v3341 = vlaneseq
        %v3342 = vshrl.u32 %v3341, 7
        %v3343 = vsub.s32 %v3340, %v3342
        %v3344 = vrot.slane %v3328, %v3343
        %v3346 = vunpack.c.l.s4 1966171168
        %v3347 = vunpack.c.0.s8 %v3346
        %v3348 = vlaneseq
        %v3349 = vshrl.u32 %v3348, 7
        %v3350 = vsub.s32 %v3347, %v3349
        %v3351 = vrot.slane %v3329, %v3350
        %v3353 = vunpack.c.l.s4 1966171168
        %v3354 = vunpack.c.0.s8 %v3353
        %v3355 = vlaneseq
        %v3356 = vshrl.u32 %v3355, 7
        %v3357 = vsub.s32 %v3354, %v3356
        %v3358 = vrot.slane %v3330, %v3357
        %v3359 = vcombine.high %v3337, %v3337
        %v3360 = vcombine.high %v3344, %v3344
        %v3361 = vcombine.high %v3351, %v3351
        %v3362 = vcombine.high %v3358, %v3358
        %v3363 = vcombine.high %v3311, %v3311
        %v3365 = vunpack.c.l.s4 1966171168
        %v3366 = vunpack.c.0.s8 %v3365
        %v3367 = vlaneseq
        %v3368 = vshrl.u32 %v3367, 7
        %v3369 = vsub.s32 %v3366, %v3368
        %v3370 = vrot.slane %v3311, %v3369
        %v3372 = vunpack.c.l.s4 1966171168
        %v3373 = vunpack.c.0.s8 %v3372
        %v3374 = vlaneseq
        %v3375 = vshrl.u32 %v3374, 7
        %v3376 = vsub.s32 %v3373, %v3375
        %v3377 = vrot.slane %v3363, %v3376
        %v3378 = vcombine.high %v3370, %v3370
        %v3379 = vcombine.high %v3377, %v3377
        %v3381 = vunpack.c.l.s4 1966171168
        %v3382 = vunpack.c.0.s8 %v3381
        %v3383 = vlaneseq
        %v3384 = vshrl.u32 %v3383, 7
        %v3385 = vsub.s32 %v3382, %v3384
        %v3386 = vrot.slane %v3370, %v3385
        %v3388 = vunpack.c.l.s4 1966171168
        %v3389 = vunpack.c.0.s8 %v3388
        %v3390 = vlaneseq
        %v3391 = vshrl.u32 %v3390, 7
        %v3392 = vsub.s32 %v3389, %v3391
        %v3393 = vrot.slane %v3377, %v3392
        %v3395 = vunpack.c.l.s4 1966171168
        %v3396 = vunpack.c.0.s8 %v3395
        %v3397 = vlaneseq
        %v3398 = vshrl.u32 %v3397, 7
        %v3399 = vsub.s32 %v3396, %v3398
        %v3400 = vrot.slane %v3378, %v3399
        %v3402 = vunpack.c.l.s4 1966171168
        %v3403 = vunpack.c.0.s8 %v3402
        %v3404 = vlaneseq
        %v3405 = vshrl.u32 %v3404, 7
        %v3406 = vsub.s32 %v3403, %v3405
        %v3407 = vrot.slane %v3379, %v3406
        %v3408 = vcombine.high %v3386, %v3386
        %v3409 = vcombine.high %v3393, %v3393
        %v3410 = vcombine.high %v3400, %v3400
        %v3411 = vcombine.high %v3407, %v3407
        %v3412 = vlaneseq
        %v3413 = vshrl.u32 %v3412, 7
        %v3414 = vsub.s32 0, %v3413
        %v3415 = vrot.slane %v3337, %v3414
        %v3416 = vlaneseq
        %v3417 = vshrl.u32 %v3416, 7
        %v3418 = vsub.s32 0, %v3417
        %v3419 = vrot.slane %v3351, %v3418
        %v3420 = vlaneseq
        %v3421 = vshrl.u32 %v3420, 7
        %v3422 = vsub.s32 0, %v3421
        %v3423 = vrot.slane %v3359, %v3422
        %v3424 = vlaneseq
        %v3425 = vshrl.u32 %v3424, 7
        %v3426 = vsub.s32 0, %v3425
        %v3427 = vrot.slane %v3361, %v3426
        %v3428 = vlaneseq
        %v3429 = vshrl.u32 %v3428, 7
        %v3430 = vsub.s32 0, %v3429
        %v3431 = vrot.slane %v3344, %v3430
        %v3432 = vlaneseq
        %v3433 = vshrl.u32 %v3432, 7
        %v3434 = vsub.s32 0, %v3433
        %v3435 = vrot.slane %v3358, %v3434
        %v3436 = vlaneseq
        %v3437 = vshrl.u32 %v3436, 7
        %v3438 = vsub.s32 0, %v3437
        %v3439 = vrot.slane %v3360, %v3438
        %v3440 = vlaneseq
        %v3441 = vshrl.u32 %v3440, 7
        %v3442 = vsub.s32 0, %v3441
        %v3443 = vrot.slane %v3362, %v3442
        %v3444 = vlaneseq
        %v3445 = vshrl.u32 %v3444, 7
        %v3446 = vsub.s32 0, %v3445
        %v3447 = vrot.slane %v3386, %v3446
        %v3448 = vlaneseq
        %v3449 = vshrl.u32 %v3448, 7
        %v3450 = vsub.s32 0, %v3449
        %v3451 = vrot.slane %v3400, %v3450
        %v3452 = vlaneseq
        %v3453 = vshrl.u32 %v3452, 7
        %v3454 = vsub.s32 0, %v3453
        %v3455 = vrot.slane %v3408, %v3454
        %v3456 = vlaneseq
        %v3457 = vshrl.u32 %v3456, 7
        %v3458 = vsub.s32 0, %v3457
        %v3459 = vrot.slane %v3410, %v3458
        %v3460 = vlaneseq
        %v3461 = vshrl.u32 %v3460, 7
        %v3462 = vsub.s32 0, %v3461
        %v3463 = vrot.slane %v3393, %v3462
        %v3464 = vlaneseq
        %v3465 = vshrl.u32 %v3464, 7
        %v3466 = vsub.s32 0, %v3465
        %v3467 = vrot.slane %v3407, %v3466
        %v3468 = vlaneseq
        %v3469 = vshrl.u32 %v3468, 7
        %v3470 = vsub.s32 0, %v3469
        %v3471 = vrot.slane %v3409, %v3470
        %v3472 = vlaneseq
        %v3473 = vshrl.u32 %v3472, 7
        %v3474 = vsub.s32 0, %v3473
        %v3475 = vrot.slane %v3411, %v3474
        %v3492 = vadd.f32 %v3233, %v3415
        %v3493 = vadd.f32 %v3241, %v3419
        %v3494 = vadd.f32 %v3240, %v3423
        %v3495 = vadd.f32 %v3242, %v3427
        %v3496 = vadd.f32 %v3250, %v3431
        %v3497 = vadd.f32 %v3258, %v3435
        %v3498 = vadd.f32 %v3257, %v3439
        %v3499 = vadd.f32 %v3259, %v3443
        %v3500 = vadd.f32 %v3267, %v3447
        %v3501 = vadd.f32 %v3275, %v3451
        %v3502 = vadd.f32 %v3274, %v3455
        %v3503 = vadd.f32 %v3276, %v3459
        %v3504 = vadd.f32 %v3284, %v3463
        %v3505 = vadd.f32 %v3292, %v3467
        %v3506 = vadd.f32 %v3291, %v3471
        %v3507 = vadd.f32 %v3293, %v3475
        %v3508 = vxor.u32 %v3492, 2147483648
        %v3509 = vxor.u32 %v3493, 2147483648
        %v3510 = vxor.u32 %v3494, 2147483648
        %v3511 = vxor.u32 %v3495, 2147483648
        %v3512 = vxor.u32 %v3496, 2147483648
        %v3513 = vxor.u32 %v3497, 2147483648
        %v3514 = vxor.u32 %v3498, 2147483648
        %v3515 = vxor.u32 %v3499, 2147483648
        %v3516 = vxor.u32 %v3500, 2147483648
        %v3517 = vxor.u32 %v3501, 2147483648
        %v3518 = vxor.u32 %v3502, 2147483648
        %v3519 = vxor.u32 %v3503, 2147483648
        %v3520 = vxor.u32 %v3504, 2147483648
        %v3521 = vxor.u32 %v3505, 2147483648
        %v3522 = vxor.u32 %v3506, 2147483648
        %v3523 = vxor.u32 %v3507, 2147483648
        %v3524 = vmul.f32 %v3508, 1.442695
        %v3525 = vpow.pop %v3524
        %v3526 = vmul.f32 %v3509, 1.442695
        %v3527 = vpow.pop %v3526
        %v3528 = vmul.f32 %v3510, 1.442695
        %v3529 = vpow.pop %v3528
        %v3530 = vmul.f32 %v3511, 1.442695
        %v3531 = vpow.pop %v3530
        %v3532 = vmul.f32 %v3512, 1.442695
        %v3533 = vpow.pop %v3532
        %v3534 = vmul.f32 %v3513, 1.442695
        %v3535 = vpow.pop %v3534
        %v3536 = vmul.f32 %v3514, 1.442695
        %v3537 = vpow.pop %v3536
        %v3538 = vmul.f32 %v3515, 1.442695
        %v3539 = vpow.pop %v3538
        %v3540 = vmul.f32 %v3516, 1.442695
        %v3541 = vpow.pop %v3540
        %v3542 = vmul.f32 %v3517, 1.442695
        %v3543 = vpow.pop %v3542
        %v3544 = vmul.f32 %v3518, 1.442695
        %v3545 = vpow.pop %v3544
        %v3546 = vmul.f32 %v3519, 1.442695
        %v3547 = vpow.pop %v3546
        %v3548 = vmul.f32 %v3520, 1.442695
        %v3549 = vpow.pop %v3548
        %v3550 = vmul.f32 %v3521, 1.442695
        %v3551 = vpow.pop %v3550
        %v3552 = vmul.f32 %v3522, 1.442695
        %v3553 = vpow.pop %v3552
        %v3554 = vmul.f32 %v3523, 1.442695
        %v3555 = vpow.pop %v3554
        %v3556 = vadd.f32 %v3525, 1.0
        %v3557 = vadd.f32 %v3527, 1.0
        %v3558 = vadd.f32 %v3529, 1.0
        %v3559 = vadd.f32 %v3531, 1.0
        %v3560 = vadd.f32 %v3533, 1.0
        %v3561 = vadd.f32 %v3535, 1.0
        %v3562 = vadd.f32 %v3537, 1.0
        %v3563 = vadd.f32 %v3539, 1.0
        %v3564 = vadd.f32 %v3541, 1.0
        %v3565 = vadd.f32 %v3543, 1.0
        %v3566 = vadd.f32 %v3545, 1.0
        %v3567 = vadd.f32 %v3547, 1.0
        %v3568 = vadd.f32 %v3549, 1.0
        %v3569 = vadd.f32 %v3551, 1.0
        %v3570 = vadd.f32 %v3553, 1.0
        %v3571 = vadd.f32 %v3555, 1.0
        %v3572 = vrcp.pop %v3556
        %v3573 = vmul.f32 1.0, %v3572
        %v3574 = vrcp.pop %v3557
        %v3575 = vmul.f32 1.0, %v3574
        %v3576 = vrcp.pop %v3558
        %v3577 = vmul.f32 1.0, %v3576
        %v3578 = vrcp.pop %v3559
        %v3579 = vmul.f32 1.0, %v3578
        %v3580 = vrcp.pop %v3560
        %v3581 = vmul.f32 1.0, %v3580
        %v3582 = vrcp.pop %v3561
        %v3583 = vmul.f32 1.0, %v3582
        %v3584 = vrcp.pop %v3562
        %v3585 = vmul.f32 1.0, %v3584
        %v3586 = vrcp.pop %v3563
        %v3587 = vmul.f32 1.0, %v3586
        %v3588 = vrcp.pop %v3564
        %v3589 = vmul.f32 1.0, %v3588
        %v3590 = vrcp.pop %v3565
        %v3591 = vmul.f32 1.0, %v3590
        %v3592 = vrcp.pop %v3566
        %v3593 = vmul.f32 1.0, %v3592
        %v3594 = vrcp.pop %v3567
        %v3595 = vmul.f32 1.0, %v3594
        %v3596 = vrcp.pop %v3568
        %v3597 = vmul.f32 1.0, %v3596
        %v3598 = vrcp.pop %v3569
        %v3599 = vmul.f32 1.0, %v3598
        %v3600 = vrcp.pop %v3570
        %v3601 = vmul.f32 1.0, %v3600
        %v3602 = vrcp.pop %v3571
        %v3603 = vmul.f32 1.0, %v3602
        %v3604 = vtanh.pop %v3492
        %v3605 = vtanh.pop %v3493
        %v3606 = vtanh.pop %v3494
        %v3607 = vtanh.pop %v3495
        %v3608 = vtanh.pop %v3496
        %v3609 = vtanh.pop %v3497
        %v3610 = vtanh.pop %v3498
        %v3611 = vtanh.pop %v3499
        %v3612 = vtanh.pop %v3500
        %v3613 = vtanh.pop %v3501
        %v3614 = vtanh.pop %v3502
        %v3615 = vtanh.pop %v3503
        %v3616 = vtanh.pop %v3504
        %v3617 = vtanh.pop %v3505
        %v3618 = vtanh.pop %v3506
        %v3619 = vtanh.pop %v3507
        %v3620 = vld [vmem:[%s362] sm:$0xff]
        %v3621 = vld [vmem:[%s362 + $0x8] sm:$0xff]
        %3624 = vrot.lane.b32.xlu0 %v3620, 96
        %v3625 = vpop.permute.xlu0 %3624
        %3626 = vrot.lane.b32.xlu0 %v3621, 96
        %v3627 = vpop.permute.xlu0 %3626
        %v3630 = vcombine.high %v3620, 0.0
        %v3632 = vunpack.c.l.s4 1983009808
        %v3633 = vunpack.c.0.s8 %v3632
        %v3634 = vlaneseq
        %v3635 = vshrl.u32 %v3634, 7
        %v3636 = vsub.s32 %v3633, %v3635
        %v3637 = vrot.slane %v3620, %v3636
        %v3639 = vunpack.c.l.s4 1983009808
        %v3640 = vunpack.c.0.s8 %v3639
        %v3641 = vlaneseq
        %v3642 = vshrl.u32 %v3641, 7
        %v3643 = vsub.s32 %v3640, %v3642
        %v3644 = vrot.slane %v3630, %v3643
        %v3645 = vcombine.high %v3625, 0.0
        %v3647 = vunpack.c.l.s4 1983009808
        %v3648 = vunpack.c.0.s8 %v3647
        %v3649 = vlaneseq
        %v3650 = vshrl.u32 %v3649, 7
        %v3651 = vsub.s32 %v3648, %v3650
        %v3652 = vrot.slane %v3625, %v3651
        %v3654 = vunpack.c.l.s4 1983009808
        %v3655 = vunpack.c.0.s8 %v3654
        %v3656 = vlaneseq
        %v3657 = vshrl.u32 %v3656, 7
        %v3658 = vsub.s32 %v3655, %v3657
        %v3659 = vrot.slane %v3645, %v3658
        %v3660 = vcombine.low %v3637, %v3652
        %v3661 = vcombine.high %v3637, %v3652
        %v3663 = vunpack.c.l.s4 1934713408
        %v3664 = vunpack.c.0.s8 %v3663
        %v3665 = vlaneseq
        %v3666 = vshrl.u32 %v3665, 7
        %v3667 = vsub.s32 %v3664, %v3666
        %v3668 = vrot.slane %v3660, %v3667
        %v3670 = vunpack.c.l.s4 1934713408
        %v3671 = vunpack.c.0.s8 %v3670
        %v3672 = vlaneseq
        %v3673 = vshrl.u32 %v3672, 7
        %v3674 = vsub.s32 %v3671, %v3673
        %v3675 = vrot.slane %v3661, %v3674
        %v3676 = vcombine.low %v3644, %v3659
        %v3677 = vcombine.high %v3644, %v3659
        %v3679 = vunpack.c.l.s4 1934713408
        %v3680 = vunpack.c.0.s8 %v3679
        %v3681 = vlaneseq
        %v3682 = vshrl.u32 %v3681, 7
        %v3683 = vsub.s32 %v3680, %v3682
        %v3684 = vrot.slane %v3676, %v3683
        %v3686 = vunpack.c.l.s4 1934713408
        %v3687 = vunpack.c.0.s8 %v3686
        %v3688 = vlaneseq
        %v3689 = vshrl.u32 %v3688, 7
        %v3690 = vsub.s32 %v3687, %v3689
        %v3691 = vrot.slane %v3677, %v3690
        %v3692 = vcombine.high %v3668, 0.0
        %v3693 = vcombine.high %v3675, 0.0
        %v3694 = vcombine.high %v3684, 0.0
        %v3695 = vcombine.high %v3691, 0.0
        %v3696 = vcombine.high %v3621, 0.0
        %v3698 = vunpack.c.l.s4 1983009808
        %v3699 = vunpack.c.0.s8 %v3698
        %v3700 = vlaneseq
        %v3701 = vshrl.u32 %v3700, 7
        %v3702 = vsub.s32 %v3699, %v3701
        %v3703 = vrot.slane %v3621, %v3702
        %v3705 = vunpack.c.l.s4 1983009808
        %v3706 = vunpack.c.0.s8 %v3705
        %v3707 = vlaneseq
        %v3708 = vshrl.u32 %v3707, 7
        %v3709 = vsub.s32 %v3706, %v3708
        %v3710 = vrot.slane %v3696, %v3709
        %v3711 = vcombine.high %v3627, 0.0
        %v3713 = vunpack.c.l.s4 1983009808
        %v3714 = vunpack.c.0.s8 %v3713
        %v3715 = vlaneseq
        %v3716 = vshrl.u32 %v3715, 7
        %v3717 = vsub.s32 %v3714, %v3716
        %v3718 = vrot.slane %v3627, %v3717
        %v3720 = vunpack.c.l.s4 1983009808
        %v3721 = vunpack.c.0.s8 %v3720
        %v3722 = vlaneseq
        %v3723 = vshrl.u32 %v3722, 7
        %v3724 = vsub.s32 %v3721, %v3723
        %v3725 = vrot.slane %v3711, %v3724
        %v3726 = vcombine.low %v3703, %v3718
        %v3727 = vcombine.high %v3703, %v3718
        %v3729 = vunpack.c.l.s4 1934713408
        %v3730 = vunpack.c.0.s8 %v3729
        %v3731 = vlaneseq
        %v3732 = vshrl.u32 %v3731, 7
        %v3733 = vsub.s32 %v3730, %v3732
        %v3734 = vrot.slane %v3726, %v3733
        %v3736 = vunpack.c.l.s4 1934713408
        %v3737 = vunpack.c.0.s8 %v3736
        %v3738 = vlaneseq
        %v3739 = vshrl.u32 %v3738, 7
        %v3740 = vsub.s32 %v3737, %v3739
        %v3741 = vrot.slane %v3727, %v3740
        %v3742 = vcombine.low %v3710, %v3725
        %v3743 = vcombine.high %v3710, %v3725
        %v3745 = vunpack.c.l.s4 1934713408
        %v3746 = vunpack.c.0.s8 %v3745
        %v3747 = vlaneseq
        %v3748 = vshrl.u32 %v3747, 7
        %v3749 = vsub.s32 %v3746, %v3748
        %v3750 = vrot.slane %v3742, %v3749
        %v3752 = vunpack.c.l.s4 1934713408
        %v3753 = vunpack.c.0.s8 %v3752
        %v3754 = vlaneseq
        %v3755 = vshrl.u32 %v3754, 7
        %v3756 = vsub.s32 %v3753, %v3755
        %v3757 = vrot.slane %v3743, %v3756
        %v3758 = vcombine.high %v3734, 0.0
        %v3759 = vcombine.high %v3741, 0.0
        %v3760 = vcombine.high %v3750, 0.0
        %v3761 = vcombine.high %v3757, 0.0
        %v3779 = vunpack.c.l.s4 1983009808
        %v3780 = vunpack.c.0.s8 %v3779
        %v3781 = vlaneseq
        %v3782 = vshrl.u32 %v3781, 7
        %v3783 = vsub.s32 %v3780, %v3782
        %v3784 = vrot.slane %v3668, %v3783
        %v3786 = vunpack.c.l.s4 1983009808
        %v3787 = vunpack.c.0.s8 %v3786
        %v3788 = vlaneseq
        %v3789 = vshrl.u32 %v3788, 7
        %v3790 = vsub.s32 %v3787, %v3789
        %v3791 = vrot.slane %v3692, %v3790
        %v3793 = vunpack.c.l.s4 1983009808
        %v3794 = vunpack.c.0.s8 %v3793
        %v3795 = vlaneseq
        %v3796 = vshrl.u32 %v3795, 7
        %v3797 = vsub.s32 %v3794, %v3796
        %v3798 = vrot.slane %v3675, %v3797
        %v3800 = vunpack.c.l.s4 1983009808
        %v3801 = vunpack.c.0.s8 %v3800
        %v3802 = vlaneseq
        %v3803 = vshrl.u32 %v3802, 7
        %v3804 = vsub.s32 %v3801, %v3803
        %v3805 = vrot.slane %v3693, %v3804
        %v3807 = vunpack.c.l.s4 1983009808
        %v3808 = vunpack.c.0.s8 %v3807
        %v3809 = vlaneseq
        %v3810 = vshrl.u32 %v3809, 7
        %v3811 = vsub.s32 %v3808, %v3810
        %v3812 = vrot.slane %v3684, %v3811
        %v3814 = vunpack.c.l.s4 1983009808
        %v3815 = vunpack.c.0.s8 %v3814
        %v3816 = vlaneseq
        %v3817 = vshrl.u32 %v3816, 7
        %v3818 = vsub.s32 %v3815, %v3817
        %v3819 = vrot.slane %v3694, %v3818
        %v3821 = vunpack.c.l.s4 1983009808
        %v3822 = vunpack.c.0.s8 %v3821
        %v3823 = vlaneseq
        %v3824 = vshrl.u32 %v3823, 7
        %v3825 = vsub.s32 %v3822, %v3824
        %v3826 = vrot.slane %v3691, %v3825
        %v3828 = vunpack.c.l.s4 1983009808
        %v3829 = vunpack.c.0.s8 %v3828
        %v3830 = vlaneseq
        %v3831 = vshrl.u32 %v3830, 7
        %v3832 = vsub.s32 %v3829, %v3831
        %v3833 = vrot.slane %v3695, %v3832
        %v3835 = vunpack.c.l.s4 1983009808
        %v3836 = vunpack.c.0.s8 %v3835
        %v3837 = vlaneseq
        %v3838 = vshrl.u32 %v3837, 7
        %v3839 = vsub.s32 %v3836, %v3838
        %v3840 = vrot.slane %v3734, %v3839
        %v3842 = vunpack.c.l.s4 1983009808
        %v3843 = vunpack.c.0.s8 %v3842
        %v3844 = vlaneseq
        %v3845 = vshrl.u32 %v3844, 7
        %v3846 = vsub.s32 %v3843, %v3845
        %v3847 = vrot.slane %v3758, %v3846
        %v3849 = vunpack.c.l.s4 1983009808
        %v3850 = vunpack.c.0.s8 %v3849
        %v3851 = vlaneseq
        %v3852 = vshrl.u32 %v3851, 7
        %v3853 = vsub.s32 %v3850, %v3852
        %v3854 = vrot.slane %v3741, %v3853
        %v3856 = vunpack.c.l.s4 1983009808
        %v3857 = vunpack.c.0.s8 %v3856
        %v3858 = vlaneseq
        %v3859 = vshrl.u32 %v3858, 7
        %v3860 = vsub.s32 %v3857, %v3859
        %v3861 = vrot.slane %v3759, %v3860
        %v3863 = vunpack.c.l.s4 1983009808
        %v3864 = vunpack.c.0.s8 %v3863
        %v3865 = vlaneseq
        %v3866 = vshrl.u32 %v3865, 7
        %v3867 = vsub.s32 %v3864, %v3866
        %v3868 = vrot.slane %v3750, %v3867
        %v3870 = vunpack.c.l.s4 1983009808
        %v3871 = vunpack.c.0.s8 %v3870
        %v3872 = vlaneseq
        %v3873 = vshrl.u32 %v3872, 7
        %v3874 = vsub.s32 %v3871, %v3873
        %v3875 = vrot.slane %v3760, %v3874
        %v3877 = vunpack.c.l.s4 1983009808
        %v3878 = vunpack.c.0.s8 %v3877
        %v3879 = vlaneseq
        %v3880 = vshrl.u32 %v3879, 7
        %v3881 = vsub.s32 %v3878, %v3880
        %v3882 = vrot.slane %v3757, %v3881
        %v3884 = vunpack.c.l.s4 1983009808
        %v3885 = vunpack.c.0.s8 %v3884
        %v3886 = vlaneseq
        %v3887 = vshrl.u32 %v3886, 7
        %v3888 = vsub.s32 %v3885, %v3887
        %v3889 = vrot.slane %v3761, %v3888
        %3890 = vrot.lane.b32.xlu0 %v3784, 32
        %v3891 = vpop.permute.xlu0 %3890
        %3892 = vrot.lane.b32.xlu0 %v3791, 32
        %v3893 = vpop.permute.xlu0 %3892
        %3894 = vrot.lane.b32.xlu0 %v3798, 32
        %v3895 = vpop.permute.xlu0 %3894
        %3896 = vrot.lane.b32.xlu0 %v3805, 32
        %v3897 = vpop.permute.xlu0 %3896
        %3898 = vrot.lane.b32.xlu0 %v3812, 32
        %v3899 = vpop.permute.xlu0 %3898
        %3900 = vrot.lane.b32.xlu0 %v3819, 32
        %v3901 = vpop.permute.xlu0 %3900
        %3902 = vrot.lane.b32.xlu0 %v3826, 32
        %v3903 = vpop.permute.xlu0 %3902
        %3904 = vrot.lane.b32.xlu0 %v3833, 32
        %v3905 = vpop.permute.xlu0 %3904
        %3906 = vrot.lane.b32.xlu0 %v3840, 32
        %v3907 = vpop.permute.xlu0 %3906
        %3908 = vrot.lane.b32.xlu0 %v3847, 32
        %v3909 = vpop.permute.xlu0 %3908
        %3910 = vrot.lane.b32.xlu0 %v3854, 32
        %v3911 = vpop.permute.xlu0 %3910
        %3912 = vrot.lane.b32.xlu0 %v3861, 32
        %v3913 = vpop.permute.xlu0 %3912
        %3914 = vrot.lane.b32.xlu0 %v3868, 32
        %v3915 = vpop.permute.xlu0 %3914
        %3916 = vrot.lane.b32.xlu0 %v3875, 32
        %v3917 = vpop.permute.xlu0 %3916
        %3918 = vrot.lane.b32.xlu0 %v3882, 32
        %v3919 = vpop.permute.xlu0 %3918
        %3920 = vrot.lane.b32.xlu0 %v3889, 32
        %v3921 = vpop.permute.xlu0 %3920
        %v3938 = vmul.f32 %v3573, %v3891
        %v3939 = vmul.f32 %v3575, %v3893
        %v3940 = vmul.f32 %v3577, %v3895
        %v3941 = vmul.f32 %v3579, %v3897
        %v3942 = vmul.f32 %v3581, %v3899
        %v3943 = vmul.f32 %v3583, %v3901
        %v3944 = vmul.f32 %v3585, %v3903
        %v3945 = vmul.f32 %v3587, %v3905
        %v3946 = vmul.f32 %v3589, %v3907
        %v3947 = vmul.f32 %v3591, %v3909
        %v3948 = vmul.f32 %v3593, %v3911
        %v3949 = vmul.f32 %v3595, %v3913
        %v3950 = vmul.f32 %v3597, %v3915
        %v3951 = vmul.f32 %v3599, %v3917
        %v3952 = vmul.f32 %v3601, %v3919
        %v3953 = vmul.f32 %v3603, %v3921
        %3970 = vrot.lane.b32.xlu0 %v3604, 64
        %v3971 = vpop.permute.xlu0 %3970
        %3972 = vrot.lane.b32.xlu0 %v3605, 64
        %v3973 = vpop.permute.xlu0 %3972
        %3974 = vrot.lane.b32.xlu0 %v3606, 64
        %v3975 = vpop.permute.xlu0 %3974
        %3976 = vrot.lane.b32.xlu0 %v3607, 64
        %v3977 = vpop.permute.xlu0 %3976
        %3978 = vrot.lane.b32.xlu0 %v3608, 64
        %v3979 = vpop.permute.xlu0 %3978
        %3980 = vrot.lane.b32.xlu0 %v3609, 64
        %v3981 = vpop.permute.xlu0 %3980
        %3982 = vrot.lane.b32.xlu0 %v3610, 64
        %v3983 = vpop.permute.xlu0 %3982
        %3984 = vrot.lane.b32.xlu0 %v3611, 64
        %v3985 = vpop.permute.xlu0 %3984
        %3986 = vrot.lane.b32.xlu0 %v3612, 64
        %v3987 = vpop.permute.xlu0 %3986
        %3988 = vrot.lane.b32.xlu0 %v3613, 64
        %v3989 = vpop.permute.xlu0 %3988
        %3990 = vrot.lane.b32.xlu0 %v3614, 64
        %v3991 = vpop.permute.xlu0 %3990
        %3992 = vrot.lane.b32.xlu0 %v3615, 64
        %v3993 = vpop.permute.xlu0 %3992
        %3994 = vrot.lane.b32.xlu0 %v3616, 64
        %v3995 = vpop.permute.xlu0 %3994
        %3996 = vrot.lane.b32.xlu0 %v3617, 64
        %v3997 = vpop.permute.xlu0 %3996
        %3998 = vrot.lane.b32.xlu0 %v3618, 64
        %v3999 = vpop.permute.xlu0 %3998
        %4000 = vrot.lane.b32.xlu0 %v3619, 64
        %v4001 = vpop.permute.xlu0 %4000
        %v4018 = vmul.f32 %v3573, %v3971
        %v4019 = vmul.f32 %v3575, %v3973
        %v4020 = vmul.f32 %v3577, %v3975
        %v4021 = vmul.f32 %v3579, %v3977
        %v4022 = vmul.f32 %v3581, %v3979
        %v4023 = vmul.f32 %v3583, %v3981
        %v4024 = vmul.f32 %v3585, %v3983
        %v4025 = vmul.f32 %v3587, %v3985
        %v4026 = vmul.f32 %v3589, %v3987
        %v4027 = vmul.f32 %v3591, %v3989
        %v4028 = vmul.f32 %v3593, %v3991
        %v4029 = vmul.f32 %v3595, %v3993
        %v4030 = vmul.f32 %v3597, %v3995
        %v4031 = vmul.f32 %v3599, %v3997
        %v4032 = vmul.f32 %v3601, %v3999
        %v4033 = vmul.f32 %v3603, %v4001
        %4050 = vrot.lane.b32.xlu0 %v4018, 32
        %v4051 = vpop.permute.xlu0 %4050
        %4052 = vrot.lane.b32.xlu0 %v4019, 32
        %v4053 = vpop.permute.xlu0 %4052
        %4054 = vrot.lane.b32.xlu0 %v4020, 32
        %v4055 = vpop.permute.xlu0 %4054
        %4056 = vrot.lane.b32.xlu0 %v4021, 32
        %v4057 = vpop.permute.xlu0 %4056
        %4058 = vrot.lane.b32.xlu0 %v4022, 32
        %v4059 = vpop.permute.xlu0 %4058
        %4060 = vrot.lane.b32.xlu0 %v4023, 32
        %v4061 = vpop.permute.xlu0 %4060
        %4062 = vrot.lane.b32.xlu0 %v4024, 32
        %v4063 = vpop.permute.xlu0 %4062
        %4064 = vrot.lane.b32.xlu0 %v4025, 32
        %v4065 = vpop.permute.xlu0 %4064
        %4066 = vrot.lane.b32.xlu0 %v4026, 32
        %v4067 = vpop.permute.xlu0 %4066
        %4068 = vrot.lane.b32.xlu0 %v4027, 32
        %v4069 = vpop.permute.xlu0 %4068
        %4070 = vrot.lane.b32.xlu0 %v4028, 32
        %v4071 = vpop.permute.xlu0 %4070
        %4072 = vrot.lane.b32.xlu0 %v4029, 32
        %v4073 = vpop.permute.xlu0 %4072
        %4074 = vrot.lane.b32.xlu0 %v4030, 32
        %v4075 = vpop.permute.xlu0 %4074
        %4076 = vrot.lane.b32.xlu0 %v4031, 32
        %v4077 = vpop.permute.xlu0 %4076
        %4078 = vrot.lane.b32.xlu0 %v4032, 32
        %v4079 = vpop.permute.xlu0 %4078
        %4080 = vrot.lane.b32.xlu0 %v4033, 32
        %v4081 = vpop.permute.xlu0 %4080
        %v4098 = vadd.f32 %v3938, %v4051
        %v4099 = vadd.f32 %v3939, %v4053
        %v4100 = vadd.f32 %v3940, %v4055
        %v4101 = vadd.f32 %v3941, %v4057
        %v4102 = vadd.f32 %v3942, %v4059
        %v4103 = vadd.f32 %v3943, %v4061
        %v4104 = vadd.f32 %v3944, %v4063
        %v4105 = vadd.f32 %v3945, %v4065
        %v4106 = vadd.f32 %v3946, %v4067
        %v4107 = vadd.f32 %v3947, %v4069
        %v4108 = vadd.f32 %v3948, %v4071
        %v4109 = vadd.f32 %v3949, %v4073
        %v4110 = vadd.f32 %v3950, %v4075
        %v4111 = vadd.f32 %v3951, %v4077
        %v4112 = vadd.f32 %v3952, %v4079
        %v4113 = vadd.f32 %v3953, %v4081
        %v4114 = vtanh.pop %v4098
        %v4115 = vtanh.pop %v4099
        %v4116 = vtanh.pop %v4100
        %v4117 = vtanh.pop %v4101
        %v4118 = vtanh.pop %v4102
        %v4119 = vtanh.pop %v4103
        %v4120 = vtanh.pop %v4104
        %v4121 = vtanh.pop %v4105
        %v4122 = vtanh.pop %v4106
        %v4123 = vtanh.pop %v4107
        %v4124 = vtanh.pop %v4108
        %v4125 = vtanh.pop %v4109
        %v4126 = vtanh.pop %v4110
        %v4127 = vtanh.pop %v4111
        %v4128 = vtanh.pop %v4112
        %v4129 = vtanh.pop %v4113
        %4146 = vrot.lane.b32.xlu0 %v4114, 64
        %v4147 = vpop.permute.xlu0 %4146
        %4148 = vrot.lane.b32.xlu0 %v4115, 64
        %v4149 = vpop.permute.xlu0 %4148
        %4150 = vrot.lane.b32.xlu0 %v4116, 64
        %v4151 = vpop.permute.xlu0 %4150
        %4152 = vrot.lane.b32.xlu0 %v4117, 64
        %v4153 = vpop.permute.xlu0 %4152
        %4154 = vrot.lane.b32.xlu0 %v4118, 64
        %v4155 = vpop.permute.xlu0 %4154
        %4156 = vrot.lane.b32.xlu0 %v4119, 64
        %v4157 = vpop.permute.xlu0 %4156
        %4158 = vrot.lane.b32.xlu0 %v4120, 64
        %v4159 = vpop.permute.xlu0 %4158
        %4160 = vrot.lane.b32.xlu0 %v4121, 64
        %v4161 = vpop.permute.xlu0 %4160
        %4162 = vrot.lane.b32.xlu0 %v4122, 64
        %v4163 = vpop.permute.xlu0 %4162
        %4164 = vrot.lane.b32.xlu0 %v4123, 64
        %v4165 = vpop.permute.xlu0 %4164
        %4166 = vrot.lane.b32.xlu0 %v4124, 64
        %v4167 = vpop.permute.xlu0 %4166
        %4168 = vrot.lane.b32.xlu0 %v4125, 64
        %v4169 = vpop.permute.xlu0 %4168
        %4170 = vrot.lane.b32.xlu0 %v4126, 64
        %v4171 = vpop.permute.xlu0 %4170
        %4172 = vrot.lane.b32.xlu0 %v4127, 64
        %v4173 = vpop.permute.xlu0 %4172
        %4174 = vrot.lane.b32.xlu0 %v4128, 64
        %v4175 = vpop.permute.xlu0 %4174
        %4176 = vrot.lane.b32.xlu0 %v4129, 64
        %v4177 = vpop.permute.xlu0 %4176
        %v4194 = vmul.f32 %v3573, %v4147
        %v4195 = vmul.f32 %v3575, %v4149
        %v4196 = vmul.f32 %v3577, %v4151
        %v4197 = vmul.f32 %v3579, %v4153
        %v4198 = vmul.f32 %v3581, %v4155
        %v4199 = vmul.f32 %v3583, %v4157
        %v4200 = vmul.f32 %v3585, %v4159
        %v4201 = vmul.f32 %v3587, %v4161
        %v4202 = vmul.f32 %v3589, %v4163
        %v4203 = vmul.f32 %v3591, %v4165
        %v4204 = vmul.f32 %v3593, %v4167
        %v4205 = vmul.f32 %v3595, %v4169
        %v4206 = vmul.f32 %v3597, %v4171
        %v4207 = vmul.f32 %v3599, %v4173
        %v4208 = vmul.f32 %v3601, %v4175
        %v4209 = vmul.f32 %v3603, %v4177
        %4226 = vrot.lane.b32.xlu0 %v4194, 32
        %v4227 = vpop.permute.xlu0 %4226
        %4228 = vrot.lane.b32.xlu0 %v4195, 32
        %v4229 = vpop.permute.xlu0 %4228
        %4230 = vrot.lane.b32.xlu0 %v4196, 32
        %v4231 = vpop.permute.xlu0 %4230
        %4232 = vrot.lane.b32.xlu0 %v4197, 32
        %v4233 = vpop.permute.xlu0 %4232
        %4234 = vrot.lane.b32.xlu0 %v4198, 32
        %v4235 = vpop.permute.xlu0 %4234
        %4236 = vrot.lane.b32.xlu0 %v4199, 32
        %v4237 = vpop.permute.xlu0 %4236
        %4238 = vrot.lane.b32.xlu0 %v4200, 32
        %v4239 = vpop.permute.xlu0 %4238
        %4240 = vrot.lane.b32.xlu0 %v4201, 32
        %v4241 = vpop.permute.xlu0 %4240
        %4242 = vrot.lane.b32.xlu0 %v4202, 32
        %v4243 = vpop.permute.xlu0 %4242
        %4244 = vrot.lane.b32.xlu0 %v4203, 32
        %v4245 = vpop.permute.xlu0 %4244
        %4246 = vrot.lane.b32.xlu0 %v4204, 32
        %v4247 = vpop.permute.xlu0 %4246
        %4248 = vrot.lane.b32.xlu0 %v4205, 32
        %v4249 = vpop.permute.xlu0 %4248
        %4250 = vrot.lane.b32.xlu0 %v4206, 32
        %v4251 = vpop.permute.xlu0 %4250
        %4252 = vrot.lane.b32.xlu0 %v4207, 32
        %v4253 = vpop.permute.xlu0 %4252
        %4254 = vrot.lane.b32.xlu0 %v4208, 32
        %v4255 = vpop.permute.xlu0 %4254
        %4256 = vrot.lane.b32.xlu0 %v4209, 32
        %v4257 = vpop.permute.xlu0 %4256
        %v4274 = vcombine.low %v4227, %v4229
        %v4276 = vunpack.c.l.s4 1934713408
        %v4277 = vunpack.c.0.s8 %v4276
        %v4278 = vlaneseq
        %v4279 = vshrl.u32 %v4278, 7
        %v4280 = vsub.s32 %v4277, %v4279
        %v4281 = vrot.slane %v4274, %v4280
        %v4282 = vcombine.high %v4281, 0.0
        %v4283 = vcombine.low %v4231, %v4233
        %v4285 = vunpack.c.l.s4 1934713408
        %v4286 = vunpack.c.0.s8 %v4285
        %v4287 = vlaneseq
        %v4288 = vshrl.u32 %v4287, 7
        %v4289 = vsub.s32 %v4286, %v4288
        %v4290 = vrot.slane %v4283, %v4289
        %v4291 = vcombine.high %v4290, 0.0
        %v4292 = vcombine.low %v4235, %v4237
        %v4294 = vunpack.c.l.s4 1934713408
        %v4295 = vunpack.c.0.s8 %v4294
        %v4296 = vlaneseq
        %v4297 = vshrl.u32 %v4296, 7
        %v4298 = vsub.s32 %v4295, %v4297
        %v4299 = vrot.slane %v4292, %v4298
        %v4300 = vcombine.high %v4299, 0.0
        %v4301 = vcombine.low %v4239, %v4241
        %v4303 = vunpack.c.l.s4 1934713408
        %v4304 = vunpack.c.0.s8 %v4303
        %v4305 = vlaneseq
        %v4306 = vshrl.u32 %v4305, 7
        %v4307 = vsub.s32 %v4304, %v4306
        %v4308 = vrot.slane %v4301, %v4307
        %v4309 = vcombine.high %v4308, 0.0
        %v4310 = vcombine.low %v4243, %v4245
        %v4312 = vunpack.c.l.s4 1934713408
        %v4313 = vunpack.c.0.s8 %v4312
        %v4314 = vlaneseq
        %v4315 = vshrl.u32 %v4314, 7
        %v4316 = vsub.s32 %v4313, %v4315
        %v4317 = vrot.slane %v4310, %v4316
        %v4318 = vcombine.high %v4317, 0.0
        %v4319 = vcombine.low %v4247, %v4249
        %v4321 = vunpack.c.l.s4 1934713408
        %v4322 = vunpack.c.0.s8 %v4321
        %v4323 = vlaneseq
        %v4324 = vshrl.u32 %v4323, 7
        %v4325 = vsub.s32 %v4322, %v4324
        %v4326 = vrot.slane %v4319, %v4325
        %v4327 = vcombine.high %v4326, 0.0
        %v4328 = vcombine.low %v4251, %v4253
        %v4330 = vunpack.c.l.s4 1934713408
        %v4331 = vunpack.c.0.s8 %v4330
        %v4332 = vlaneseq
        %v4333 = vshrl.u32 %v4332, 7
        %v4334 = vsub.s32 %v4331, %v4333
        %v4335 = vrot.slane %v4328, %v4334
        %v4336 = vcombine.high %v4335, 0.0
        %v4337 = vcombine.low %v4255, %v4257
        %v4339 = vunpack.c.l.s4 1934713408
        %v4340 = vunpack.c.0.s8 %v4339
        %v4341 = vlaneseq
        %v4342 = vshrl.u32 %v4341, 7
        %v4343 = vsub.s32 %v4340, %v4342
        %v4344 = vrot.slane %v4337, %v4343
        %v4345 = vcombine.high %v4344, 0.0
        %v4354 = vcombine.low %v4281, %v4290
        %v4355 = vcombine.low %v4299, %v4308
        %v4357 = vunpack.c.l.s4 1983009808
        %v4358 = vunpack.c.0.s8 %v4357
        %v4359 = vlaneseq
        %v4360 = vshrl.u32 %v4359, 7
        %v4361 = vsub.s32 %v4358, %v4360
        %v4362 = vrot.slane %v4354, %v4361
        %v4364 = vunpack.c.l.s4 1983009808
        %v4365 = vunpack.c.0.s8 %v4364
        %v4366 = vlaneseq
        %v4367 = vshrl.u32 %v4366, 7
        %v4368 = vsub.s32 %v4365, %v4367
        %v4369 = vrot.slane %v4355, %v4368
        %v4370 = vcombine.low %v4362, %v4369
        %v4371 = vcombine.low %v4317, %v4326
        %v4372 = vcombine.low %v4335, %v4344
        %v4374 = vunpack.c.l.s4 1983009808
        %v4375 = vunpack.c.0.s8 %v4374
        %v4376 = vlaneseq
        %v4377 = vshrl.u32 %v4376, 7
        %v4378 = vsub.s32 %v4375, %v4377
        %v4379 = vrot.slane %v4371, %v4378
        %v4381 = vunpack.c.l.s4 1983009808
        %v4382 = vunpack.c.0.s8 %v4381
        %v4383 = vlaneseq
        %v4384 = vshrl.u32 %v4383, 7
        %v4385 = vsub.s32 %v4382, %v4384
        %v4386 = vrot.slane %v4372, %v4385
        %v4387 = vcombine.low %v4379, %v4386
        %v4398 = vcombine.low %v4282, %v4291
        %v4399 = vcombine.low %v4300, %v4309
        %v4401 = vunpack.c.l.s4 1983009808
        %v4402 = vunpack.c.0.s8 %v4401
        %v4403 = vlaneseq
        %v4404 = vshrl.u32 %v4403, 7
        %v4405 = vsub.s32 %v4402, %v4404
        %v4406 = vrot.slane %v4398, %v4405
        %v4408 = vunpack.c.l.s4 1983009808
        %v4409 = vunpack.c.0.s8 %v4408
        %v4410 = vlaneseq
        %v4411 = vshrl.u32 %v4410, 7
        %v4412 = vsub.s32 %v4409, %v4411
        %v4413 = vrot.slane %v4399, %v4412
        %v4414 = vcombine.low %v4406, %v4413
        %v4415 = vcombine.low %v4318, %v4327
        %v4416 = vcombine.low %v4336, %v4345
        %v4418 = vunpack.c.l.s4 1983009808
        %v4419 = vunpack.c.0.s8 %v4418
        %v4420 = vlaneseq
        %v4421 = vshrl.u32 %v4420, 7
        %v4422 = vsub.s32 %v4419, %v4421
        %v4423 = vrot.slane %v4415, %v4422
        %v4425 = vunpack.c.l.s4 1983009808
        %v4426 = vunpack.c.0.s8 %v4425
        %v4427 = vlaneseq
        %v4428 = vshrl.u32 %v4427, 7
        %v4429 = vsub.s32 %v4426, %v4428
        %v4430 = vrot.slane %v4416, %v4429
        %v4431 = vcombine.low %v4423, %v4430
        %4432 = vrot.lane.b32.xlu0 %v4414, 32
        %v4433 = vpop.permute.xlu0 %4432
        %4434 = vrot.lane.b32.xlu0 %v4431, 32
        %v4435 = vpop.permute.xlu0 %4434
        %v4438 = vsel %vm466, %v4370, %v4433
        %v4439 = vsel %vm466, %v4387, %v4435
        %v4440 = vpack.c.bf16 %v4439, %v4438
        %v4442 = vunpack.c.l.b16 %v4440
        %v4443 = vunpack.c.h.b16 %v4440
        %v4444 = vpack.c.b16 %v4442, %v4442
        %v4445 = vpack.c.b16 %v4443, %v4443
        %vm4448 = vcmask 519168
        %4449 = vst.msk [vmem:[%s405] sm:$0xf] %vm4448, %v4444
        %4450 = vst.msk [vmem:[%s405 + $0x4] sm:$0xf] %vm4448, %v4445
        %4467 = vrot.lane.b32.xlu0 %v4098, 96
        %v4468 = vpop.permute.xlu0 %4467
        %4469 = vrot.lane.b32.xlu0 %v4099, 96
        %v4470 = vpop.permute.xlu0 %4469
        %4471 = vrot.lane.b32.xlu0 %v4100, 96
        %v4472 = vpop.permute.xlu0 %4471
        %4473 = vrot.lane.b32.xlu0 %v4101, 96
        %v4474 = vpop.permute.xlu0 %4473
        %4475 = vrot.lane.b32.xlu0 %v4102, 96
        %v4476 = vpop.permute.xlu0 %4475
        %4477 = vrot.lane.b32.xlu0 %v4103, 96
        %v4478 = vpop.permute.xlu0 %4477
        %4479 = vrot.lane.b32.xlu0 %v4104, 96
        %v4480 = vpop.permute.xlu0 %4479
        %4481 = vrot.lane.b32.xlu0 %v4105, 96
        %v4482 = vpop.permute.xlu0 %4481
        %4483 = vrot.lane.b32.xlu0 %v4106, 96
        %v4484 = vpop.permute.xlu0 %4483
        %4485 = vrot.lane.b32.xlu0 %v4107, 96
        %v4486 = vpop.permute.xlu0 %4485
        %4487 = vrot.lane.b32.xlu0 %v4108, 96
        %v4488 = vpop.permute.xlu0 %4487
        %4489 = vrot.lane.b32.xlu0 %v4109, 96
        %v4490 = vpop.permute.xlu0 %4489
        %4491 = vrot.lane.b32.xlu0 %v4110, 96
        %v4492 = vpop.permute.xlu0 %4491
        %4493 = vrot.lane.b32.xlu0 %v4111, 96
        %v4494 = vpop.permute.xlu0 %4493
        %4495 = vrot.lane.b32.xlu0 %v4112, 96
        %v4496 = vpop.permute.xlu0 %4495
        %4497 = vrot.lane.b32.xlu0 %v4113, 96
        %v4498 = vpop.permute.xlu0 %4497
        %v4515 = vcombine.low %v4468, %v4470
        %v4517 = vunpack.c.l.s4 1934713408
        %v4518 = vunpack.c.0.s8 %v4517
        %v4519 = vlaneseq
        %v4520 = vshrl.u32 %v4519, 7
        %v4521 = vsub.s32 %v4518, %v4520
        %v4522 = vrot.slane %v4515, %v4521
        %v4523 = vcombine.high %v4522, 0.0
        %v4524 = vcombine.low %v4472, %v4474
        %v4526 = vunpack.c.l.s4 1934713408
        %v4527 = vunpack.c.0.s8 %v4526
        %v4528 = vlaneseq
        %v4529 = vshrl.u32 %v4528, 7
        %v4530 = vsub.s32 %v4527, %v4529
        %v4531 = vrot.slane %v4524, %v4530
        %v4532 = vcombine.high %v4531, 0.0
        %v4533 = vcombine.low %v4476, %v4478
        %v4535 = vunpack.c.l.s4 1934713408
        %v4536 = vunpack.c.0.s8 %v4535
        %v4537 = vlaneseq
        %v4538 = vshrl.u32 %v4537, 7
        %v4539 = vsub.s32 %v4536, %v4538
        %v4540 = vrot.slane %v4533, %v4539
        %v4541 = vcombine.high %v4540, 0.0
        %v4542 = vcombine.low %v4480, %v4482
        %v4544 = vunpack.c.l.s4 1934713408
        %v4545 = vunpack.c.0.s8 %v4544
        %v4546 = vlaneseq
        %v4547 = vshrl.u32 %v4546, 7
        %v4548 = vsub.s32 %v4545, %v4547
        %v4549 = vrot.slane %v4542, %v4548
        %v4550 = vcombine.high %v4549, 0.0
        %v4551 = vcombine.low %v4484, %v4486
        %v4553 = vunpack.c.l.s4 1934713408
        %v4554 = vunpack.c.0.s8 %v4553
        %v4555 = vlaneseq
        %v4556 = vshrl.u32 %v4555, 7
        %v4557 = vsub.s32 %v4554, %v4556
        %v4558 = vrot.slane %v4551, %v4557
        %v4559 = vcombine.high %v4558, 0.0
        %v4560 = vcombine.low %v4488, %v4490
        %v4562 = vunpack.c.l.s4 1934713408
        %v4563 = vunpack.c.0.s8 %v4562
        %v4564 = vlaneseq
        %v4565 = vshrl.u32 %v4564, 7
        %v4566 = vsub.s32 %v4563, %v4565
        %v4567 = vrot.slane %v4560, %v4566
        %v4568 = vcombine.high %v4567, 0.0
        %v4569 = vcombine.low %v4492, %v4494
        %v4571 = vunpack.c.l.s4 1934713408
        %v4572 = vunpack.c.0.s8 %v4571
        %v4573 = vlaneseq
        %v4574 = vshrl.u32 %v4573, 7
        %v4575 = vsub.s32 %v4572, %v4574
        %v4576 = vrot.slane %v4569, %v4575
        %v4577 = vcombine.high %v4576, 0.0
        %v4578 = vcombine.low %v4496, %v4498
        %v4580 = vunpack.c.l.s4 1934713408
        %v4581 = vunpack.c.0.s8 %v4580
        %v4582 = vlaneseq
        %v4583 = vshrl.u32 %v4582, 7
        %v4584 = vsub.s32 %v4581, %v4583
        %v4585 = vrot.slane %v4578, %v4584
        %v4586 = vcombine.high %v4585, 0.0
        %v4595 = vcombine.low %v4522, %v4531
        %v4596 = vcombine.low %v4540, %v4549
        %v4598 = vunpack.c.l.s4 1983009808
        %v4599 = vunpack.c.0.s8 %v4598
        %v4600 = vlaneseq
        %v4601 = vshrl.u32 %v4600, 7
        %v4602 = vsub.s32 %v4599, %v4601
        %v4603 = vrot.slane %v4595, %v4602
        %v4605 = vunpack.c.l.s4 1983009808
        %v4606 = vunpack.c.0.s8 %v4605
        %v4607 = vlaneseq
        %v4608 = vshrl.u32 %v4607, 7
        %v4609 = vsub.s32 %v4606, %v4608
        %v4610 = vrot.slane %v4596, %v4609
        %v4611 = vcombine.low %v4603, %v4610
        %v4612 = vcombine.low %v4558, %v4567
        %v4613 = vcombine.low %v4576, %v4585
        %v4615 = vunpack.c.l.s4 1983009808
        %v4616 = vunpack.c.0.s8 %v4615
        %v4617 = vlaneseq
        %v4618 = vshrl.u32 %v4617, 7
        %v4619 = vsub.s32 %v4616, %v4618
        %v4620 = vrot.slane %v4612, %v4619
        %v4622 = vunpack.c.l.s4 1983009808
        %v4623 = vunpack.c.0.s8 %v4622
        %v4624 = vlaneseq
        %v4625 = vshrl.u32 %v4624, 7
        %v4626 = vsub.s32 %v4623, %v4625
        %v4627 = vrot.slane %v4613, %v4626
        %v4628 = vcombine.low %v4620, %v4627
        %v4639 = vcombine.low %v4523, %v4532
        %v4640 = vcombine.low %v4541, %v4550
        %v4642 = vunpack.c.l.s4 1983009808
        %v4643 = vunpack.c.0.s8 %v4642
        %v4644 = vlaneseq
        %v4645 = vshrl.u32 %v4644, 7
        %v4646 = vsub.s32 %v4643, %v4645
        %v4647 = vrot.slane %v4639, %v4646
        %v4649 = vunpack.c.l.s4 1983009808
        %v4650 = vunpack.c.0.s8 %v4649
        %v4651 = vlaneseq
        %v4652 = vshrl.u32 %v4651, 7
        %v4653 = vsub.s32 %v4650, %v4652
        %v4654 = vrot.slane %v4640, %v4653
        %v4655 = vcombine.low %v4647, %v4654
        %v4656 = vcombine.low %v4559, %v4568
        %v4657 = vcombine.low %v4577, %v4586
        %v4659 = vunpack.c.l.s4 1983009808
        %v4660 = vunpack.c.0.s8 %v4659
        %v4661 = vlaneseq
        %v4662 = vshrl.u32 %v4661, 7
        %v4663 = vsub.s32 %v4660, %v4662
        %v4664 = vrot.slane %v4656, %v4663
        %v4666 = vunpack.c.l.s4 1983009808
        %v4667 = vunpack.c.0.s8 %v4666
        %v4668 = vlaneseq
        %v4669 = vshrl.u32 %v4668, 7
        %v4670 = vsub.s32 %v4667, %v4669
        %v4671 = vrot.slane %v4657, %v4670
        %v4672 = vcombine.low %v4664, %v4671
        %4673 = vrot.lane.b32.xlu0 %v4655, 32
        %v4674 = vpop.permute.xlu0 %4673
        %4675 = vrot.lane.b32.xlu0 %v4672, 32
        %v4676 = vpop.permute.xlu0 %4675
        %v4679 = vsel %vm466, %v4611, %v4674
        %v4680 = vsel %vm466, %v4628, %v4676
        %vm4681 = vcmask 523264
        %4682 = vst.msk [vmem:[%s412] sm:$0xff] %vm4681, %v4679
        %4683 = vst.msk [vmem:[%s412 + $0x8] sm:$0xff] %vm4681, %v4680
        %s4684 = sand.u32 %s183, 1
        %s4685 = scalar_lea.sflag [#allocation4], %s4684
        %s4686 = sand.u32 %s183, 1
        %s4687 = smul.addr %s4686, 8
        %s4688 = scalar_lea.vmem [#allocation9], %s4687
        %s4689 = sand.u32 %s209, 1
        %s4690 = scalar_lea.sflag [#allocation11], %s4689
        %s4691 = sand.u32 %s209, 1
        %s4692 = smul.addr %s4691, 16
        %s4693 = scalar_lea.vmem [#allocation10], %s4692
        // Predicated region
        $region61: #{tpu_custom_call.1} parent=43 // pred_check
          %p4694 = pneg %p193
        $region62: #{tpu_custom_call.1} parent=43 // pred_check_branch
          %4696 = sbr.rel (%p4694) target = $region64
        $region63: #{tpu_custom_call.1} parent=43 // pred_region
          %s4697 = smul.u32 2, %s29
          %s4699 = ssub.s32 128, 128
          %4700 = vsyncadd %s4685, %s4699
          %s4701 = smul.addr %s4697, 64
          %s4702 = scalar_lea.hbm %s6, %s4701
          %s4703 = sshll.u32 %s4688, 4
          %s4704 = int_to_ptr.vmem [resolvable:$true] %s4703
          %4709 = dma.vmem_to_hbm [thread:$0]  %s4704, 128, %s4702, %s4685, 64, 64, 4
        $region64: #{tpu_custom_call.1} parent=43 // pred_fallthru
          _
        // Predicated region
        $region65: #{tpu_custom_call.1} parent=43 // pred_check
          %p4710 = pneg %p219
        $region66: #{tpu_custom_call.1} parent=43 // pred_check_branch
          %4712 = sbr.rel (%p4710) target = $region68
        $region67: #{tpu_custom_call.1} parent=43 // pred_region
          %s4713 = smul.u32 2, %s29
          %s4715 = ssub.s32 256, 256
          %4716 = vsyncadd %s4690, %s4715
          %s4717 = smul.addr %s4713, 128
          %s4718 = scalar_lea.hbm %s7, %s4717
          %s4719 = sshll.u32 %s4693, 4
          %s4720 = int_to_ptr.vmem [resolvable:$true] %s4719
          %4725 = dma.vmem_to_hbm [thread:$0]  %s4720, 256, %s4718, %s4690, 128, 128, 8
        $region68: #{tpu_custom_call.1} parent=43 // pred_fallthru
          _
      $region44: #{tpu_custom_call.1} parent=5 // pred_fallthru
        _
      %p4726 = scmp.le.s32.totalorder 2, %s24
      // Predicated region
      $region69: #{tpu_custom_call.1} parent=5 // pred_check
        %p4727 = pneg %p4726
      $region70: #{tpu_custom_call.1} parent=5 // pred_check_branch
        %4729 = sbr.rel (%p4727) target = $region72
      $region71: #{tpu_custom_call.1} parent=5 // pred_region
        %s4730 = ssub.s32 %s24, 2
        // Predicated region
        $region73: #{tpu_custom_call.1} parent=71 // pred_check
          %p4731 = pneg %p199
        $region74: #{tpu_custom_call.1} parent=71 // pred_check_branch
          %4733 = sbr.rel (%p4731) target = $region76
        $region75: #{tpu_custom_call.1} parent=71 // pred_region
          %s4734 = sand.u32 %s184, 1
          %s4735 = scalar_lea.sflag [#allocation4], %s4734
          %s4736 = sand.u32 %s184, 1
          %s4737 = smul.addr %s4736, 8
          %s4738 = scalar_lea.vmem [#allocation9], %s4737
          %4739 = dma.done %s4735, 128
        $region76: #{tpu_custom_call.1} parent=71 // pred_fallthru
          _
        // Predicated region
        $region77: #{tpu_custom_call.1} parent=71 // pred_check
          %p4740 = pneg %p225
        $region78: #{tpu_custom_call.1} parent=71 // pred_check_branch
          %4742 = sbr.rel (%p4740) target = $region80
        $region79: #{tpu_custom_call.1} parent=71 // pred_region
          %s4743 = sand.u32 %s210, 1
          %s4744 = scalar_lea.sflag [#allocation11], %s4743
          %s4745 = sand.u32 %s210, 1
          %s4746 = smul.addr %s4745, 16
          %s4747 = scalar_lea.vmem [#allocation10], %s4746
          %4748 = dma.done %s4744, 256
        $region80: #{tpu_custom_call.1} parent=71 // pred_fallthru
          _
      $region72: #{tpu_custom_call.1} parent=5 // pred_fallthru
        _
    $region6: #{tpu_custom_call.1} parent=1 // loop_footer
      %s28 = sadd.s32 1, %s24
    $region7: #{tpu_custom_call.1} parent=1 // loop_footer_branch
      %23 = sbr.rel target = $region3
    $region8: #{tpu_custom_call.1} parent=1 // loop_exit
      _
    %4749 = vsyncpa [#allocation3], 1
    %s4750 = scalar_lea.sflag [#allocation3], 1
    %4751 = vsyncpa %s4750, 1
    %4752 = vsyncpa [#allocation6], 1
    %4753 = vsyncpa [#allocation4], 1
    %s4754 = scalar_lea.sflag [#allocation4], 1
    %4755 = vsyncpa %s4754, 1
    %4756 = vsyncpa [#allocation11], 1
    %s4757 = scalar_lea.sflag [#allocation11], 1
    %4758 = vsyncpa %s4757, 1

</llo_original>
